<compile_context>
chip_gen: v7x
topology: tpu7x:2x2x1
jax: 0.10.0
libtpu: 0.0.40
codegen_flags: <defaults>
</compile_context>

<pallas_src>
import functools

import jax
import jax.numpy as jnp
from jax.experimental import pallas as pl
from jax.experimental.pallas import tpu as pltpu

LN_EPS = 1e-5          # nn.LayerNorm default eps
NEG_INF = -1e30        # additive mask for padded key columns


def _layernorm(x, gamma, beta):
    mean = jnp.mean(x, axis=-1, keepdims=True)
    var = jnp.mean((x - mean) ** 2, axis=-1, keepdims=True)
    return (x - mean) * jax.lax.rsqrt(var + LN_EPS) * gamma + beta


def _erf(x):
    # Abramowitz & Stegun 7.1.26 polynomial, |error| < 1.5e-7.
    p = 0.3275911
    a1, a2, a3, a4, a5 = (0.254829592, -0.284496736, 1.421413741,
                          -1.453152027, 1.061405429)
    sign = jnp.where(x < 0.0, -1.0, 1.0)
    ax = jnp.abs(x)
    t = pl.reciprocal(1.0 + p * ax, approx=False)   # divide on the EUP path
    poly = ((((a5 * t + a4) * t + a3) * t + a2) * t + a1) * t
    return sign * (1.0 - poly * jnp.exp(-ax * ax))


def _gelu_exact(x):
    # nn.GELU() default = exact erf GELU.
    return 0.5 * x * (1.0 + _erf(x * 0.7071067811865476))


# ---------------------------------------------------------------------------
# The single fused kernel: Bt images per grid step (grid has <= 2 programs).
# ---------------------------------------------------------------------------
def vit_kernel(patches_ref, embed_add_ref, attn_bias_ref, patch_w_ref,
               ln1_g_ref, ln1_b_ref, wqkv_ref, wo_ref, bo_ref,
               ln2_g_ref, ln2_b_ref, w1_ref, b1_ref, w2_ref, b2_ref,
               norm_g_ref, norm_b_ref, head_w_ref, head_b_ref, out_ref,
               *, num_heads):
    f32, bf16 = jnp.float32, jnp.bfloat16
    Bt, S, P = patches_ref.shape          # S = padded sequence length
    L, D, _ = wqkv_ref.shape
    H = num_heads
    dh = D // H

    # --- patch embedding + class token + positional embedding -------------
    # Row 0 of each image's patch block is all-zero (class-token slot); the
    # trailing padded rows are all-zero too.  `embed_add` already holds
    # pos_embed + patch bias (+ class token in row 0), so this is one matmul
    # plus one add, with no concatenate or partial stores.
    p2d = patches_ref[...].reshape(Bt * S, P).astype(bf16)
    add = embed_add_ref[...]                                      # (S, D)
    if Bt > 1:
        add = jnp.tile(add, (Bt, 1))
    x = jnp.dot(p2d, patch_w_ref[...], preferred_element_type=f32) + add

    attn_bias = attn_bias_ref[...]        # (S, S): 0 on real keys, -1e30 pad

    # --- transformer encoder layers (weights stay VMEM-resident) ----------
    for l in range(L):
        # pre-norm multi-head self-attention
        xn = _layernorm(x, ln1_g_ref[l], ln1_b_ref[l])            # (Bt*S, D)
        # single (Bt*S, D) @ (D, 3D) MXU matmul; scale folded into Q columns
        qkv = jnp.dot(xn.astype(bf16), wqkv_ref[l],
                      preferred_element_type=f32).astype(bf16)    # (Bt*S, 3D)
        ctx_rows = []
        for b in range(Bt):               # static; Bt is 1 or bs//2
            r0 = b * S
            head_ctx = []
            for h in range(H):            # static lane slices of the qkv tile
                q = qkv[r0:r0 + S, 0 * D + h * dh:0 * D + (h + 1) * dh]
                k = qkv[r0:r0 + S, 1 * D + h * dh:1 * D + (h + 1) * dh]
                v = qkv[r0:r0 + S, 2 * D + h * dh:2 * D + (h + 1) * dh]
                s = jnp.einsum('qd,kd->qk', q, k,
                               preferred_element_type=f32)        # (S, S)
                s = s + attn_bias                                 # mask pad keys
                s = s - jnp.max(s, axis=-1, keepdims=True)
                e = jnp.exp(s)
                probs = e * pl.reciprocal(
                    jnp.sum(e, axis=-1, keepdims=True), approx=False)
                head_ctx.append(jnp.dot(probs.astype(bf16), v,
                                        preferred_element_type=f32))
            ctx_rows.append(head_ctx[0] if H == 1
                            else jnp.concatenate(head_ctx, axis=-1))   # (S, D)
        ctx = ctx_rows[0] if Bt == 1 else jnp.concatenate(ctx_rows, axis=0)
        # one lane-dense (Bt*S, D) @ (D, D) MXU matmul; no per-head VPU sum
        x = x + jnp.dot(ctx.astype(bf16), wo_ref[l],
                        preferred_element_type=f32) + bo_ref[l]   # dropout1=id

        # pre-norm MLP
        xn = _layernorm(x, ln2_g_ref[l], ln2_b_ref[l])
        h1 = jnp.dot(xn.astype(bf16), w1_ref[l],
                     preferred_element_type=f32) + b1_ref[l]
        h1 = _gelu_exact(h1)
        h2 = jnp.dot(h1.astype(bf16), w2_ref[l],
                     preferred_element_type=f32) + b2_ref[l]
        x = x + h2                                                # dropout2=id

    # --- final LayerNorm + classification head on the class tokens --------
    cls_rows = [x[b * S:b * S + 1, :] for b in range(Bt)]
    cls = cls_rows[0] if Bt == 1 else jnp.concatenate(cls_rows, axis=0)
    cls = _layernorm(cls, norm_g_ref[...], norm_b_ref[...])       # (Bt, D)
    logits = (jnp.dot(cls.astype(bf16), head_w_ref[...],
                      preferred_element_type=f32) + head_b_ref[...])
    out_ref[...] = logits.reshape(Bt, 1, -1).astype(out_ref.dtype)


def _vit_call(patches, prep):
    bs, S_pad, P = patches.shape
    Cp = prep["head_w"].shape[1]

    # At most 2 grid programs: full megacore utilization on v7x (one chunk per
    # TensorCore), while single-TC v5e/v6e only pay one extra ~0.35us pipeline
    # prologue; every token-wise matmul inside a step sees Bt*S_pad rows.
    num_steps = 2 if (bs >= 2 and bs % 2 == 0) else 1
    Bt = bs // num_steps

    order = ["embed_add", "attn_bias", "patch_w",
             "ln1_g", "ln1_b", "wqkv", "wo", "bo",
             "ln2_g", "ln2_b", "w1", "b1", "w2", "b2",
             "norm_g", "norm_b", "head_w", "head_b"]
    weights = [prep[name] for name in order]

    # Weights: whole array placed once in VMEM, single-buffered (no grid
    # pipelining, no 2x double-buffer VMEM cost).
    weight_spec = pl.BlockSpec(memory_space=pltpu.MemorySpace.VMEM)

    kernel = functools.partial(vit_kernel, num_heads=prep["num_heads"])

    return pl.pallas_call(
        kernel,
        out_shape=jax.ShapeDtypeStruct((bs, 1, Cp), jnp.float32),
        grid=(num_steps,),
        in_specs=[pl.BlockSpec((Bt, S_pad, P), lambda b: (b, 0, 0))]
                 + [weight_spec] * len(weights),
        out_specs=pl.BlockSpec((Bt, 1, Cp), lambda b: (b, 0, 0)),
        compiler_params=pltpu.CompilerParams(
            dimension_semantics=("parallel",)),
    )(patches, *weights)


# ---------------------------------------------------------------------------
# Parameter init (deterministic, synthetic, x @ W layout) and host-side prep
# ---------------------------------------------------------------------------
def init_params(key, *, num_classes, img_size, patch_size, dim_hidden,
                num_heads, dim_feedforward, num_layers):
    num_patches = (img_size // patch_size) ** 2
    dim_patch = 3 * patch_size ** 2
    keys = iter(jax.random.split(key, 6 + 7 * num_layers))

    def rnd(shape):
        return (0.02 * jax.random.normal(next(keys), shape)).astype(jnp.float32)

    params = {
        "patch_w": rnd((dim_patch, dim_hidden)),
        "patch_b": rnd((1, dim_hidden)),
        # the nn.Module inits these to zeros; use small random values so the
        # positional / class-token terms are actually exercised.
        "class_token": rnd((1, 1, dim_hidden)),
        "pos_embed": rnd((1, num_patches + 1, dim_hidden)),
        "layers": [],
        "norm_g": jnp.ones((1, dim_hidden), jnp.float32),
        "norm_b": jnp.zeros((1, dim_hidden), jnp.float32),
        "head_w": rnd((dim_hidden, num_classes)),
        "head_b": rnd((1, num_classes)),
    }
    for _ in range(num_layers):
        params["layers"].append({
            "ln1_g": jnp.ones((1, dim_hidden), jnp.float32),
            "ln1_b": jnp.zeros((1, dim_hidden), jnp.float32),
            "wqkv": rnd((dim_hidden, 3 * dim_hidden)),   # qkv_bias=False
            "wo": rnd((dim_hidden, dim_hidden)),
            "bo": rnd((1, dim_hidden)),
            "ln2_g": jnp.ones((1, dim_hidden), jnp.float32),
            "ln2_b": jnp.zeros((1, dim_hidden), jnp.float32),
            "w1": rnd((dim_hidden, dim_feedforward)),
            "b1": rnd((1, dim_feedforward)),
            "w2": rnd((dim_feedforward, dim_hidden)),
            "b2": rnd((1, dim_hidden)),
        })
    return params


def prepare_params(params, *, num_heads):
    """One-time host-side prep: packed/scaled qkv weight, embed add-table,
    sublane-padded sequence mask, lane-padded classifier, bf16 matmul weights."""
    D = params["patch_w"].shape[1]
    H = num_heads
    dh = D // H
    scale = dh ** (-0.5)
    L = len(params["layers"])
    N = params["pos_embed"].shape[1] - 1
    S = N + 1
    S_pad = ((S + 7) // 8) * 8            # sublane-granule sequence length
    bf16 = jnp.bfloat16

    def stack(name):
        return jnp.stack([lp[name] for lp in params["layers"]], axis=0)

    # packed qkv weight (L, D, 3D); 1/sqrt(dh) folded into the Q columns
    # (exact, since qkv_bias=False)
    col_scale = jnp.concatenate([jnp.full((D,), scale, jnp.float32),
                                 jnp.ones((2 * D,), jnp.float32)])
    wqkv = stack("wqkv") * col_scale[None, None, :]

    # class token + positional embedding + patch-embed bias as one add table,
    # zero-padded to S_pad rows
    embed_add = params["pos_embed"][0] + jnp.concatenate(
        [params["class_token"][0],
         jnp.broadcast_to(params["patch_b"], (N, D))], axis=0)     # (S, D)
    embed_add = jnp.pad(embed_add, ((0, S_pad - S), (0, 0)))

    # additive softmax bias masking the padded key columns
    attn_bias = jnp.where(jnp.arange(S_pad) < S, 0.0, NEG_INF).astype(jnp.float32)
    attn_bias = jnp.tile(attn_bias[None, :], (S_pad, 1))           # (S_pad, S_pad)

    # classifier padded to a 128-lane output (lane-dense final store).
    # head_b must stay zero-padded so padded logits are exactly 0.
    C = params["head_w"].shape[1]
    Cp = ((C + 127) // 128) * 128
    head_w = jnp.pad(params["head_w"], ((0, 0), (0, Cp - C)))
    head_b = jnp.pad(params["head_b"], ((0, 0), (0, Cp - C)))

    return {
        "embed_add": embed_add, "attn_bias": attn_bias,
        "patch_w": params["patch_w"].astype(bf16),
        "ln1_g": stack("ln1_g"), "ln1_b": stack("ln1_b"),
        "wqkv": wqkv.astype(bf16),
        "wo": stack("wo").astype(bf16), "bo": stack("bo"),
        "ln2_g": stack("ln2_g"), "ln2_b": stack("ln2_b"),
        "w1": stack("w1").astype(bf16), "b1": stack("b1"),
        "w2": stack("w2").astype(bf16), "b2": stack("b2"),
        "norm_g": params["norm_g"], "norm_b": params["norm_b"],
        "head_w": head_w.astype(bf16), "head_b": head_b,
        "num_heads": H, "seq_real": S, "seq_pad": S_pad,
    }


def vit_forward(x, prep, *, patch_size, num_classes):
    bs, c, h, w = x.shape
    ps = patch_size
    gh, gw = h // ps, w // ps
    # glue: patchify exactly as torch view/permute/reshape
    p = x.reshape(bs, c, gh, ps, gw, ps).transpose(0, 2, 4, 1, 3, 5)
    patches = p.reshape(bs, gh * gw, c * ps * ps)
    S, S_pad = prep["seq_real"], prep["seq_pad"]
    # leading zero row = class-token slot; trailing zero rows = sublane pad
    patches = jnp.pad(patches, ((0, 0), (1, S_pad - S), (0, 0)))
    logits = _vit_call(patches, prep)                  # (bs, 1, Cpad)
    return logits[:, 0, :num_classes]


if __name__ == "__main__":
    num_classes, img_size, patch_size = 10, 16, 4
    dim_hidden, num_heads, dim_feedforward, num_layers = 32, 4, 64, 2
    batch = 2

    key = jax.random.PRNGKey(0)
    pkey, xkey = jax.random.split(key)
    params = init_params(pkey, num_classes=num_classes, img_size=img_size,
                         patch_size=patch_size, dim_hidden=dim_hidden,
                         num_heads=num_heads, dim_feedforward=dim_feedforward,
                         num_layers=num_layers)
    prep = prepare_params(params, num_heads=num_heads)
    x = jax.random.normal(xkey, (batch, 3, img_size, img_size), jnp.float32)

    out = vit_forward(x, prep, patch_size=patch_size, num_classes=num_classes)
    jax.block_until_ready(out)
    assert out.shape == (batch, num_classes)
    assert bool(jnp.all(jnp.isfinite(out)))
    print("KERNEL_OK")
</pallas_src>

<mosaic_0001>
module attributes {stable_mosaic.version = 11 : i64} {
  func.func @vit_kernel(%arg0: i32, %arg1: memref<1x24x48xf32, #tpu.memory_space<vmem>>, %arg2: memref<24x32xf32, #tpu.memory_space<vmem>>, %arg3: memref<24x24xf32, #tpu.memory_space<vmem>>, %arg4: memref<48x32xbf16, #tpu.memory_space<vmem>>, %arg5: memref<2x1x32xf32, #tpu.memory_space<vmem>>, %arg6: memref<2x1x32xf32, #tpu.memory_space<vmem>>, %arg7: memref<2x32x96xbf16, #tpu.memory_space<vmem>>, %arg8: memref<2x32x32xbf16, #tpu.memory_space<vmem>>, %arg9: memref<2x1x32xf32, #tpu.memory_space<vmem>>, %arg10: memref<2x1x32xf32, #tpu.memory_space<vmem>>, %arg11: memref<2x1x32xf32, #tpu.memory_space<vmem>>, %arg12: memref<2x32x64xbf16, #tpu.memory_space<vmem>>, %arg13: memref<2x1x64xf32, #tpu.memory_space<vmem>>, %arg14: memref<2x64x32xbf16, #tpu.memory_space<vmem>>, %arg15: memref<2x1x32xf32, #tpu.memory_space<vmem>>, %arg16: memref<1x32xf32, #tpu.memory_space<vmem>>, %arg17: memref<1x32xf32, #tpu.memory_space<vmem>>, %arg18: memref<32x128xbf16, #tpu.memory_space<vmem>>, %arg19: memref<1x128xf32, #tpu.memory_space<vmem>>, %arg20: memref<1x1x128xf32, #tpu.memory_space<vmem>>) attributes {dimension_semantics = [#tpu.dimension_semantics<parallel>], iteration_bounds = array<i64: 2>, scalar_prefetch = 0 : i64, scratch_operands = 0 : i64, tpu.core_type = #tpu.core_type<tc>, window_params = [{transform_indices = @transform_0, window_bounds = array<i64: 1, 24, 48>}, {pipeline_mode = #tpu.pipeline_mode<synchronous>, transform_indices = @transform_1, window_bounds = array<i64: 24, 32>}, {pipeline_mode = #tpu.pipeline_mode<synchronous>, transform_indices = @transform_2, window_bounds = array<i64: 24, 24>}, {pipeline_mode = #tpu.pipeline_mode<synchronous>, transform_indices = @transform_3, window_bounds = array<i64: 48, 32>}, {pipeline_mode = #tpu.pipeline_mode<synchronous>, transform_indices = @transform_4, window_bounds = array<i64: 2, 1, 32>}, {pipeline_mode = #tpu.pipeline_mode<synchronous>, transform_indices = @transform_5, window_bounds = array<i64: 2, 1, 32>}, {pipeline_mode = #tpu.pipeline_mode<synchronous>, transform_indices = @transform_6, window_bounds = array<i64: 2, 32, 96>}, {pipeline_mode = #tpu.pipeline_mode<synchronous>, transform_indices = @transform_7, window_bounds = array<i64: 2, 32, 32>}, {pipeline_mode = #tpu.pipeline_mode<synchronous>, transform_indices = @transform_8, window_bounds = array<i64: 2, 1, 32>}, {pipeline_mode = #tpu.pipeline_mode<synchronous>, transform_indices = @transform_9, window_bounds = array<i64: 2, 1, 32>}, {pipeline_mode = #tpu.pipeline_mode<synchronous>, transform_indices = @transform_10, window_bounds = array<i64: 2, 1, 32>}, {pipeline_mode = #tpu.pipeline_mode<synchronous>, transform_indices = @transform_11, window_bounds = array<i64: 2, 32, 64>}, {pipeline_mode = #tpu.pipeline_mode<synchronous>, transform_indices = @transform_12, window_bounds = array<i64: 2, 1, 64>}, {pipeline_mode = #tpu.pipeline_mode<synchronous>, transform_indices = @transform_13, window_bounds = array<i64: 2, 64, 32>}, {pipeline_mode = #tpu.pipeline_mode<synchronous>, transform_indices = @transform_14, window_bounds = array<i64: 2, 1, 32>}, {pipeline_mode = #tpu.pipeline_mode<synchronous>, transform_indices = @transform_15, window_bounds = array<i64: 1, 32>}, {pipeline_mode = #tpu.pipeline_mode<synchronous>, transform_indices = @transform_16, window_bounds = array<i64: 1, 32>}, {pipeline_mode = #tpu.pipeline_mode<synchronous>, transform_indices = @transform_17, window_bounds = array<i64: 32, 128>}, {pipeline_mode = #tpu.pipeline_mode<synchronous>, transform_indices = @transform_18, window_bounds = array<i64: 1, 128>}, {transform_indices = @transform_19, window_bounds = array<i64: 1, 1, 128>}]} {
    %c0 = arith.constant 0 : index
    %c0_0 = arith.constant 0 : index
    %c0_1 = arith.constant 0 : index
    %0 = vector.load %arg1[%c0, %c0_0, %c0_1] : memref<1x24x48xf32, #tpu.memory_space<vmem>>, vector<1x24x48xf32>
    %1 = vector.shape_cast %0 : vector<1x24x48xf32> to vector<24x48xf32>
    %2 = arith.truncf %1 : vector<24x48xf32> to vector<24x48xbf16>
    %c0_2 = arith.constant 0 : index
    %c0_3 = arith.constant 0 : index
    %3 = vector.load %arg2[%c0_2, %c0_3] : memref<24x32xf32, #tpu.memory_space<vmem>>, vector<24x32xf32>
    %c0_4 = arith.constant 0 : index
    %c0_5 = arith.constant 0 : index
    %4 = vector.load %arg4[%c0_4, %c0_5] : memref<48x32xbf16, #tpu.memory_space<vmem>>, vector<48x32xbf16>
    %cst = arith.constant dense<0.000000e+00> : vector<24x32xf32>
    %5 = tpu.matmul %2, %4, %cst {dimension_numbers = #tpu.dot_dimension_numbers<[1], [0], [0], [1], [0, 0, 1, 1], [], []>} : vector<24x48xbf16>, vector<48x32xbf16>, vector<24x32xf32> -> vector<24x32xf32>
    %6 = arith.addf %5, %3 : vector<24x32xf32>
    %c0_6 = arith.constant 0 : index
    %c0_7 = arith.constant 0 : index
    %7 = vector.load %arg3[%c0_6, %c0_7] : memref<24x24xf32, #tpu.memory_space<vmem>>, vector<24x24xf32>
    %c0_8 = arith.constant 0 : index
    %c0_9 = arith.constant 0 : index
    %c0_10 = arith.constant 0 : index
    %8 = vector.load %arg5[%c0_8, %c0_9, %c0_10] : memref<2x1x32xf32, #tpu.memory_space<vmem>>, vector<1x1x32xf32>
    %9 = vector.shape_cast %8 : vector<1x1x32xf32> to vector<1x32xf32>
    %c0_11 = arith.constant 0 : index
    %c0_12 = arith.constant 0 : index
    %c0_13 = arith.constant 0 : index
    %10 = vector.load %arg6[%c0_11, %c0_12, %c0_13] : memref<2x1x32xf32, #tpu.memory_space<vmem>>, vector<1x1x32xf32>
    %11 = vector.shape_cast %10 : vector<1x1x32xf32> to vector<1x32xf32>
    %cst_14 = arith.constant dense<0.000000e+00> : vector<24xf32>
    %12 = vector.multi_reduction <add>, %6, %cst_14 [1] : vector<24x32xf32> to vector<24xf32>
    %13 = vector.shape_cast %12 : vector<24xf32> to vector<24x1xf32>
    %cst_15 = arith.constant 3.200000e+01 : f32
    %14 = vector.broadcast %cst_15 : f32 to vector<24x1xf32>
    %15 = arith.divf %13, %14 : vector<24x1xf32>
    %16 = vector.broadcast %15 : vector<24x1xf32> to vector<24x32xf32>
    %17 = arith.subf %6, %16 : vector<24x32xf32>
    %18 = arith.mulf %17, %17 : vector<24x32xf32>
    %cst_16 = arith.constant dense<0.000000e+00> : vector<24xf32>
    %19 = vector.multi_reduction <add>, %18, %cst_16 [1] : vector<24x32xf32> to vector<24xf32>
    %20 = vector.shape_cast %19 : vector<24xf32> to vector<24x1xf32>
    %cst_17 = arith.constant 3.200000e+01 : f32
    %21 = vector.broadcast %cst_17 : f32 to vector<24x1xf32>
    %22 = arith.divf %20, %21 : vector<24x1xf32>
    %23 = vector.broadcast %15 : vector<24x1xf32> to vector<24x32xf32>
    %24 = arith.subf %6, %23 : vector<24x32xf32>
    %cst_18 = arith.constant 9.99999974E-6 : f32
    %25 = vector.broadcast %cst_18 : f32 to vector<24x1xf32>
    %26 = arith.addf %22, %25 : vector<24x1xf32>
    %27 = math.rsqrt %26 : vector<24x1xf32>
    %28 = vector.broadcast %27 : vector<24x1xf32> to vector<24x32xf32>
    %29 = arith.mulf %24, %28 : vector<24x32xf32>
    %30 = vector.broadcast %9 : vector<1x32xf32> to vector<24x32xf32>
    %31 = arith.mulf %29, %30 : vector<24x32xf32>
    %32 = vector.broadcast %11 : vector<1x32xf32> to vector<24x32xf32>
    %33 = arith.addf %31, %32 : vector<24x32xf32>
    %34 = arith.truncf %33 : vector<24x32xf32> to vector<24x32xbf16>
    %c0_19 = arith.constant 0 : index
    %c0_20 = arith.constant 0 : index
    %c0_21 = arith.constant 0 : index
    %35 = vector.load %arg7[%c0_19, %c0_20, %c0_21] : memref<2x32x96xbf16, #tpu.memory_space<vmem>>, vector<1x32x96xbf16>
    %36 = vector.shape_cast %35 : vector<1x32x96xbf16> to vector<32x96xbf16>
    %cst_22 = arith.constant dense<0.000000e+00> : vector<24x96xf32>
    %37 = tpu.matmul %34, %36, %cst_22 {dimension_numbers = #tpu.dot_dimension_numbers<[1], [0], [0], [1], [0, 0, 1, 1], [], []>} : vector<24x32xbf16>, vector<32x96xbf16>, vector<24x96xf32> -> vector<24x96xf32>
    %38 = arith.truncf %37 : vector<24x96xf32> to vector<24x96xbf16>
    %39 = vector.extract_strided_slice %38 {offsets = [0, 0], sizes = [24, 8], strides = [1, 1]} : vector<24x96xbf16> to vector<24x8xbf16>
    %40 = vector.extract_strided_slice %38 {offsets = [0, 32], sizes = [24, 8], strides = [1, 1]} : vector<24x96xbf16> to vector<24x8xbf16>
    %41 = vector.extract_strided_slice %38 {offsets = [0, 64], sizes = [24, 8], strides = [1, 1]} : vector<24x96xbf16> to vector<24x8xbf16>
    "tpu.trace_start"() <{level = 10 : i32, message = "qd,kd->qk"}> : () -> ()
    %cst_23 = arith.constant dense<0.000000e+00> : vector<24x24xf32>
    %42 = tpu.matmul %39, %40, %cst_23 {dimension_numbers = #tpu.dot_dimension_numbers<[1], [1], [0], [0], [0, 0, 1, 0], [], []>} : vector<24x8xbf16>, vector<24x8xbf16>, vector<24x24xf32> -> vector<24x24xf32>
    "tpu.trace_stop"() : () -> ()
    %43 = arith.addf %42, %7 : vector<24x24xf32>
    %cst_24 = arith.constant dense<0xFF800000> : vector<24xf32>
    %44 = vector.multi_reduction <maximumf>, %43, %cst_24 [1] : vector<24x24xf32> to vector<24xf32>
    %45 = vector.shape_cast %44 : vector<24xf32> to vector<24x1xf32>
    %46 = vector.broadcast %45 : vector<24x1xf32> to vector<24x24xf32>
    %47 = arith.subf %43, %46 : vector<24x24xf32>
    %48 = math.exp %47 : vector<24x24xf32>
    %cst_25 = arith.constant dense<0.000000e+00> : vector<24xf32>
    %49 = vector.multi_reduction <add>, %48, %cst_25 [1] : vector<24x24xf32> to vector<24xf32>
    %50 = vector.shape_cast %49 : vector<24xf32> to vector<24x1xf32>
    %51 = tpu.reciprocal %50 : vector<24x1xf32> -> vector<24x1xf32>
    %52 = vector.broadcast %51 : vector<24x1xf32> to vector<24x24xf32>
    %53 = arith.mulf %48, %52 : vector<24x24xf32>
    %54 = arith.truncf %53 : vector<24x24xf32> to vector<24x24xbf16>
    %cst_26 = arith.constant dense<0.000000e+00> : vector<24x8xf32>
    %55 = tpu.matmul %54, %41, %cst_26 {dimension_numbers = #tpu.dot_dimension_numbers<[1], [0], [0], [1], [0, 0, 1, 1], [], []>} : vector<24x24xbf16>, vector<24x8xbf16>, vector<24x8xf32> -> vector<24x8xf32>
    %56 = vector.extract_strided_slice %38 {offsets = [0, 8], sizes = [24, 8], strides = [1, 1]} : vector<24x96xbf16> to vector<24x8xbf16>
    %57 = vector.extract_strided_slice %38 {offsets = [0, 40], sizes = [24, 8], strides = [1, 1]} : vector<24x96xbf16> to vector<24x8xbf16>
    %58 = vector.extract_strided_slice %38 {offsets = [0, 72], sizes = [24, 8], strides = [1, 1]} : vector<24x96xbf16> to vector<24x8xbf16>
    "tpu.trace_start"() <{level = 10 : i32, message = "qd,kd->qk"}> : () -> ()
    %cst_27 = arith.constant dense<0.000000e+00> : vector<24x24xf32>
    %59 = tpu.matmul %56, %57, %cst_27 {dimension_numbers = #tpu.dot_dimension_numbers<[1], [1], [0], [0], [0, 0, 1, 0], [], []>} : vector<24x8xbf16>, vector<24x8xbf16>, vector<24x24xf32> -> vector<24x24xf32>
    "tpu.trace_stop"() : () -> ()
    %60 = arith.addf %59, %7 : vector<24x24xf32>
    %cst_28 = arith.constant dense<0xFF800000> : vector<24xf32>
    %61 = vector.multi_reduction <maximumf>, %60, %cst_28 [1] : vector<24x24xf32> to vector<24xf32>
    %62 = vector.shape_cast %61 : vector<24xf32> to vector<24x1xf32>
    %63 = vector.broadcast %62 : vector<24x1xf32> to vector<24x24xf32>
    %64 = arith.subf %60, %63 : vector<24x24xf32>
    %65 = math.exp %64 : vector<24x24xf32>
    %cst_29 = arith.constant dense<0.000000e+00> : vector<24xf32>
    %66 = vector.multi_reduction <add>, %65, %cst_29 [1] : vector<24x24xf32> to vector<24xf32>
    %67 = vector.shape_cast %66 : vector<24xf32> to vector<24x1xf32>
    %68 = tpu.reciprocal %67 : vector<24x1xf32> -> vector<24x1xf32>
    %69 = vector.broadcast %68 : vector<24x1xf32> to vector<24x24xf32>
    %70 = arith.mulf %65, %69 : vector<24x24xf32>
    %71 = arith.truncf %70 : vector<24x24xf32> to vector<24x24xbf16>
    %cst_30 = arith.constant dense<0.000000e+00> : vector<24x8xf32>
    %72 = tpu.matmul %71, %58, %cst_30 {dimension_numbers = #tpu.dot_dimension_numbers<[1], [0], [0], [1], [0, 0, 1, 1], [], []>} : vector<24x24xbf16>, vector<24x8xbf16>, vector<24x8xf32> -> vector<24x8xf32>
    %73 = vector.extract_strided_slice %38 {offsets = [0, 16], sizes = [24, 8], strides = [1, 1]} : vector<24x96xbf16> to vector<24x8xbf16>
    %74 = vector.extract_strided_slice %38 {offsets = [0, 48], sizes = [24, 8], strides = [1, 1]} : vector<24x96xbf16> to vector<24x8xbf16>
    %75 = vector.extract_strided_slice %38 {offsets = [0, 80], sizes = [24, 8], strides = [1, 1]} : vector<24x96xbf16> to vector<24x8xbf16>
    "tpu.trace_start"() <{level = 10 : i32, message = "qd,kd->qk"}> : () -> ()
    %cst_31 = arith.constant dense<0.000000e+00> : vector<24x24xf32>
    %76 = tpu.matmul %73, %74, %cst_31 {dimension_numbers = #tpu.dot_dimension_numbers<[1], [1], [0], [0], [0, 0, 1, 0], [], []>} : vector<24x8xbf16>, vector<24x8xbf16>, vector<24x24xf32> -> vector<24x24xf32>
    "tpu.trace_stop"() : () -> ()
    %77 = arith.addf %76, %7 : vector<24x24xf32>
    %cst_32 = arith.constant dense<0xFF800000> : vector<24xf32>
    %78 = vector.multi_reduction <maximumf>, %77, %cst_32 [1] : vector<24x24xf32> to vector<24xf32>
    %79 = vector.shape_cast %78 : vector<24xf32> to vector<24x1xf32>
    %80 = vector.broadcast %79 : vector<24x1xf32> to vector<24x24xf32>
    %81 = arith.subf %77, %80 : vector<24x24xf32>
    %82 = math.exp %81 : vector<24x24xf32>
    %cst_33 = arith.constant dense<0.000000e+00> : vector<24xf32>
    %83 = vector.multi_reduction <add>, %82, %cst_33 [1] : vector<24x24xf32> to vector<24xf32>
    %84 = vector.shape_cast %83 : vector<24xf32> to vector<24x1xf32>
    %85 = tpu.reciprocal %84 : vector<24x1xf32> -> vector<24x1xf32>
    %86 = vector.broadcast %85 : vector<24x1xf32> to vector<24x24xf32>
    %87 = arith.mulf %82, %86 : vector<24x24xf32>
    %88 = arith.truncf %87 : vector<24x24xf32> to vector<24x24xbf16>
    %cst_34 = arith.constant dense<0.000000e+00> : vector<24x8xf32>
    %89 = tpu.matmul %88, %75, %cst_34 {dimension_numbers = #tpu.dot_dimension_numbers<[1], [0], [0], [1], [0, 0, 1, 1], [], []>} : vector<24x24xbf16>, vector<24x8xbf16>, vector<24x8xf32> -> vector<24x8xf32>
    %90 = vector.extract_strided_slice %38 {offsets = [0, 24], sizes = [24, 8], strides = [1, 1]} : vector<24x96xbf16> to vector<24x8xbf16>
    %91 = vector.extract_strided_slice %38 {offsets = [0, 56], sizes = [24, 8], strides = [1, 1]} : vector<24x96xbf16> to vector<24x8xbf16>
    %92 = vector.extract_strided_slice %38 {offsets = [0, 88], sizes = [24, 8], strides = [1, 1]} : vector<24x96xbf16> to vector<24x8xbf16>
    "tpu.trace_start"() <{level = 10 : i32, message = "qd,kd->qk"}> : () -> ()
    %cst_35 = arith.constant dense<0.000000e+00> : vector<24x24xf32>
    %93 = tpu.matmul %90, %91, %cst_35 {dimension_numbers = #tpu.dot_dimension_numbers<[1], [1], [0], [0], [0, 0, 1, 0], [], []>} : vector<24x8xbf16>, vector<24x8xbf16>, vector<24x24xf32> -> vector<24x24xf32>
    "tpu.trace_stop"() : () -> ()
    %94 = arith.addf %93, %7 : vector<24x24xf32>
    %cst_36 = arith.constant dense<0xFF800000> : vector<24xf32>
    %95 = vector.multi_reduction <maximumf>, %94, %cst_36 [1] : vector<24x24xf32> to vector<24xf32>
    %96 = vector.shape_cast %95 : vector<24xf32> to vector<24x1xf32>
    %97 = vector.broadcast %96 : vector<24x1xf32> to vector<24x24xf32>
    %98 = arith.subf %94, %97 : vector<24x24xf32>
    %99 = math.exp %98 : vector<24x24xf32>
    %cst_37 = arith.constant dense<0.000000e+00> : vector<24xf32>
    %100 = vector.multi_reduction <add>, %99, %cst_37 [1] : vector<24x24xf32> to vector<24xf32>
    %101 = vector.shape_cast %100 : vector<24xf32> to vector<24x1xf32>
    %102 = tpu.reciprocal %101 : vector<24x1xf32> -> vector<24x1xf32>
    %103 = vector.broadcast %102 : vector<24x1xf32> to vector<24x24xf32>
    %104 = arith.mulf %99, %103 : vector<24x24xf32>
    %105 = arith.truncf %104 : vector<24x24xf32> to vector<24x24xbf16>
    %cst_38 = arith.constant dense<0.000000e+00> : vector<24x8xf32>
    %106 = tpu.matmul %105, %92, %cst_38 {dimension_numbers = #tpu.dot_dimension_numbers<[1], [0], [0], [1], [0, 0, 1, 1], [], []>} : vector<24x24xbf16>, vector<24x8xbf16>, vector<24x8xf32> -> vector<24x8xf32>
    %107 = tpu.concatenate %55, %72, %89, %106 in 1 : vector<24x8xf32>, vector<24x8xf32>, vector<24x8xf32>, vector<24x8xf32> -> vector<24x32xf32>
    %108 = arith.truncf %107 : vector<24x32xf32> to vector<24x32xbf16>
    %c0_39 = arith.constant 0 : index
    %c0_40 = arith.constant 0 : index
    %c0_41 = arith.constant 0 : index
    %109 = vector.load %arg8[%c0_39, %c0_40, %c0_41] : memref<2x32x32xbf16, #tpu.memory_space<vmem>>, vector<1x32x32xbf16>
    %110 = vector.shape_cast %109 : vector<1x32x32xbf16> to vector<32x32xbf16>
    %cst_42 = arith.constant dense<0.000000e+00> : vector<24x32xf32>
    %111 = tpu.matmul %108, %110, %cst_42 {dimension_numbers = #tpu.dot_dimension_numbers<[1], [0], [0], [1], [0, 0, 1, 1], [], []>} : vector<24x32xbf16>, vector<32x32xbf16>, vector<24x32xf32> -> vector<24x32xf32>
    %112 = arith.addf %6, %111 : vector<24x32xf32>
    %c0_43 = arith.constant 0 : index
    %c0_44 = arith.constant 0 : index
    %c0_45 = arith.constant 0 : index
    %113 = vector.load %arg9[%c0_43, %c0_44, %c0_45] : memref<2x1x32xf32, #tpu.memory_space<vmem>>, vector<1x1x32xf32>
    %114 = vector.shape_cast %113 : vector<1x1x32xf32> to vector<1x32xf32>
    %115 = vector.broadcast %114 : vector<1x32xf32> to vector<24x32xf32>
    %116 = arith.addf %112, %115 : vector<24x32xf32>
    %c0_46 = arith.constant 0 : index
    %c0_47 = arith.constant 0 : index
    %c0_48 = arith.constant 0 : index
    %117 = vector.load %arg10[%c0_46, %c0_47, %c0_48] : memref<2x1x32xf32, #tpu.memory_space<vmem>>, vector<1x1x32xf32>
    %118 = vector.shape_cast %117 : vector<1x1x32xf32> to vector<1x32xf32>
    %c0_49 = arith.constant 0 : index
    %c0_50 = arith.constant 0 : index
    %c0_51 = arith.constant 0 : index
    %119 = vector.load %arg11[%c0_49, %c0_50, %c0_51] : memref<2x1x32xf32, #tpu.memory_space<vmem>>, vector<1x1x32xf32>
    %120 = vector.shape_cast %119 : vector<1x1x32xf32> to vector<1x32xf32>
    %cst_52 = arith.constant dense<0.000000e+00> : vector<24xf32>
    %121 = vector.multi_reduction <add>, %116, %cst_52 [1] : vector<24x32xf32> to vector<24xf32>
    %122 = vector.shape_cast %121 : vector<24xf32> to vector<24x1xf32>
    %cst_53 = arith.constant 3.200000e+01 : f32
    %123 = vector.broadcast %cst_53 : f32 to vector<24x1xf32>
    %124 = arith.divf %122, %123 : vector<24x1xf32>
    %125 = vector.broadcast %124 : vector<24x1xf32> to vector<24x32xf32>
    %126 = arith.subf %116, %125 : vector<24x32xf32>
    %127 = arith.mulf %126, %126 : vector<24x32xf32>
    %cst_54 = arith.constant dense<0.000000e+00> : vector<24xf32>
    %128 = vector.multi_reduction <add>, %127, %cst_54 [1] : vector<24x32xf32> to vector<24xf32>
    %129 = vector.shape_cast %128 : vector<24xf32> to vector<24x1xf32>
    %cst_55 = arith.constant 3.200000e+01 : f32
    %130 = vector.broadcast %cst_55 : f32 to vector<24x1xf32>
    %131 = arith.divf %129, %130 : vector<24x1xf32>
    %132 = vector.broadcast %124 : vector<24x1xf32> to vector<24x32xf32>
    %133 = arith.subf %116, %132 : vector<24x32xf32>
    %cst_56 = arith.constant 9.99999974E-6 : f32
    %134 = vector.broadcast %cst_56 : f32 to vector<24x1xf32>
    %135 = arith.addf %131, %134 : vector<24x1xf32>
    %136 = math.rsqrt %135 : vector<24x1xf32>
    %137 = vector.broadcast %136 : vector<24x1xf32> to vector<24x32xf32>
    %138 = arith.mulf %133, %137 : vector<24x32xf32>
    %139 = vector.broadcast %118 : vector<1x32xf32> to vector<24x32xf32>
    %140 = arith.mulf %138, %139 : vector<24x32xf32>
    %141 = vector.broadcast %120 : vector<1x32xf32> to vector<24x32xf32>
    %142 = arith.addf %140, %141 : vector<24x32xf32>
    %143 = arith.truncf %142 : vector<24x32xf32> to vector<24x32xbf16>
    %c0_57 = arith.constant 0 : index
    %c0_58 = arith.constant 0 : index
    %c0_59 = arith.constant 0 : index
    %144 = vector.load %arg12[%c0_57, %c0_58, %c0_59] : memref<2x32x64xbf16, #tpu.memory_space<vmem>>, vector<1x32x64xbf16>
    %145 = vector.shape_cast %144 : vector<1x32x64xbf16> to vector<32x64xbf16>
    %cst_60 = arith.constant dense<0.000000e+00> : vector<24x64xf32>
    %146 = tpu.matmul %143, %145, %cst_60 {dimension_numbers = #tpu.dot_dimension_numbers<[1], [0], [0], [1], [0, 0, 1, 1], [], []>} : vector<24x32xbf16>, vector<32x64xbf16>, vector<24x64xf32> -> vector<24x64xf32>
    %c0_61 = arith.constant 0 : index
    %c0_62 = arith.constant 0 : index
    %c0_63 = arith.constant 0 : index
    %147 = vector.load %arg13[%c0_61, %c0_62, %c0_63] : memref<2x1x64xf32, #tpu.memory_space<vmem>>, vector<1x1x64xf32>
    %148 = vector.shape_cast %147 : vector<1x1x64xf32> to vector<1x64xf32>
    %149 = vector.broadcast %148 : vector<1x64xf32> to vector<24x64xf32>
    %150 = arith.addf %146, %149 : vector<24x64xf32>
    %cst_64 = arith.constant 5.000000e-01 : f32
    %151 = vector.broadcast %cst_64 : f32 to vector<24x64xf32>
    %152 = arith.mulf %151, %150 : vector<24x64xf32>
    %cst_65 = arith.constant 0.707106769 : f32
    %153 = vector.broadcast %cst_65 : f32 to vector<24x64xf32>
    %154 = arith.mulf %150, %153 : vector<24x64xf32>
    %cst_66 = arith.constant 0.000000e+00 : f32
    %155 = vector.broadcast %cst_66 : f32 to vector<24x64xf32>
    %156 = arith.cmpf olt, %154, %155 : vector<24x64xf32>
    %cst_67 = arith.constant -1.000000e+00 : f32
    %cst_68 = arith.constant 1.000000e+00 : f32
    %157 = vector.broadcast %cst_67 : f32 to vector<24x64xf32>
    %158 = vector.broadcast %cst_68 : f32 to vector<24x64xf32>
    %159 = arith.select %156, %157, %158 : vector<24x64xi1>, vector<24x64xf32>
    %160 = math.absf %154 : vector<24x64xf32>
    %cst_69 = arith.constant 0.327591091 : f32
    %161 = vector.broadcast %cst_69 : f32 to vector<24x64xf32>
    %162 = arith.mulf %161, %160 : vector<24x64xf32>
    %cst_70 = arith.constant 1.000000e+00 : f32
    %163 = vector.broadcast %cst_70 : f32 to vector<24x64xf32>
    %164 = arith.addf %163, %162 : vector<24x64xf32>
    %165 = tpu.reciprocal %164 : vector<24x64xf32> -> vector<24x64xf32>
    %cst_71 = arith.constant 1.06140542 : f32
    %166 = vector.broadcast %cst_71 : f32 to vector<24x64xf32>
    %167 = arith.mulf %166, %165 : vector<24x64xf32>
    %cst_72 = arith.constant -1.45315206 : f32
    %168 = vector.broadcast %cst_72 : f32 to vector<24x64xf32>
    %169 = arith.addf %167, %168 : vector<24x64xf32>
    %170 = arith.mulf %169, %165 : vector<24x64xf32>
    %cst_73 = arith.constant 1.42141378 : f32
    %171 = vector.broadcast %cst_73 : f32 to vector<24x64xf32>
    %172 = arith.addf %170, %171 : vector<24x64xf32>
    %173 = arith.mulf %172, %165 : vector<24x64xf32>
    %cst_74 = arith.constant -0.284496725 : f32
    %174 = vector.broadcast %cst_74 : f32 to vector<24x64xf32>
    %175 = arith.addf %173, %174 : vector<24x64xf32>
    %176 = arith.mulf %175, %165 : vector<24x64xf32>
    %cst_75 = arith.constant 0.254829586 : f32
    %177 = vector.broadcast %cst_75 : f32 to vector<24x64xf32>
    %178 = arith.addf %176, %177 : vector<24x64xf32>
    %179 = arith.mulf %178, %165 : vector<24x64xf32>
    %cst_76 = arith.constant 0.000000e+00 : f32
    %180 = vector.broadcast %cst_76 : f32 to vector<24x64xf32>
    %181 = arith.subf %180, %160 : vector<24x64xf32>
    %182 = arith.mulf %181, %160 : vector<24x64xf32>
    %183 = math.exp %182 : vector<24x64xf32>
    %184 = arith.mulf %179, %183 : vector<24x64xf32>
    %cst_77 = arith.constant 1.000000e+00 : f32
    %185 = vector.broadcast %cst_77 : f32 to vector<24x64xf32>
    %186 = arith.subf %185, %184 : vector<24x64xf32>
    %187 = arith.mulf %159, %186 : vector<24x64xf32>
    %cst_78 = arith.constant 1.000000e+00 : f32
    %188 = vector.broadcast %cst_78 : f32 to vector<24x64xf32>
    %189 = arith.addf %188, %187 : vector<24x64xf32>
    %190 = arith.mulf %152, %189 : vector<24x64xf32>
    %191 = arith.truncf %190 : vector<24x64xf32> to vector<24x64xbf16>
    %c0_79 = arith.constant 0 : index
    %c0_80 = arith.constant 0 : index
    %c0_81 = arith.constant 0 : index
    %192 = vector.load %arg14[%c0_79, %c0_80, %c0_81] : memref<2x64x32xbf16, #tpu.memory_space<vmem>>, vector<1x64x32xbf16>
    %193 = vector.shape_cast %192 : vector<1x64x32xbf16> to vector<64x32xbf16>
    %cst_82 = arith.constant dense<0.000000e+00> : vector<24x32xf32>
    %194 = tpu.matmul %191, %193, %cst_82 {dimension_numbers = #tpu.dot_dimension_numbers<[1], [0], [0], [1], [0, 0, 1, 1], [], []>} : vector<24x64xbf16>, vector<64x32xbf16>, vector<24x32xf32> -> vector<24x32xf32>
    %c0_83 = arith.constant 0 : index
    %c0_84 = arith.constant 0 : index
    %c0_85 = arith.constant 0 : index
    %195 = vector.load %arg15[%c0_83, %c0_84, %c0_85] : memref<2x1x32xf32, #tpu.memory_space<vmem>>, vector<1x1x32xf32>
    %196 = vector.shape_cast %195 : vector<1x1x32xf32> to vector<1x32xf32>
    %197 = vector.broadcast %196 : vector<1x32xf32> to vector<24x32xf32>
    %198 = arith.addf %194, %197 : vector<24x32xf32>
    %199 = arith.addf %116, %198 : vector<24x32xf32>
    %c1 = arith.constant 1 : index
    %c0_86 = arith.constant 0 : index
    %c0_87 = arith.constant 0 : index
    %200 = vector.load %arg5[%c1, %c0_86, %c0_87] : memref<2x1x32xf32, #tpu.memory_space<vmem>>, vector<1x1x32xf32>
    %201 = vector.shape_cast %200 : vector<1x1x32xf32> to vector<1x32xf32>
    %c1_88 = arith.constant 1 : index
    %c0_89 = arith.constant 0 : index
    %c0_90 = arith.constant 0 : index
    %202 = vector.load %arg6[%c1_88, %c0_89, %c0_90] : memref<2x1x32xf32, #tpu.memory_space<vmem>>, vector<1x1x32xf32>
    %203 = vector.shape_cast %202 : vector<1x1x32xf32> to vector<1x32xf32>
    %cst_91 = arith.constant dense<0.000000e+00> : vector<24xf32>
    %204 = vector.multi_reduction <add>, %199, %cst_91 [1] : vector<24x32xf32> to vector<24xf32>
    %205 = vector.shape_cast %204 : vector<24xf32> to vector<24x1xf32>
    %cst_92 = arith.constant 3.200000e+01 : f32
    %206 = vector.broadcast %cst_92 : f32 to vector<24x1xf32>
    %207 = arith.divf %205, %206 : vector<24x1xf32>
    %208 = vector.broadcast %207 : vector<24x1xf32> to vector<24x32xf32>
    %209 = arith.subf %199, %208 : vector<24x32xf32>
    %210 = arith.mulf %209, %209 : vector<24x32xf32>
    %cst_93 = arith.constant dense<0.000000e+00> : vector<24xf32>
    %211 = vector.multi_reduction <add>, %210, %cst_93 [1] : vector<24x32xf32> to vector<24xf32>
    %212 = vector.shape_cast %211 : vector<24xf32> to vector<24x1xf32>
    %cst_94 = arith.constant 3.200000e+01 : f32
    %213 = vector.broadcast %cst_94 : f32 to vector<24x1xf32>
    %214 = arith.divf %212, %213 : vector<24x1xf32>
    %215 = vector.broadcast %207 : vector<24x1xf32> to vector<24x32xf32>
    %216 = arith.subf %199, %215 : vector<24x32xf32>
    %cst_95 = arith.constant 9.99999974E-6 : f32
    %217 = vector.broadcast %cst_95 : f32 to vector<24x1xf32>
    %218 = arith.addf %214, %217 : vector<24x1xf32>
    %219 = math.rsqrt %218 : vector<24x1xf32>
    %220 = vector.broadcast %219 : vector<24x1xf32> to vector<24x32xf32>
    %221 = arith.mulf %216, %220 : vector<24x32xf32>
    %222 = vector.broadcast %201 : vector<1x32xf32> to vector<24x32xf32>
    %223 = arith.mulf %221, %222 : vector<24x32xf32>
    %224 = vector.broadcast %203 : vector<1x32xf32> to vector<24x32xf32>
    %225 = arith.addf %223, %224 : vector<24x32xf32>
    %226 = arith.truncf %225 : vector<24x32xf32> to vector<24x32xbf16>
    %c1_96 = arith.constant 1 : index
    %c0_97 = arith.constant 0 : index
    %c0_98 = arith.constant 0 : index
    %227 = vector.load %arg7[%c1_96, %c0_97, %c0_98] : memref<2x32x96xbf16, #tpu.memory_space<vmem>>, vector<1x32x96xbf16>
    %228 = vector.shape_cast %227 : vector<1x32x96xbf16> to vector<32x96xbf16>
    %cst_99 = arith.constant dense<0.000000e+00> : vector<24x96xf32>
    %229 = tpu.matmul %226, %228, %cst_99 {dimension_numbers = #tpu.dot_dimension_numbers<[1], [0], [0], [1], [0, 0, 1, 1], [], []>} : vector<24x32xbf16>, vector<32x96xbf16>, vector<24x96xf32> -> vector<24x96xf32>
    %230 = arith.truncf %229 : vector<24x96xf32> to vector<24x96xbf16>
    %231 = vector.extract_strided_slice %230 {offsets = [0, 0], sizes = [24, 8], strides = [1, 1]} : vector<24x96xbf16> to vector<24x8xbf16>
    %232 = vector.extract_strided_slice %230 {offsets = [0, 32], sizes = [24, 8], strides = [1, 1]} : vector<24x96xbf16> to vector<24x8xbf16>
    %233 = vector.extract_strided_slice %230 {offsets = [0, 64], sizes = [24, 8], strides = [1, 1]} : vector<24x96xbf16> to vector<24x8xbf16>
    "tpu.trace_start"() <{level = 10 : i32, message = "qd,kd->qk"}> : () -> ()
    %cst_100 = arith.constant dense<0.000000e+00> : vector<24x24xf32>
    %234 = tpu.matmul %231, %232, %cst_100 {dimension_numbers = #tpu.dot_dimension_numbers<[1], [1], [0], [0], [0, 0, 1, 0], [], []>} : vector<24x8xbf16>, vector<24x8xbf16>, vector<24x24xf32> -> vector<24x24xf32>
    "tpu.trace_stop"() : () -> ()
    %235 = arith.addf %234, %7 : vector<24x24xf32>
    %cst_101 = arith.constant dense<0xFF800000> : vector<24xf32>
    %236 = vector.multi_reduction <maximumf>, %235, %cst_101 [1] : vector<24x24xf32> to vector<24xf32>
    %237 = vector.shape_cast %236 : vector<24xf32> to vector<24x1xf32>
    %238 = vector.broadcast %237 : vector<24x1xf32> to vector<24x24xf32>
    %239 = arith.subf %235, %238 : vector<24x24xf32>
    %240 = math.exp %239 : vector<24x24xf32>
    %cst_102 = arith.constant dense<0.000000e+00> : vector<24xf32>
    %241 = vector.multi_reduction <add>, %240, %cst_102 [1] : vector<24x24xf32> to vector<24xf32>
    %242 = vector.shape_cast %241 : vector<24xf32> to vector<24x1xf32>
    %243 = tpu.reciprocal %242 : vector<24x1xf32> -> vector<24x1xf32>
    %244 = vector.broadcast %243 : vector<24x1xf32> to vector<24x24xf32>
    %245 = arith.mulf %240, %244 : vector<24x24xf32>
    %246 = arith.truncf %245 : vector<24x24xf32> to vector<24x24xbf16>
    %cst_103 = arith.constant dense<0.000000e+00> : vector<24x8xf32>
    %247 = tpu.matmul %246, %233, %cst_103 {dimension_numbers = #tpu.dot_dimension_numbers<[1], [0], [0], [1], [0, 0, 1, 1], [], []>} : vector<24x24xbf16>, vector<24x8xbf16>, vector<24x8xf32> -> vector<24x8xf32>
    %248 = vector.extract_strided_slice %230 {offsets = [0, 8], sizes = [24, 8], strides = [1, 1]} : vector<24x96xbf16> to vector<24x8xbf16>
    %249 = vector.extract_strided_slice %230 {offsets = [0, 40], sizes = [24, 8], strides = [1, 1]} : vector<24x96xbf16> to vector<24x8xbf16>
    %250 = vector.extract_strided_slice %230 {offsets = [0, 72], sizes = [24, 8], strides = [1, 1]} : vector<24x96xbf16> to vector<24x8xbf16>
    "tpu.trace_start"() <{level = 10 : i32, message = "qd,kd->qk"}> : () -> ()
    %cst_104 = arith.constant dense<0.000000e+00> : vector<24x24xf32>
    %251 = tpu.matmul %248, %249, %cst_104 {dimension_numbers = #tpu.dot_dimension_numbers<[1], [1], [0], [0], [0, 0, 1, 0], [], []>} : vector<24x8xbf16>, vector<24x8xbf16>, vector<24x24xf32> -> vector<24x24xf32>
    "tpu.trace_stop"() : () -> ()
    %252 = arith.addf %251, %7 : vector<24x24xf32>
    %cst_105 = arith.constant dense<0xFF800000> : vector<24xf32>
    %253 = vector.multi_reduction <maximumf>, %252, %cst_105 [1] : vector<24x24xf32> to vector<24xf32>
    %254 = vector.shape_cast %253 : vector<24xf32> to vector<24x1xf32>
    %255 = vector.broadcast %254 : vector<24x1xf32> to vector<24x24xf32>
    %256 = arith.subf %252, %255 : vector<24x24xf32>
    %257 = math.exp %256 : vector<24x24xf32>
    %cst_106 = arith.constant dense<0.000000e+00> : vector<24xf32>
    %258 = vector.multi_reduction <add>, %257, %cst_106 [1] : vector<24x24xf32> to vector<24xf32>
    %259 = vector.shape_cast %258 : vector<24xf32> to vector<24x1xf32>
    %260 = tpu.reciprocal %259 : vector<24x1xf32> -> vector<24x1xf32>
    %261 = vector.broadcast %260 : vector<24x1xf32> to vector<24x24xf32>
    %262 = arith.mulf %257, %261 : vector<24x24xf32>
    %263 = arith.truncf %262 : vector<24x24xf32> to vector<24x24xbf16>
    %cst_107 = arith.constant dense<0.000000e+00> : vector<24x8xf32>
    %264 = tpu.matmul %263, %250, %cst_107 {dimension_numbers = #tpu.dot_dimension_numbers<[1], [0], [0], [1], [0, 0, 1, 1], [], []>} : vector<24x24xbf16>, vector<24x8xbf16>, vector<24x8xf32> -> vector<24x8xf32>
    %265 = vector.extract_strided_slice %230 {offsets = [0, 16], sizes = [24, 8], strides = [1, 1]} : vector<24x96xbf16> to vector<24x8xbf16>
    %266 = vector.extract_strided_slice %230 {offsets = [0, 48], sizes = [24, 8], strides = [1, 1]} : vector<24x96xbf16> to vector<24x8xbf16>
    %267 = vector.extract_strided_slice %230 {offsets = [0, 80], sizes = [24, 8], strides = [1, 1]} : vector<24x96xbf16> to vector<24x8xbf16>
    "tpu.trace_start"() <{level = 10 : i32, message = "qd,kd->qk"}> : () -> ()
    %cst_108 = arith.constant dense<0.000000e+00> : vector<24x24xf32>
    %268 = tpu.matmul %265, %266, %cst_108 {dimension_numbers = #tpu.dot_dimension_numbers<[1], [1], [0], [0], [0, 0, 1, 0], [], []>} : vector<24x8xbf16>, vector<24x8xbf16>, vector<24x24xf32> -> vector<24x24xf32>
    "tpu.trace_stop"() : () -> ()
    %269 = arith.addf %268, %7 : vector<24x24xf32>
    %cst_109 = arith.constant dense<0xFF800000> : vector<24xf32>
    %270 = vector.multi_reduction <maximumf>, %269, %cst_109 [1] : vector<24x24xf32> to vector<24xf32>
    %271 = vector.shape_cast %270 : vector<24xf32> to vector<24x1xf32>
    %272 = vector.broadcast %271 : vector<24x1xf32> to vector<24x24xf32>
    %273 = arith.subf %269, %272 : vector<24x24xf32>
    %274 = math.exp %273 : vector<24x24xf32>
    %cst_110 = arith.constant dense<0.000000e+00> : vector<24xf32>
    %275 = vector.multi_reduction <add>, %274, %cst_110 [1] : vector<24x24xf32> to vector<24xf32>
    %276 = vector.shape_cast %275 : vector<24xf32> to vector<24x1xf32>
    %277 = tpu.reciprocal %276 : vector<24x1xf32> -> vector<24x1xf32>
    %278 = vector.broadcast %277 : vector<24x1xf32> to vector<24x24xf32>
    %279 = arith.mulf %274, %278 : vector<24x24xf32>
    %280 = arith.truncf %279 : vector<24x24xf32> to vector<24x24xbf16>
    %cst_111 = arith.constant dense<0.000000e+00> : vector<24x8xf32>
    %281 = tpu.matmul %280, %267, %cst_111 {dimension_numbers = #tpu.dot_dimension_numbers<[1], [0], [0], [1], [0, 0, 1, 1], [], []>} : vector<24x24xbf16>, vector<24x8xbf16>, vector<24x8xf32> -> vector<24x8xf32>
    %282 = vector.extract_strided_slice %230 {offsets = [0, 24], sizes = [24, 8], strides = [1, 1]} : vector<24x96xbf16> to vector<24x8xbf16>
    %283 = vector.extract_strided_slice %230 {offsets = [0, 56], sizes = [24, 8], strides = [1, 1]} : vector<24x96xbf16> to vector<24x8xbf16>
    %284 = vector.extract_strided_slice %230 {offsets = [0, 88], sizes = [24, 8], strides = [1, 1]} : vector<24x96xbf16> to vector<24x8xbf16>
    "tpu.trace_start"() <{level = 10 : i32, message = "qd,kd->qk"}> : () -> ()
    %cst_112 = arith.constant dense<0.000000e+00> : vector<24x24xf32>
    %285 = tpu.matmul %282, %283, %cst_112 {dimension_numbers = #tpu.dot_dimension_numbers<[1], [1], [0], [0], [0, 0, 1, 0], [], []>} : vector<24x8xbf16>, vector<24x8xbf16>, vector<24x24xf32> -> vector<24x24xf32>
    "tpu.trace_stop"() : () -> ()
    %286 = arith.addf %285, %7 : vector<24x24xf32>
    %cst_113 = arith.constant dense<0xFF800000> : vector<24xf32>
    %287 = vector.multi_reduction <maximumf>, %286, %cst_113 [1] : vector<24x24xf32> to vector<24xf32>
    %288 = vector.shape_cast %287 : vector<24xf32> to vector<24x1xf32>
    %289 = vector.broadcast %288 : vector<24x1xf32> to vector<24x24xf32>
    %290 = arith.subf %286, %289 : vector<24x24xf32>
    %291 = math.exp %290 : vector<24x24xf32>
    %cst_114 = arith.constant dense<0.000000e+00> : vector<24xf32>
    %292 = vector.multi_reduction <add>, %291, %cst_114 [1] : vector<24x24xf32> to vector<24xf32>
    %293 = vector.shape_cast %292 : vector<24xf32> to vector<24x1xf32>
    %294 = tpu.reciprocal %293 : vector<24x1xf32> -> vector<24x1xf32>
    %295 = vector.broadcast %294 : vector<24x1xf32> to vector<24x24xf32>
    %296 = arith.mulf %291, %295 : vector<24x24xf32>
    %297 = arith.truncf %296 : vector<24x24xf32> to vector<24x24xbf16>
    %cst_115 = arith.constant dense<0.000000e+00> : vector<24x8xf32>
    %298 = tpu.matmul %297, %284, %cst_115 {dimension_numbers = #tpu.dot_dimension_numbers<[1], [0], [0], [1], [0, 0, 1, 1], [], []>} : vector<24x24xbf16>, vector<24x8xbf16>, vector<24x8xf32> -> vector<24x8xf32>
    %299 = tpu.concatenate %247, %264, %281, %298 in 1 : vector<24x8xf32>, vector<24x8xf32>, vector<24x8xf32>, vector<24x8xf32> -> vector<24x32xf32>
    %300 = arith.truncf %299 : vector<24x32xf32> to vector<24x32xbf16>
    %c1_116 = arith.constant 1 : index
    %c0_117 = arith.constant 0 : index
    %c0_118 = arith.constant 0 : index
    %301 = vector.load %arg8[%c1_116, %c0_117, %c0_118] : memref<2x32x32xbf16, #tpu.memory_space<vmem>>, vector<1x32x32xbf16>
    %302 = vector.shape_cast %301 : vector<1x32x32xbf16> to vector<32x32xbf16>
    %cst_119 = arith.constant dense<0.000000e+00> : vector<24x32xf32>
    %303 = tpu.matmul %300, %302, %cst_119 {dimension_numbers = #tpu.dot_dimension_numbers<[1], [0], [0], [1], [0, 0, 1, 1], [], []>} : vector<24x32xbf16>, vector<32x32xbf16>, vector<24x32xf32> -> vector<24x32xf32>
    %304 = arith.addf %199, %303 : vector<24x32xf32>
    %c1_120 = arith.constant 1 : index
    %c0_121 = arith.constant 0 : index
    %c0_122 = arith.constant 0 : index
    %305 = vector.load %arg9[%c1_120, %c0_121, %c0_122] : memref<2x1x32xf32, #tpu.memory_space<vmem>>, vector<1x1x32xf32>
    %306 = vector.shape_cast %305 : vector<1x1x32xf32> to vector<1x32xf32>
    %307 = vector.broadcast %306 : vector<1x32xf32> to vector<24x32xf32>
    %308 = arith.addf %304, %307 : vector<24x32xf32>
    %c1_123 = arith.constant 1 : index
    %c0_124 = arith.constant 0 : index
    %c0_125 = arith.constant 0 : index
    %309 = vector.load %arg10[%c1_123, %c0_124, %c0_125] : memref<2x1x32xf32, #tpu.memory_space<vmem>>, vector<1x1x32xf32>
    %310 = vector.shape_cast %309 : vector<1x1x32xf32> to vector<1x32xf32>
    %c1_126 = arith.constant 1 : index
    %c0_127 = arith.constant 0 : index
    %c0_128 = arith.constant 0 : index
    %311 = vector.load %arg11[%c1_126, %c0_127, %c0_128] : memref<2x1x32xf32, #tpu.memory_space<vmem>>, vector<1x1x32xf32>
    %312 = vector.shape_cast %311 : vector<1x1x32xf32> to vector<1x32xf32>
    %cst_129 = arith.constant dense<0.000000e+00> : vector<24xf32>
    %313 = vector.multi_reduction <add>, %308, %cst_129 [1] : vector<24x32xf32> to vector<24xf32>
    %314 = vector.shape_cast %313 : vector<24xf32> to vector<24x1xf32>
    %cst_130 = arith.constant 3.200000e+01 : f32
    %315 = vector.broadcast %cst_130 : f32 to vector<24x1xf32>
    %316 = arith.divf %314, %315 : vector<24x1xf32>
    %317 = vector.broadcast %316 : vector<24x1xf32> to vector<24x32xf32>
    %318 = arith.subf %308, %317 : vector<24x32xf32>
    %319 = arith.mulf %318, %318 : vector<24x32xf32>
    %cst_131 = arith.constant dense<0.000000e+00> : vector<24xf32>
    %320 = vector.multi_reduction <add>, %319, %cst_131 [1] : vector<24x32xf32> to vector<24xf32>
    %321 = vector.shape_cast %320 : vector<24xf32> to vector<24x1xf32>
    %cst_132 = arith.constant 3.200000e+01 : f32
    %322 = vector.broadcast %cst_132 : f32 to vector<24x1xf32>
    %323 = arith.divf %321, %322 : vector<24x1xf32>
    %324 = vector.broadcast %316 : vector<24x1xf32> to vector<24x32xf32>
    %325 = arith.subf %308, %324 : vector<24x32xf32>
    %cst_133 = arith.constant 9.99999974E-6 : f32
    %326 = vector.broadcast %cst_133 : f32 to vector<24x1xf32>
    %327 = arith.addf %323, %326 : vector<24x1xf32>
    %328 = math.rsqrt %327 : vector<24x1xf32>
    %329 = vector.broadcast %328 : vector<24x1xf32> to vector<24x32xf32>
    %330 = arith.mulf %325, %329 : vector<24x32xf32>
    %331 = vector.broadcast %310 : vector<1x32xf32> to vector<24x32xf32>
    %332 = arith.mulf %330, %331 : vector<24x32xf32>
    %333 = vector.broadcast %312 : vector<1x32xf32> to vector<24x32xf32>
    %334 = arith.addf %332, %333 : vector<24x32xf32>
    %335 = arith.truncf %334 : vector<24x32xf32> to vector<24x32xbf16>
    %c1_134 = arith.constant 1 : index
    %c0_135 = arith.constant 0 : index
    %c0_136 = arith.constant 0 : index
    %336 = vector.load %arg12[%c1_134, %c0_135, %c0_136] : memref<2x32x64xbf16, #tpu.memory_space<vmem>>, vector<1x32x64xbf16>
    %337 = vector.shape_cast %336 : vector<1x32x64xbf16> to vector<32x64xbf16>
    %cst_137 = arith.constant dense<0.000000e+00> : vector<24x64xf32>
    %338 = tpu.matmul %335, %337, %cst_137 {dimension_numbers = #tpu.dot_dimension_numbers<[1], [0], [0], [1], [0, 0, 1, 1], [], []>} : vector<24x32xbf16>, vector<32x64xbf16>, vector<24x64xf32> -> vector<24x64xf32>
    %c1_138 = arith.constant 1 : index
    %c0_139 = arith.constant 0 : index
    %c0_140 = arith.constant 0 : index
    %339 = vector.load %arg13[%c1_138, %c0_139, %c0_140] : memref<2x1x64xf32, #tpu.memory_space<vmem>>, vector<1x1x64xf32>
    %340 = vector.shape_cast %339 : vector<1x1x64xf32> to vector<1x64xf32>
    %341 = vector.broadcast %340 : vector<1x64xf32> to vector<24x64xf32>
    %342 = arith.addf %338, %341 : vector<24x64xf32>
    %cst_141 = arith.constant 5.000000e-01 : f32
    %343 = vector.broadcast %cst_141 : f32 to vector<24x64xf32>
    %344 = arith.mulf %343, %342 : vector<24x64xf32>
    %cst_142 = arith.constant 0.707106769 : f32
    %345 = vector.broadcast %cst_142 : f32 to vector<24x64xf32>
    %346 = arith.mulf %342, %345 : vector<24x64xf32>
    %cst_143 = arith.constant 0.000000e+00 : f32
    %347 = vector.broadcast %cst_143 : f32 to vector<24x64xf32>
    %348 = arith.cmpf olt, %346, %347 : vector<24x64xf32>
    %cst_144 = arith.constant -1.000000e+00 : f32
    %cst_145 = arith.constant 1.000000e+00 : f32
    %349 = vector.broadcast %cst_144 : f32 to vector<24x64xf32>
    %350 = vector.broadcast %cst_145 : f32 to vector<24x64xf32>
    %351 = arith.select %348, %349, %350 : vector<24x64xi1>, vector<24x64xf32>
    %352 = math.absf %346 : vector<24x64xf32>
    %cst_146 = arith.constant 0.327591091 : f32
    %353 = vector.broadcast %cst_146 : f32 to vector<24x64xf32>
    %354 = arith.mulf %353, %352 : vector<24x64xf32>
    %cst_147 = arith.constant 1.000000e+00 : f32
    %355 = vector.broadcast %cst_147 : f32 to vector<24x64xf32>
    %356 = arith.addf %355, %354 : vector<24x64xf32>
    %357 = tpu.reciprocal %356 : vector<24x64xf32> -> vector<24x64xf32>
    %cst_148 = arith.constant 1.06140542 : f32
    %358 = vector.broadcast %cst_148 : f32 to vector<24x64xf32>
    %359 = arith.mulf %358, %357 : vector<24x64xf32>
    %cst_149 = arith.constant -1.45315206 : f32
    %360 = vector.broadcast %cst_149 : f32 to vector<24x64xf32>
    %361 = arith.addf %359, %360 : vector<24x64xf32>
    %362 = arith.mulf %361, %357 : vector<24x64xf32>
    %cst_150 = arith.constant 1.42141378 : f32
    %363 = vector.broadcast %cst_150 : f32 to vector<24x64xf32>
    %364 = arith.addf %362, %363 : vector<24x64xf32>
    %365 = arith.mulf %364, %357 : vector<24x64xf32>
    %cst_151 = arith.constant -0.284496725 : f32
    %366 = vector.broadcast %cst_151 : f32 to vector<24x64xf32>
    %367 = arith.addf %365, %366 : vector<24x64xf32>
    %368 = arith.mulf %367, %357 : vector<24x64xf32>
    %cst_152 = arith.constant 0.254829586 : f32
    %369 = vector.broadcast %cst_152 : f32 to vector<24x64xf32>
    %370 = arith.addf %368, %369 : vector<24x64xf32>
    %371 = arith.mulf %370, %357 : vector<24x64xf32>
    %cst_153 = arith.constant 0.000000e+00 : f32
    %372 = vector.broadcast %cst_153 : f32 to vector<24x64xf32>
    %373 = arith.subf %372, %352 : vector<24x64xf32>
    %374 = arith.mulf %373, %352 : vector<24x64xf32>
    %375 = math.exp %374 : vector<24x64xf32>
    %376 = arith.mulf %371, %375 : vector<24x64xf32>
    %cst_154 = arith.constant 1.000000e+00 : f32
    %377 = vector.broadcast %cst_154 : f32 to vector<24x64xf32>
    %378 = arith.subf %377, %376 : vector<24x64xf32>
    %379 = arith.mulf %351, %378 : vector<24x64xf32>
    %cst_155 = arith.constant 1.000000e+00 : f32
    %380 = vector.broadcast %cst_155 : f32 to vector<24x64xf32>
    %381 = arith.addf %380, %379 : vector<24x64xf32>
    %382 = arith.mulf %344, %381 : vector<24x64xf32>
    %383 = arith.truncf %382 : vector<24x64xf32> to vector<24x64xbf16>
    %c1_156 = arith.constant 1 : index
    %c0_157 = arith.constant 0 : index
    %c0_158 = arith.constant 0 : index
    %384 = vector.load %arg14[%c1_156, %c0_157, %c0_158] : memref<2x64x32xbf16, #tpu.memory_space<vmem>>, vector<1x64x32xbf16>
    %385 = vector.shape_cast %384 : vector<1x64x32xbf16> to vector<64x32xbf16>
    %cst_159 = arith.constant dense<0.000000e+00> : vector<24x32xf32>
    %386 = tpu.matmul %383, %385, %cst_159 {dimension_numbers = #tpu.dot_dimension_numbers<[1], [0], [0], [1], [0, 0, 1, 1], [], []>} : vector<24x64xbf16>, vector<64x32xbf16>, vector<24x32xf32> -> vector<24x32xf32>
    %c1_160 = arith.constant 1 : index
    %c0_161 = arith.constant 0 : index
    %c0_162 = arith.constant 0 : index
    %387 = vector.load %arg15[%c1_160, %c0_161, %c0_162] : memref<2x1x32xf32, #tpu.memory_space<vmem>>, vector<1x1x32xf32>
    %388 = vector.shape_cast %387 : vector<1x1x32xf32> to vector<1x32xf32>
    %389 = vector.broadcast %388 : vector<1x32xf32> to vector<24x32xf32>
    %390 = arith.addf %386, %389 : vector<24x32xf32>
    %391 = arith.addf %308, %390 : vector<24x32xf32>
    %392 = vector.extract_strided_slice %391 {offsets = [0, 0], sizes = [1, 32], strides = [1, 1]} : vector<24x32xf32> to vector<1x32xf32>
    %c0_163 = arith.constant 0 : index
    %c0_164 = arith.constant 0 : index
    %393 = vector.load %arg16[%c0_163, %c0_164] : memref<1x32xf32, #tpu.memory_space<vmem>>, vector<1x32xf32>
    %c0_165 = arith.constant 0 : index
    %c0_166 = arith.constant 0 : index
    %394 = vector.load %arg17[%c0_165, %c0_166] : memref<1x32xf32, #tpu.memory_space<vmem>>, vector<1x32xf32>
    %cst_167 = arith.constant dense<0.000000e+00> : vector<1xf32>
    %395 = vector.multi_reduction <add>, %392, %cst_167 [1] : vector<1x32xf32> to vector<1xf32>
    %396 = vector.shape_cast %395 : vector<1xf32> to vector<1x1xf32>
    %cst_168 = arith.constant 3.200000e+01 : f32
    %397 = vector.broadcast %cst_168 : f32 to vector<1x1xf32>
    %398 = arith.divf %396, %397 : vector<1x1xf32>
    %399 = vector.broadcast %398 : vector<1x1xf32> to vector<1x32xf32>
    %400 = arith.subf %392, %399 : vector<1x32xf32>
    %401 = arith.mulf %400, %400 : vector<1x32xf32>
    %cst_169 = arith.constant dense<0.000000e+00> : vector<1xf32>
    %402 = vector.multi_reduction <add>, %401, %cst_169 [1] : vector<1x32xf32> to vector<1xf32>
    %403 = vector.shape_cast %402 : vector<1xf32> to vector<1x1xf32>
    %cst_170 = arith.constant 3.200000e+01 : f32
    %404 = vector.broadcast %cst_170 : f32 to vector<1x1xf32>
    %405 = arith.divf %403, %404 : vector<1x1xf32>
    %406 = vector.broadcast %398 : vector<1x1xf32> to vector<1x32xf32>
    %407 = arith.subf %392, %406 : vector<1x32xf32>
    %cst_171 = arith.constant 9.99999974E-6 : f32
    %408 = vector.broadcast %cst_171 : f32 to vector<1x1xf32>
    %409 = arith.addf %405, %408 : vector<1x1xf32>
    %410 = math.rsqrt %409 : vector<1x1xf32>
    %411 = vector.broadcast %410 : vector<1x1xf32> to vector<1x32xf32>
    %412 = arith.mulf %407, %411 : vector<1x32xf32>
    %413 = arith.mulf %412, %393 : vector<1x32xf32>
    %414 = arith.addf %413, %394 : vector<1x32xf32>
    %415 = arith.truncf %414 : vector<1x32xf32> to vector<1x32xbf16>
    %c0_172 = arith.constant 0 : index
    %c0_173 = arith.constant 0 : index
    %416 = vector.load %arg18[%c0_172, %c0_173] : memref<32x128xbf16, #tpu.memory_space<vmem>>, vector<32x128xbf16>
    %cst_174 = arith.constant dense<0.000000e+00> : vector<1x128xf32>
    %417 = tpu.matmul %415, %416, %cst_174 {dimension_numbers = #tpu.dot_dimension_numbers<[1], [0], [0], [1], [0, 0, 1, 1], [], []>} : vector<1x32xbf16>, vector<32x128xbf16>, vector<1x128xf32> -> vector<1x128xf32>
    %c0_175 = arith.constant 0 : index
    %c0_176 = arith.constant 0 : index
    %418 = vector.load %arg19[%c0_175, %c0_176] : memref<1x128xf32, #tpu.memory_space<vmem>>, vector<1x128xf32>
    %419 = arith.addf %417, %418 : vector<1x128xf32>
    %420 = vector.shape_cast %419 : vector<1x128xf32> to vector<1x1x128xf32>
    %c0_177 = arith.constant 0 : index
    %c0_178 = arith.constant 0 : index
    %c0_179 = arith.constant 0 : index
    %421 = vector.load %arg20[%c0_177, %c0_178, %c0_179] : memref<1x1x128xf32, #tpu.memory_space<vmem>>, vector<1x1x128xf32>
    tpu.vector_store %arg20[%c0_177, %c0_178, %c0_179], %420 {strides = array<i32>} : memref<1x1x128xf32, #tpu.memory_space<vmem>>, vector<1x1x128xf32>,
    return
  }
  func.func @transform_0(%arg0: i32) -> (i32, i32, i32) {
    %c0_i32 = arith.constant 0 : i32
    %c0_i32_0 = arith.constant 0 : i32
    %c0_i32_1 = arith.constant 0 : i32
    return %arg0, %c0_i32, %c0_i32_0 : i32, i32, i32
  }
  func.func @transform_1(%arg0: i32) -> (i32, i32) {
    %c0_i32 = arith.constant 0 : i32
    %c0_i32_0 = arith.constant 0 : i32
    %c0_i32_1 = arith.constant 0 : i32
    return %c0_i32, %c0_i32_0 : i32, i32
  }
  func.func @transform_2(%arg0: i32) -> (i32, i32) {
    %c0_i32 = arith.constant 0 : i32
    %c0_i32_0 = arith.constant 0 : i32
    %c0_i32_1 = arith.constant 0 : i32
    return %c0_i32, %c0_i32_0 : i32, i32
  }
  func.func @transform_3(%arg0: i32) -> (i32, i32) {
    %c0_i32 = arith.constant 0 : i32
    %c0_i32_0 = arith.constant 0 : i32
    %c0_i32_1 = arith.constant 0 : i32
    return %c0_i32, %c0_i32_0 : i32, i32
  }
  func.func @transform_4(%arg0: i32) -> (i32, i32, i32) {
    %c0_i32 = arith.constant 0 : i32
    %c0_i32_0 = arith.constant 0 : i32
    %c0_i32_1 = arith.constant 0 : i32
    %c0_i32_2 = arith.constant 0 : i32
    return %c0_i32, %c0_i32_0, %c0_i32_1 : i32, i32, i32
  }
  func.func @transform_5(%arg0: i32) -> (i32, i32, i32) {
    %c0_i32 = arith.constant 0 : i32
    %c0_i32_0 = arith.constant 0 : i32
    %c0_i32_1 = arith.constant 0 : i32
    %c0_i32_2 = arith.constant 0 : i32
    return %c0_i32, %c0_i32_0, %c0_i32_1 : i32, i32, i32
  }
  func.func @transform_6(%arg0: i32) -> (i32, i32, i32) {
    %c0_i32 = arith.constant 0 : i32
    %c0_i32_0 = arith.constant 0 : i32
    %c0_i32_1 = arith.constant 0 : i32
    %c0_i32_2 = arith.constant 0 : i32
    return %c0_i32, %c0_i32_0, %c0_i32_1 : i32, i32, i32
  }
  func.func @transform_7(%arg0: i32) -> (i32, i32, i32) {
    %c0_i32 = arith.constant 0 : i32
    %c0_i32_0 = arith.constant 0 : i32
    %c0_i32_1 = arith.constant 0 : i32
    %c0_i32_2 = arith.constant 0 : i32
    return %c0_i32, %c0_i32_0, %c0_i32_1 : i32, i32, i32
  }
  func.func @transform_8(%arg0: i32) -> (i32, i32, i32) {
    %c0_i32 = arith.constant 0 : i32
    %c0_i32_0 = arith.constant 0 : i32
    %c0_i32_1 = arith.constant 0 : i32
    %c0_i32_2 = arith.constant 0 : i32
    return %c0_i32, %c0_i32_0, %c0_i32_1 : i32, i32, i32
  }
  func.func @transform_9(%arg0: i32) -> (i32, i32, i32) {
    %c0_i32 = arith.constant 0 : i32
    %c0_i32_0 = arith.constant 0 : i32
    %c0_i32_1 = arith.constant 0 : i32
    %c0_i32_2 = arith.constant 0 : i32
    return %c0_i32, %c0_i32_0, %c0_i32_1 : i32, i32, i32
  }
  func.func @transform_10(%arg0: i32) -> (i32, i32, i32) {
    %c0_i32 = arith.constant 0 : i32
    %c0_i32_0 = arith.constant 0 : i32
    %c0_i32_1 = arith.constant 0 : i32
    %c0_i32_2 = arith.constant 0 : i32
    return %c0_i32, %c0_i32_0, %c0_i32_1 : i32, i32, i32
  }
  func.func @transform_11(%arg0: i32) -> (i32, i32, i32) {
    %c0_i32 = arith.constant 0 : i32
    %c0_i32_0 = arith.constant 0 : i32
    %c0_i32_1 = arith.constant 0 : i32
    %c0_i32_2 = arith.constant 0 : i32
    return %c0_i32, %c0_i32_0, %c0_i32_1 : i32, i32, i32
  }
  func.func @transform_12(%arg0: i32) -> (i32, i32, i32) {
    %c0_i32 = arith.constant 0 : i32
    %c0_i32_0 = arith.constant 0 : i32
    %c0_i32_1 = arith.constant 0 : i32
    %c0_i32_2 = arith.constant 0 : i32
    return %c0_i32, %c0_i32_0, %c0_i32_1 : i32, i32, i32
  }
  func.func @transform_13(%arg0: i32) -> (i32, i32, i32) {
    %c0_i32 = arith.constant 0 : i32
    %c0_i32_0 = arith.constant 0 : i32
    %c0_i32_1 = arith.constant 0 : i32
    %c0_i32_2 = arith.constant 0 : i32
    return %c0_i32, %c0_i32_0, %c0_i32_1 : i32, i32, i32
  }
  func.func @transform_14(%arg0: i32) -> (i32, i32, i32) {
    %c0_i32 = arith.constant 0 : i32
    %c0_i32_0 = arith.constant 0 : i32
    %c0_i32_1 = arith.constant 0 : i32
    %c0_i32_2 = arith.constant 0 : i32
    return %c0_i32, %c0_i32_0, %c0_i32_1 : i32, i32, i32
  }
  func.func @transform_15(%arg0: i32) -> (i32, i32) {
    %c0_i32 = arith.constant 0 : i32
    %c0_i32_0 = arith.constant 0 : i32
    %c0_i32_1 = arith.constant 0 : i32
    return %c0_i32, %c0_i32_0 : i32, i32
  }
  func.func @transform_16(%arg0: i32) -> (i32, i32) {
    %c0_i32 = arith.constant 0 : i32
    %c0_i32_0 = arith.constant 0 : i32
    %c0_i32_1 = arith.constant 0 : i32
    return %c0_i32, %c0_i32_0 : i32, i32
  }
  func.func @transform_17(%arg0: i32) -> (i32, i32) {
    %c0_i32 = arith.constant 0 : i32
    %c0_i32_0 = arith.constant 0 : i32
    %c0_i32_1 = arith.constant 0 : i32
    return %c0_i32, %c0_i32_0 : i32, i32
  }
  func.func @transform_18(%arg0: i32) -> (i32, i32) {
    %c0_i32 = arith.constant 0 : i32
    %c0_i32_0 = arith.constant 0 : i32
    %c0_i32_1 = arith.constant 0 : i32
    return %c0_i32, %c0_i32_0 : i32, i32
  }
  func.func @transform_19(%arg0: i32) -> (i32, i32, i32) {
    %c0_i32 = arith.constant 0 : i32
    %c0_i32_0 = arith.constant 0 : i32
    %c0_i32_1 = arith.constant 0 : i32
    return %arg0, %c0_i32, %c0_i32_0 : i32, i32, i32
  }
}

</mosaic_0001>

<llo_original>
// kernel: tpu_custom_call.1
$region0: #{tpu_custom_call.1}
  #allocation0 [shape = 'u32[]', space=smem, size = 0x4, offset = 0x4, fixed_abs, tag = 'smem constant byte address 0x4 - core index']
  #allocation1 [shape = 'u32[144,128]{1,0:T(1,128)}', space=vmem, size = 0x12000, scoped, tag = 'internal scratch']
  %s0 = inlined_call_operand.vmem [shape: f32[2,24,48], index: 0, kind: input, shape index: {}]
  %s1 = inlined_call_operand.hbm [shape: f32[24,32], index: 1, kind: input, shape index: {}]
  %s2 = inlined_call_operand.hbm [shape: f32[24,24], index: 2, kind: input, shape index: {}]
  %s3 = inlined_call_operand.vmem [shape: bf16[48,32], index: 3, kind: input, shape index: {}]
  %s4 = inlined_call_operand.hbm [shape: f32[2,1,32], index: 4, kind: input, shape index: {}]
  %s5 = inlined_call_operand.hbm [shape: f32[2,1,32], index: 5, kind: input, shape index: {}]
  %s6 = inlined_call_operand.vmem [shape: bf16[2,32,96], index: 6, kind: input, shape index: {}]
  %s7 = inlined_call_operand.vmem [shape: bf16[2,32,32], index: 7, kind: input, shape index: {}]
  %s8 = inlined_call_operand.hbm [shape: f32[2,1,32], index: 8, kind: input, shape index: {}]
  %s9 = inlined_call_operand.hbm [shape: f32[2,1,32], index: 9, kind: input, shape index: {}]
  %s10 = inlined_call_operand.hbm [shape: f32[2,1,32], index: 10, kind: input, shape index: {}]
  %s11 = inlined_call_operand.vmem [shape: bf16[2,32,64], index: 11, kind: input, shape index: {}]
  %s12 = inlined_call_operand.hbm [shape: f32[2,1,64], index: 12, kind: input, shape index: {}]
  %s13 = inlined_call_operand.vmem [shape: bf16[2,64,32], index: 13, kind: input, shape index: {}]
  %s14 = inlined_call_operand.hbm [shape: f32[2,1,32], index: 14, kind: input, shape index: {}]
  %s15 = inlined_call_operand.hbm [shape: f32[1,32], index: 15, kind: input, shape index: {}]
  %s16 = inlined_call_operand.vmem [shape: f32[1,32], index: 16, kind: input, shape index: {}]
  %s17 = inlined_call_operand.vmem [shape: bf16[32,128], index: 17, kind: input, shape index: {}]
  %s18 = inlined_call_operand.vmem [shape: f32[1,128], index: 18, kind: input, shape index: {}]
  %s19 = inlined_call_operand.hbm [shape: f32[2,1,128], index: 19, kind: output, shape index: {}]
  %s20 = sld [smem:[#allocation0]]
  $region149: #{tpu_custom_call.1} parent=0
    _
  %s22 = ssub.s32 1, %s20
  %s23 = scalar_select 0, %s22, %s20
  $region1: #{tpu_custom_call.1} parent=0
    #allocation2 [shape = 'u8[12288]{0}', space=vmem, size = 0x3000, scoped, tag = 'input window, operand 1, single buffered']
    #allocation3 [shape = 's32[2]{0}', space=sflag, size = 0x8, scoped, tag = 'scoped memory for tpu_custom_call.1']
    #allocation4 [shape = 's32[2]{0}', space=sflag, size = 0x8, scoped, tag = 'scoped memory for tpu_custom_call.1']
    #allocation5 [shape = 'u8[12288]{0}', space=vmem, size = 0x3000, scoped, tag = 'input window, operand 2, single buffered']
    #allocation6 [shape = 's32[1]{0}', space=sflag, size = 0x4, scoped, tag = 'scoped memory for tpu_custom_call.1']
    #allocation7 [shape = 'u8[1024]{0}', space=vmem, size = 0x400, scoped, tag = 'input window, operand 4, single buffered']
    #allocation8 [shape = 'u8[1024]{0}', space=vmem, size = 0x400, scoped, tag = 'input window, operand 5, single buffered']
    #allocation9 [shape = 's32[1]{0}', space=sflag, size = 0x4, scoped, tag = 'scoped memory for tpu_custom_call.1']
    #allocation10 [shape = 'u8[1024]{0}', space=vmem, size = 0x400, scoped, tag = 'input window, operand 8, single buffered']
    #allocation11 [shape = 'u8[1024]{0}', space=vmem, size = 0x400, scoped, tag = 'input window, operand 9, single buffered']
    #allocation12 [shape = 's32[1]{0}', space=sflag, size = 0x4, scoped, tag = 'scoped memory for tpu_custom_call.1']
    #allocation13 [shape = 'u8[1024]{0}', space=vmem, size = 0x400, scoped, tag = 'input window, operand 10, single buffered']
    #allocation14 [shape = 'u8[1024]{0}', space=vmem, size = 0x400, scoped, tag = 'input window, operand 12, single buffered']
    #allocation15 [shape = 's32[1]{0}', space=sflag, size = 0x4, scoped, tag = 'scoped memory for tpu_custom_call.1']
    #allocation16 [shape = 'u8[1024]{0}', space=vmem, size = 0x400, scoped, tag = 'input window, operand 14, single buffered']
    #allocation17 [shape = 'u8[512]{0}', space=vmem, size = 0x400, scoped, tag = 'input window, operand 15, single buffered']
    #allocation18 [shape = 's32[1]{0}', space=sflag, size = 0x4, scoped, tag = 'scoped memory for tpu_custom_call.1']
    #allocation19 [shape = 'u8[1024]{0}', space=vmem, size = 0x400, scoped, tag = 'output window, operand 0']
    %24 = vsyncpa [#allocation3], 0
    %25 = vsyncpa [#allocation6], 0
    %26 = vsyncpa [#allocation9], 0
    %27 = vsyncpa [#allocation12], 0
    %28 = vsyncpa [#allocation15], 0
    %29 = vsyncpa [#allocation18], 0
    %30 = vsyncpa [#allocation4], 0
    %s31 = scalar_lea.sflag [#allocation4], 1
    %32 = vsyncpa %s31, 0
    loop: start=0, step=1, limit=4
    $region2: #{tpu_custom_call.1} parent=1 // loop_pre_header
      _
    $region3: #{tpu_custom_call.1} parent=1 // loop_header
      %s34 = sphi 0, %s38
      %p35 = scmp.ge.s32.totalorder %s34, 4
      %s44 = sphi 0, %s46
      %s47 = sphi 0, %s44
      %s48 = sphi 0, %s47
      %s64 = sphi 0, %s48
      %s68 = sphi 0, %s68
      %s70 = sphi 0, %s68
      %s71 = sphi 0, %s70
      %s85 = sphi 0, %s71
      %s89 = sphi 0, %s89
      %s91 = sphi 0, %s89
      %s92 = sphi 0, %s91
      %s106 = sphi 0, %s92
      %s110 = sphi 0, %s110
      %s112 = sphi 0, %s110
      %s113 = sphi 0, %s112
      %s127 = sphi 0, %s113
      %s131 = sphi 0, %s131
      %s133 = sphi 0, %s131
      %s134 = sphi 0, %s133
      %s148 = sphi 0, %s134
      %s152 = sphi 0, %s152
      %s154 = sphi 0, %s152
      %s155 = sphi 0, %s154
      %s169 = sphi 0, %s155
      %s173 = sphi 0, %s173
      %s175 = sphi 0, %s173
      %s176 = sphi 0, %s175
      %s190 = sphi 0, %s176
      %s194 = sphi 0, %s194
      %s196 = sphi 0, %s194
      %s197 = sphi 0, %s196
      %s211 = sphi 0, %s197
      %s215 = sphi 0, %s215
      %s217 = sphi 0, %s215
      %s218 = sphi 0, %s217
      %s232 = sphi 0, %s218
      %s236 = sphi 0, %s236
      %s238 = sphi 0, %s236
      %s239 = sphi 0, %s238
      %s253 = sphi 0, %s239
      %s257 = sphi 0, %s257
      %s259 = sphi 0, %s257
      %s260 = sphi 0, %s259
      %s274 = sphi 0, %s260
      %s278 = sphi 0, %s278
      %s280 = sphi 0, %s278
      %s281 = sphi 0, %s280
      %s295 = sphi 0, %s281
      %s299 = sphi 0, %s299
      %s301 = sphi 0, %s299
      %s302 = sphi 0, %s301
      %s316 = sphi 0, %s302
      %s320 = sphi 0, %s320
      %s322 = sphi 0, %s320
      %s323 = sphi 0, %s322
      %s337 = sphi 0, %s323
      %s341 = sphi 0, %s341
      %s343 = sphi 0, %s341
      %s344 = sphi 0, %s343
      %s358 = sphi 0, %s344
      %s362 = sphi 0, %s362
      %s364 = sphi 0, %s362
      %s365 = sphi 0, %s364
      %s379 = sphi 0, %s365
      %s383 = sphi 0, %s383
      %s385 = sphi 0, %s383
      %s386 = sphi 0, %s385
      %s400 = sphi 0, %s386
      %s404 = sphi 0, %s404
      %s406 = sphi 0, %s404
      %s407 = sphi 0, %s406
      %s421 = sphi 0, %s407
      %s425 = sphi 0, %s425
      %s427 = sphi 0, %s425
      %s428 = sphi 0, %s427
      %s442 = sphi 0, %s428
      %s448 = sphi 0, %s450
      %s451 = sphi 0, %s448
      %s452 = sphi 0, %s451
      %s468 = sphi 0, %s452
    $region4: #{tpu_custom_call.1} parent=1 // loop_header_branch
      %37 = sbr.rel (%p35) target = $region8
    $region5: #{tpu_custom_call.1} parent=1 // loop_body
      %s39 = ssub.s32 %s34, 1
      %s40 = ssub.s32 %s34, 2
      %s41 = sadd.s32 %s34, 1
      %s42 = ssub.s32 %s34, %s41
      %p43 = scmp.eq.s32.totalorder %s42, 0
      %s45 = sadd.s32 %s44, 1
      %s46 = scalar_select %p43, %s44, %s45
      %p49 = pneg %p43
      %p50 = scmp.eq.s32.totalorder %s34, 1
      %p51 = por %p49, %p50
      %p52 = scmp.ne.s32.totalorder %s44, %s47
      %p53 = scmp.eq.s32.totalorder %s34, 0
      %p54 = por %p52, %p53
      %p55 = scmp.ne.s32.totalorder %s44, %s47
      %p56 = scmp.eq.s32.totalorder %s39, 1
      %p57 = por %p55, %p56
      %p58 = scmp.ne.s32.totalorder %s47, %s48
      %p59 = scmp.eq.s32.totalorder %s39, 0
      %p60 = por %p58, %p59
      %p61 = scmp.ne.s32.totalorder %s47, %s48
      %p62 = scmp.eq.s32.totalorder %s40, 1
      %p63 = por %p61, %p62
      %p65 = scmp.ne.s32.totalorder %s48, %s64
      %p66 = scmp.eq.s32.totalorder %s40, 0
      %p67 = por %p65, %p66
      %s69 = sadd.s32 %s68, 1
      %p72 = scmp.eq.s32.totalorder %s34, 1
      %p73 = scmp.ne.s32.totalorder %s68, %s70
      %p74 = scmp.eq.s32.totalorder %s34, 0
      %p75 = por %p73, %p74
      %p76 = scmp.ne.s32.totalorder %s68, %s70
      %p77 = scmp.eq.s32.totalorder %s39, 1
      %p78 = por %p76, %p77
      %p79 = scmp.ne.s32.totalorder %s70, %s71
      %p80 = scmp.eq.s32.totalorder %s39, 0
      %p81 = por %p79, %p80
      %p82 = scmp.ne.s32.totalorder %s70, %s71
      %p83 = scmp.eq.s32.totalorder %s40, 1
      %p84 = por %p82, %p83
      %p86 = scmp.ne.s32.totalorder %s71, %s85
      %p87 = scmp.eq.s32.totalorder %s40, 0
      %p88 = por %p86, %p87
      %s90 = sadd.s32 %s89, 1
      %p93 = scmp.eq.s32.totalorder %s34, 1
      %p94 = scmp.ne.s32.totalorder %s89, %s91
      %p95 = scmp.eq.s32.totalorder %s34, 0
      %p96 = por %p94, %p95
      %p97 = scmp.ne.s32.totalorder %s89, %s91
      %p98 = scmp.eq.s32.totalorder %s39, 1
      %p99 = por %p97, %p98
      %p100 = scmp.ne.s32.totalorder %s91, %s92
      %p101 = scmp.eq.s32.totalorder %s39, 0
      %p102 = por %p100, %p101
      %p103 = scmp.ne.s32.totalorder %s91, %s92
      %p104 = scmp.eq.s32.totalorder %s40, 1
      %p105 = por %p103, %p104
      %p107 = scmp.ne.s32.totalorder %s92, %s106
      %p108 = scmp.eq.s32.totalorder %s40, 0
      %p109 = por %p107, %p108
      %s111 = sadd.s32 %s110, 1
      %p114 = scmp.eq.s32.totalorder %s34, 1
      %p115 = scmp.ne.s32.totalorder %s110, %s112
      %p116 = scmp.eq.s32.totalorder %s34, 0
      %p117 = por %p115, %p116
      %p118 = scmp.ne.s32.totalorder %s110, %s112
      %p119 = scmp.eq.s32.totalorder %s39, 1
      %p120 = por %p118, %p119
      %p121 = scmp.ne.s32.totalorder %s112, %s113
      %p122 = scmp.eq.s32.totalorder %s39, 0
      %p123 = por %p121, %p122
      %p124 = scmp.ne.s32.totalorder %s112, %s113
      %p125 = scmp.eq.s32.totalorder %s40, 1
      %p126 = por %p124, %p125
      %p128 = scmp.ne.s32.totalorder %s113, %s127
      %p129 = scmp.eq.s32.totalorder %s40, 0
      %p130 = por %p128, %p129
      %s132 = sadd.s32 %s131, 1
      %p135 = scmp.eq.s32.totalorder %s34, 1
      %p136 = scmp.ne.s32.totalorder %s131, %s133
      %p137 = scmp.eq.s32.totalorder %s34, 0
      %p138 = por %p136, %p137
      %p139 = scmp.ne.s32.totalorder %s131, %s133
      %p140 = scmp.eq.s32.totalorder %s39, 1
      %p141 = por %p139, %p140
      %p142 = scmp.ne.s32.totalorder %s133, %s134
      %p143 = scmp.eq.s32.totalorder %s39, 0
      %p144 = por %p142, %p143
      %p145 = scmp.ne.s32.totalorder %s133, %s134
      %p146 = scmp.eq.s32.totalorder %s40, 1
      %p147 = por %p145, %p146
      %p149 = scmp.ne.s32.totalorder %s134, %s148
      %p150 = scmp.eq.s32.totalorder %s40, 0
      %p151 = por %p149, %p150
      %s153 = sadd.s32 %s152, 1
      %p156 = scmp.eq.s32.totalorder %s34, 1
      %p157 = scmp.ne.s32.totalorder %s152, %s154
      %p158 = scmp.eq.s32.totalorder %s34, 0
      %p159 = por %p157, %p158
      %p160 = scmp.ne.s32.totalorder %s152, %s154
      %p161 = scmp.eq.s32.totalorder %s39, 1
      %p162 = por %p160, %p161
      %p163 = scmp.ne.s32.totalorder %s154, %s155
      %p164 = scmp.eq.s32.totalorder %s39, 0
      %p165 = por %p163, %p164
      %p166 = scmp.ne.s32.totalorder %s154, %s155
      %p167 = scmp.eq.s32.totalorder %s40, 1
      %p168 = por %p166, %p167
      %p170 = scmp.ne.s32.totalorder %s155, %s169
      %p171 = scmp.eq.s32.totalorder %s40, 0
      %p172 = por %p170, %p171
      %s174 = sadd.s32 %s173, 1
      %p177 = scmp.eq.s32.totalorder %s34, 1
      %p178 = scmp.ne.s32.totalorder %s173, %s175
      %p179 = scmp.eq.s32.totalorder %s34, 0
      %p180 = por %p178, %p179
      %p181 = scmp.ne.s32.totalorder %s173, %s175
      %p182 = scmp.eq.s32.totalorder %s39, 1
      %p183 = por %p181, %p182
      %p184 = scmp.ne.s32.totalorder %s175, %s176
      %p185 = scmp.eq.s32.totalorder %s39, 0
      %p186 = por %p184, %p185
      %p187 = scmp.ne.s32.totalorder %s175, %s176
      %p188 = scmp.eq.s32.totalorder %s40, 1
      %p189 = por %p187, %p188
      %p191 = scmp.ne.s32.totalorder %s176, %s190
      %p192 = scmp.eq.s32.totalorder %s40, 0
      %p193 = por %p191, %p192
      %s195 = sadd.s32 %s194, 1
      %p198 = scmp.eq.s32.totalorder %s34, 1
      %p199 = scmp.ne.s32.totalorder %s194, %s196
      %p200 = scmp.eq.s32.totalorder %s34, 0
      %p201 = por %p199, %p200
      %p202 = scmp.ne.s32.totalorder %s194, %s196
      %p203 = scmp.eq.s32.totalorder %s39, 1
      %p204 = por %p202, %p203
      %p205 = scmp.ne.s32.totalorder %s196, %s197
      %p206 = scmp.eq.s32.totalorder %s39, 0
      %p207 = por %p205, %p206
      %p208 = scmp.ne.s32.totalorder %s196, %s197
      %p209 = scmp.eq.s32.totalorder %s40, 1
      %p210 = por %p208, %p209
      %p212 = scmp.ne.s32.totalorder %s197, %s211
      %p213 = scmp.eq.s32.totalorder %s40, 0
      %p214 = por %p212, %p213
      %s216 = sadd.s32 %s215, 1
      %p219 = scmp.eq.s32.totalorder %s34, 1
      %p220 = scmp.ne.s32.totalorder %s215, %s217
      %p221 = scmp.eq.s32.totalorder %s34, 0
      %p222 = por %p220, %p221
      %p223 = scmp.ne.s32.totalorder %s215, %s217
      %p224 = scmp.eq.s32.totalorder %s39, 1
      %p225 = por %p223, %p224
      %p226 = scmp.ne.s32.totalorder %s217, %s218
      %p227 = scmp.eq.s32.totalorder %s39, 0
      %p228 = por %p226, %p227
      %p229 = scmp.ne.s32.totalorder %s217, %s218
      %p230 = scmp.eq.s32.totalorder %s40, 1
      %p231 = por %p229, %p230
      %p233 = scmp.ne.s32.totalorder %s218, %s232
      %p234 = scmp.eq.s32.totalorder %s40, 0
      %p235 = por %p233, %p234
      %s237 = sadd.s32 %s236, 1
      %p240 = scmp.eq.s32.totalorder %s34, 1
      %p241 = scmp.ne.s32.totalorder %s236, %s238
      %p242 = scmp.eq.s32.totalorder %s34, 0
      %p243 = por %p241, %p242
      %p244 = scmp.ne.s32.totalorder %s236, %s238
      %p245 = scmp.eq.s32.totalorder %s39, 1
      %p246 = por %p244, %p245
      %p247 = scmp.ne.s32.totalorder %s238, %s239
      %p248 = scmp.eq.s32.totalorder %s39, 0
      %p249 = por %p247, %p248
      %p250 = scmp.ne.s32.totalorder %s238, %s239
      %p251 = scmp.eq.s32.totalorder %s40, 1
      %p252 = por %p250, %p251
      %p254 = scmp.ne.s32.totalorder %s239, %s253
      %p255 = scmp.eq.s32.totalorder %s40, 0
      %p256 = por %p254, %p255
      %s258 = sadd.s32 %s257, 1
      %p261 = scmp.eq.s32.totalorder %s34, 1
      %p262 = scmp.ne.s32.totalorder %s257, %s259
      %p263 = scmp.eq.s32.totalorder %s34, 0
      %p264 = por %p262, %p263
      %p265 = scmp.ne.s32.totalorder %s257, %s259
      %p266 = scmp.eq.s32.totalorder %s39, 1
      %p267 = por %p265, %p266
      %p268 = scmp.ne.s32.totalorder %s259, %s260
      %p269 = scmp.eq.s32.totalorder %s39, 0
      %p270 = por %p268, %p269
      %p271 = scmp.ne.s32.totalorder %s259, %s260
      %p272 = scmp.eq.s32.totalorder %s40, 1
      %p273 = por %p271, %p272
      %p275 = scmp.ne.s32.totalorder %s260, %s274
      %p276 = scmp.eq.s32.totalorder %s40, 0
      %p277 = por %p275, %p276
      %s279 = sadd.s32 %s278, 1
      %p282 = scmp.eq.s32.totalorder %s34, 1
      %p283 = scmp.ne.s32.totalorder %s278, %s280
      %p284 = scmp.eq.s32.totalorder %s34, 0
      %p285 = por %p283, %p284
      %p286 = scmp.ne.s32.totalorder %s278, %s280
      %p287 = scmp.eq.s32.totalorder %s39, 1
      %p288 = por %p286, %p287
      %p289 = scmp.ne.s32.totalorder %s280, %s281
      %p290 = scmp.eq.s32.totalorder %s39, 0
      %p291 = por %p289, %p290
      %p292 = scmp.ne.s32.totalorder %s280, %s281
      %p293 = scmp.eq.s32.totalorder %s40, 1
      %p294 = por %p292, %p293
      %p296 = scmp.ne.s32.totalorder %s281, %s295
      %p297 = scmp.eq.s32.totalorder %s40, 0
      %p298 = por %p296, %p297
      %s300 = sadd.s32 %s299, 1
      %p303 = scmp.eq.s32.totalorder %s34, 1
      %p304 = scmp.ne.s32.totalorder %s299, %s301
      %p305 = scmp.eq.s32.totalorder %s34, 0
      %p306 = por %p304, %p305
      %p307 = scmp.ne.s32.totalorder %s299, %s301
      %p308 = scmp.eq.s32.totalorder %s39, 1
      %p309 = por %p307, %p308
      %p310 = scmp.ne.s32.totalorder %s301, %s302
      %p311 = scmp.eq.s32.totalorder %s39, 0
      %p312 = por %p310, %p311
      %p313 = scmp.ne.s32.totalorder %s301, %s302
      %p314 = scmp.eq.s32.totalorder %s40, 1
      %p315 = por %p313, %p314
      %p317 = scmp.ne.s32.totalorder %s302, %s316
      %p318 = scmp.eq.s32.totalorder %s40, 0
      %p319 = por %p317, %p318
      %s321 = sadd.s32 %s320, 1
      %p324 = scmp.eq.s32.totalorder %s34, 1
      %p325 = scmp.ne.s32.totalorder %s320, %s322
      %p326 = scmp.eq.s32.totalorder %s34, 0
      %p327 = por %p325, %p326
      %p328 = scmp.ne.s32.totalorder %s320, %s322
      %p329 = scmp.eq.s32.totalorder %s39, 1
      %p330 = por %p328, %p329
      %p331 = scmp.ne.s32.totalorder %s322, %s323
      %p332 = scmp.eq.s32.totalorder %s39, 0
      %p333 = por %p331, %p332
      %p334 = scmp.ne.s32.totalorder %s322, %s323
      %p335 = scmp.eq.s32.totalorder %s40, 1
      %p336 = por %p334, %p335
      %p338 = scmp.ne.s32.totalorder %s323, %s337
      %p339 = scmp.eq.s32.totalorder %s40, 0
      %p340 = por %p338, %p339
      %s342 = sadd.s32 %s341, 1
      %p345 = scmp.eq.s32.totalorder %s34, 1
      %p346 = scmp.ne.s32.totalorder %s341, %s343
      %p347 = scmp.eq.s32.totalorder %s34, 0
      %p348 = por %p346, %p347
      %p349 = scmp.ne.s32.totalorder %s341, %s343
      %p350 = scmp.eq.s32.totalorder %s39, 1
      %p351 = por %p349, %p350
      %p352 = scmp.ne.s32.totalorder %s343, %s344
      %p353 = scmp.eq.s32.totalorder %s39, 0
      %p354 = por %p352, %p353
      %p355 = scmp.ne.s32.totalorder %s343, %s344
      %p356 = scmp.eq.s32.totalorder %s40, 1
      %p357 = por %p355, %p356
      %p359 = scmp.ne.s32.totalorder %s344, %s358
      %p360 = scmp.eq.s32.totalorder %s40, 0
      %p361 = por %p359, %p360
      %s363 = sadd.s32 %s362, 1
      %p366 = scmp.eq.s32.totalorder %s34, 1
      %p367 = scmp.ne.s32.totalorder %s362, %s364
      %p368 = scmp.eq.s32.totalorder %s34, 0
      %p369 = por %p367, %p368
      %p370 = scmp.ne.s32.totalorder %s362, %s364
      %p371 = scmp.eq.s32.totalorder %s39, 1
      %p372 = por %p370, %p371
      %p373 = scmp.ne.s32.totalorder %s364, %s365
      %p374 = scmp.eq.s32.totalorder %s39, 0
      %p375 = por %p373, %p374
      %p376 = scmp.ne.s32.totalorder %s364, %s365
      %p377 = scmp.eq.s32.totalorder %s40, 1
      %p378 = por %p376, %p377
      %p380 = scmp.ne.s32.totalorder %s365, %s379
      %p381 = scmp.eq.s32.totalorder %s40, 0
      %p382 = por %p380, %p381
      %s384 = sadd.s32 %s383, 1
      %p387 = scmp.eq.s32.totalorder %s34, 1
      %p388 = scmp.ne.s32.totalorder %s383, %s385
      %p389 = scmp.eq.s32.totalorder %s34, 0
      %p390 = por %p388, %p389
      %p391 = scmp.ne.s32.totalorder %s383, %s385
      %p392 = scmp.eq.s32.totalorder %s39, 1
      %p393 = por %p391, %p392
      %p394 = scmp.ne.s32.totalorder %s385, %s386
      %p395 = scmp.eq.s32.totalorder %s39, 0
      %p396 = por %p394, %p395
      %p397 = scmp.ne.s32.totalorder %s385, %s386
      %p398 = scmp.eq.s32.totalorder %s40, 1
      %p399 = por %p397, %p398
      %p401 = scmp.ne.s32.totalorder %s386, %s400
      %p402 = scmp.eq.s32.totalorder %s40, 0
      %p403 = por %p401, %p402
      %s405 = sadd.s32 %s404, 1
      %p408 = scmp.eq.s32.totalorder %s34, 1
      %p409 = scmp.ne.s32.totalorder %s404, %s406
      %p410 = scmp.eq.s32.totalorder %s34, 0
      %p411 = por %p409, %p410
      %p412 = scmp.ne.s32.totalorder %s404, %s406
      %p413 = scmp.eq.s32.totalorder %s39, 1
      %p414 = por %p412, %p413
      %p415 = scmp.ne.s32.totalorder %s406, %s407
      %p416 = scmp.eq.s32.totalorder %s39, 0
      %p417 = por %p415, %p416
      %p418 = scmp.ne.s32.totalorder %s406, %s407
      %p419 = scmp.eq.s32.totalorder %s40, 1
      %p420 = por %p418, %p419
      %p422 = scmp.ne.s32.totalorder %s407, %s421
      %p423 = scmp.eq.s32.totalorder %s40, 0
      %p424 = por %p422, %p423
      %s426 = sadd.s32 %s425, 1
      %p429 = scmp.eq.s32.totalorder %s34, 1
      %p430 = scmp.ne.s32.totalorder %s425, %s427
      %p431 = scmp.eq.s32.totalorder %s34, 0
      %p432 = por %p430, %p431
      %p433 = scmp.ne.s32.totalorder %s425, %s427
      %p434 = scmp.eq.s32.totalorder %s39, 1
      %p435 = por %p433, %p434
      %p436 = scmp.ne.s32.totalorder %s427, %s428
      %p437 = scmp.eq.s32.totalorder %s39, 0
      %p438 = por %p436, %p437
      %p439 = scmp.ne.s32.totalorder %s427, %s428
      %p440 = scmp.eq.s32.totalorder %s40, 1
      %p441 = por %p439, %p440
      %p443 = scmp.ne.s32.totalorder %s428, %s442
      %p444 = scmp.eq.s32.totalorder %s40, 0
      %p445 = por %p443, %p444
      %s446 = ssub.s32 %s34, %s41
      %p447 = scmp.eq.s32.totalorder %s446, 0
      %s449 = sadd.s32 %s448, 1
      %s450 = scalar_select %p447, %s448, %s449
      %p453 = pneg %p447
      %p454 = scmp.eq.s32.totalorder %s34, 1
      %p455 = por %p453, %p454
      %p456 = scmp.ne.s32.totalorder %s448, %s451
      %p457 = scmp.eq.s32.totalorder %s34, 0
      %p458 = por %p456, %p457
      %p459 = scmp.ne.s32.totalorder %s448, %s451
      %p460 = scmp.eq.s32.totalorder %s39, 1
      %p461 = por %p459, %p460
      %p462 = scmp.ne.s32.totalorder %s451, %s452
      %p463 = scmp.eq.s32.totalorder %s39, 0
      %p464 = por %p462, %p463
      %p465 = scmp.ne.s32.totalorder %s451, %s452
      %p466 = scmp.eq.s32.totalorder %s40, 1
      %p467 = por %p465, %p466
      %p469 = scmp.ne.s32.totalorder %s452, %s468
      %p470 = scmp.eq.s32.totalorder %s40, 0
      %p471 = por %p469, %p470
      %p472 = scmp.le.s32.totalorder 1, %s34
      %p473 = scmp.lt.s32.totalorder %s34, 3
      %p474 = pnand %p472, %p473
      %p475 = pneg %p474
      // Predicated region
      $region9: #{tpu_custom_call.1} parent=5 // pred_check
        _
      $region10: #{tpu_custom_call.1} parent=5 // pred_check_branch
        %477 = sbr.rel (%p474) target = $region12
      $region11: #{tpu_custom_call.1} parent=5 // pred_region
        %s478 = ssub.s32 %s34, 1
        // Predicated region
        $region13: #{tpu_custom_call.1} parent=11 // pred_check
          %p479 = pneg %p81
        $region14: #{tpu_custom_call.1} parent=11 // pred_check_branch
          %481 = sbr.rel (%p479) target = $region16
        $region15: #{tpu_custom_call.1} parent=11 // pred_region
          %s483 = ssub.s32 384, 384
          %484 = vsyncadd [#allocation3], %s483
          %s485 = sshll.u32 [#allocation2], 4
          %s486 = int_to_ptr.vmem [resolvable:$true] %s485
          %491 = dma.hbm_to_vmem [thread:$0]  %s1, 384, %s486, [#allocation3], 128, 128, 8
        $region16: #{tpu_custom_call.1} parent=11 // pred_fallthru
          _
        // Predicated region
        $region17: #{tpu_custom_call.1} parent=11 // pred_check
          %p492 = pneg %p102
        $region18: #{tpu_custom_call.1} parent=11 // pred_check_branch
          %494 = sbr.rel (%p492) target = $region20
        $region19: #{tpu_custom_call.1} parent=11 // pred_region
          %s496 = ssub.s32 384, 384
          %497 = vsyncadd [#allocation6], %s496
          %s498 = sshll.u32 [#allocation5], 4
          %s499 = int_to_ptr.vmem [resolvable:$true] %s498
          %504 = dma.hbm_to_vmem [thread:$0]  %s2, 384, %s499, [#allocation6], 128, 128, 8
        $region20: #{tpu_custom_call.1} parent=11 // pred_fallthru
          _
        // Predicated region
        $region21: #{tpu_custom_call.1} parent=11 // pred_check
          %p505 = pneg %p123
        $region22: #{tpu_custom_call.1} parent=11 // pred_check_branch
          %507 = sbr.rel (%p505) target = $region24
        $region23: #{tpu_custom_call.1} parent=11 // pred_region
          _
        $region24: #{tpu_custom_call.1} parent=11 // pred_fallthru
          _
        // Predicated region
        $region25: #{tpu_custom_call.1} parent=11 // pred_check
          %p508 = pneg %p144
        $region26: #{tpu_custom_call.1} parent=11 // pred_check_branch
          %510 = sbr.rel (%p508) target = $region28
        $region27: #{tpu_custom_call.1} parent=11 // pred_region
          %s512 = ssub.s32 32, 32
          %513 = vsyncadd [#allocation6], %s512
          %s514 = sshll.u32 [#allocation7], 4
          %s515 = int_to_ptr.vmem [resolvable:$true] %s514
          %520 = dma.hbm_to_vmem [thread:$0]  %s4, 32, %s515, [#allocation6], 16, 16, 1
        $region28: #{tpu_custom_call.1} parent=11 // pred_fallthru
          _
        // Predicated region
        $region29: #{tpu_custom_call.1} parent=11 // pred_check
          %p521 = pneg %p165
        $region30: #{tpu_custom_call.1} parent=11 // pred_check_branch
          %523 = sbr.rel (%p521) target = $region32
        $region31: #{tpu_custom_call.1} parent=11 // pred_region
          %s525 = ssub.s32 32, 32
          %526 = vsyncadd [#allocation9], %s525
          %s527 = sshll.u32 [#allocation8], 4
          %s528 = int_to_ptr.vmem [resolvable:$true] %s527
          %533 = dma.hbm_to_vmem [thread:$0]  %s5, 32, %s528, [#allocation9], 16, 16, 1
        $region32: #{tpu_custom_call.1} parent=11 // pred_fallthru
          _
        // Predicated region
        $region33: #{tpu_custom_call.1} parent=11 // pred_check
          %p534 = pneg %p186
        $region34: #{tpu_custom_call.1} parent=11 // pred_check_branch
          %536 = sbr.rel (%p534) target = $region36
        $region35: #{tpu_custom_call.1} parent=11 // pred_region
          _
        $region36: #{tpu_custom_call.1} parent=11 // pred_fallthru
          _
        // Predicated region
        $region37: #{tpu_custom_call.1} parent=11 // pred_check
          %p537 = pneg %p207
        $region38: #{tpu_custom_call.1} parent=11 // pred_check_branch
          %539 = sbr.rel (%p537) target = $region40
        $region39: #{tpu_custom_call.1} parent=11 // pred_region
          _
        $region40: #{tpu_custom_call.1} parent=11 // pred_fallthru
          _
        // Predicated region
        $region41: #{tpu_custom_call.1} parent=11 // pred_check
          %p540 = pneg %p228
        $region42: #{tpu_custom_call.1} parent=11 // pred_check_branch
          %542 = sbr.rel (%p540) target = $region44
        $region43: #{tpu_custom_call.1} parent=11 // pred_region
          %s544 = ssub.s32 32, 32
          %545 = vsyncadd [#allocation9], %s544
          %s546 = sshll.u32 [#allocation10], 4
          %s547 = int_to_ptr.vmem [resolvable:$true] %s546
          %552 = dma.hbm_to_vmem [thread:$0]  %s8, 32, %s547, [#allocation9], 16, 16, 1
        $region44: #{tpu_custom_call.1} parent=11 // pred_fallthru
          _
        // Predicated region
        $region45: #{tpu_custom_call.1} parent=11 // pred_check
          %p553 = pneg %p249
        $region46: #{tpu_custom_call.1} parent=11 // pred_check_branch
          %555 = sbr.rel (%p553) target = $region48
        $region47: #{tpu_custom_call.1} parent=11 // pred_region
          %s557 = ssub.s32 32, 32
          %558 = vsyncadd [#allocation12], %s557
          %s559 = sshll.u32 [#allocation11], 4
          %s560 = int_to_ptr.vmem [resolvable:$true] %s559
          %565 = dma.hbm_to_vmem [thread:$0]  %s9, 32, %s560, [#allocation12], 16, 16, 1
        $region48: #{tpu_custom_call.1} parent=11 // pred_fallthru
          _
        // Predicated region
        $region49: #{tpu_custom_call.1} parent=11 // pred_check
          %p566 = pneg %p270
        $region50: #{tpu_custom_call.1} parent=11 // pred_check_branch
          %568 = sbr.rel (%p566) target = $region52
        $region51: #{tpu_custom_call.1} parent=11 // pred_region
          %s570 = ssub.s32 32, 32
          %571 = vsyncadd [#allocation12], %s570
          %s572 = sshll.u32 [#allocation13], 4
          %s573 = int_to_ptr.vmem [resolvable:$true] %s572
          %578 = dma.hbm_to_vmem [thread:$0]  %s10, 32, %s573, [#allocation12], 16, 16, 1
        $region52: #{tpu_custom_call.1} parent=11 // pred_fallthru
          _
        // Predicated region
        $region53: #{tpu_custom_call.1} parent=11 // pred_check
          %p579 = pneg %p291
        $region54: #{tpu_custom_call.1} parent=11 // pred_check_branch
          %581 = sbr.rel (%p579) target = $region56
        $region55: #{tpu_custom_call.1} parent=11 // pred_region
          _
        $region56: #{tpu_custom_call.1} parent=11 // pred_fallthru
          _
        // Predicated region
        $region57: #{tpu_custom_call.1} parent=11 // pred_check
          %p582 = pneg %p312
        $region58: #{tpu_custom_call.1} parent=11 // pred_check_branch
          %584 = sbr.rel (%p582) target = $region60
        $region59: #{tpu_custom_call.1} parent=11 // pred_region
          %s586 = ssub.s32 32, 32
          %587 = vsyncadd [#allocation15], %s586
          %s588 = sshll.u32 [#allocation14], 4
          %s589 = int_to_ptr.vmem [resolvable:$true] %s588
          %594 = dma.hbm_to_vmem [thread:$0]  %s12, 32, %s589, [#allocation15], 16, 16, 1
        $region60: #{tpu_custom_call.1} parent=11 // pred_fallthru
          _
        // Predicated region
        $region61: #{tpu_custom_call.1} parent=11 // pred_check
          %p595 = pneg %p333
        $region62: #{tpu_custom_call.1} parent=11 // pred_check_branch
          %597 = sbr.rel (%p595) target = $region64
        $region63: #{tpu_custom_call.1} parent=11 // pred_region
          _
        $region64: #{tpu_custom_call.1} parent=11 // pred_fallthru
          _
        // Predicated region
        $region65: #{tpu_custom_call.1} parent=11 // pred_check
          %p598 = pneg %p354
        $region66: #{tpu_custom_call.1} parent=11 // pred_check_branch
          %600 = sbr.rel (%p598) target = $region68
        $region67: #{tpu_custom_call.1} parent=11 // pred_region
          %s602 = ssub.s32 32, 32
          %603 = vsyncadd [#allocation15], %s602
          %s604 = sshll.u32 [#allocation16], 4
          %s605 = int_to_ptr.vmem [resolvable:$true] %s604
          %610 = dma.hbm_to_vmem [thread:$0]  %s14, 32, %s605, [#allocation15], 16, 16, 1
        $region68: #{tpu_custom_call.1} parent=11 // pred_fallthru
          _
        // Predicated region
        $region69: #{tpu_custom_call.1} parent=11 // pred_check
          %p611 = pneg %p375
        $region70: #{tpu_custom_call.1} parent=11 // pred_check_branch
          %613 = sbr.rel (%p611) target = $region72
        $region71: #{tpu_custom_call.1} parent=11 // pred_region
          %s615 = ssub.s32 16, 16
          %616 = vsyncadd [#allocation18], %s615
          %s618 = sshll.u32 [#allocation17], 4
          %s619 = int_to_ptr.vmem [resolvable:$true] %s618
          %621 = dma.hbm_to_vmem [thread:$0]  %s15, 16, %s619, [#allocation18]
        $region72: #{tpu_custom_call.1} parent=11 // pred_fallthru
          _
        // Predicated region
        $region73: #{tpu_custom_call.1} parent=11 // pred_check
          %p622 = pneg %p396
        $region74: #{tpu_custom_call.1} parent=11 // pred_check_branch
          %624 = sbr.rel (%p622) target = $region76
        $region75: #{tpu_custom_call.1} parent=11 // pred_region
          _
        $region76: #{tpu_custom_call.1} parent=11 // pred_fallthru
          _
        // Predicated region
        $region77: #{tpu_custom_call.1} parent=11 // pred_check
          %p625 = pneg %p417
        $region78: #{tpu_custom_call.1} parent=11 // pred_check_branch
          %627 = sbr.rel (%p625) target = $region80
        $region79: #{tpu_custom_call.1} parent=11 // pred_region
          _
        $region80: #{tpu_custom_call.1} parent=11 // pred_fallthru
          _
        // Predicated region
        $region81: #{tpu_custom_call.1} parent=11 // pred_check
          %p628 = pneg %p438
        $region82: #{tpu_custom_call.1} parent=11 // pred_check_branch
          %630 = sbr.rel (%p628) target = $region84
        $region83: #{tpu_custom_call.1} parent=11 // pred_region
          _
        $region84: #{tpu_custom_call.1} parent=11 // pred_fallthru
          _
      $region12: #{tpu_custom_call.1} parent=5 // pred_fallthru
        _
      %p631 = scmp.lt.s32.totalorder %s34, 2
      // Predicated region
      $region85: #{tpu_custom_call.1} parent=5 // pred_check
        %p632 = pneg %p631
      $region86: #{tpu_custom_call.1} parent=5 // pred_check_branch
        %634 = sbr.rel (%p632) target = $region88
      $region87: #{tpu_custom_call.1} parent=5 // pred_region
        // Predicated region
        $region89: #{tpu_custom_call.1} parent=87 // pred_check
          %p635 = pneg %p54
        $region90: #{tpu_custom_call.1} parent=87 // pred_check_branch
          %637 = sbr.rel (%p635) target = $region92
        $region91: #{tpu_custom_call.1} parent=87 // pred_region
          %p638 = scmp.lt.s32.totalorder %s34, 1
          %s639 = scalar_select %p638, %s34, 1
          %s640 = smul.addr %s639, 3
          %s641 = smul.addr %s640, 8
          %s642 = scalar_lea.vmem %s0, %s641
        $region92: #{tpu_custom_call.1} parent=87 // pred_fallthru
          _
      $region88: #{tpu_custom_call.1} parent=5 // pred_fallthru
        _
      %p643 = scmp.le.s32.totalorder 1, %s34
      %p644 = scmp.lt.s32.totalorder %s34, 3
      %p645 = pnand %p643, %p644
      %p646 = pneg %p645
      // Predicated region
      $region93: #{tpu_custom_call.1} parent=5 // pred_check
        _
      $region94: #{tpu_custom_call.1} parent=5 // pred_check_branch
        %648 = sbr.rel (%p645) target = $region96
      $region95: #{tpu_custom_call.1} parent=5 // pred_region
        %s649 = ssub.s32 %s34, 1
        // Predicated region
        $region97: #{tpu_custom_call.1} parent=95 // pred_check
          %p650 = pneg %p81
        $region98: #{tpu_custom_call.1} parent=95 // pred_check_branch
          %652 = sbr.rel (%p650) target = $region100
        $region99: #{tpu_custom_call.1} parent=95 // pred_region
          %653 = dma.done [#allocation3], 384
        $region100: #{tpu_custom_call.1} parent=95 // pred_fallthru
          _
        // Predicated region
        $region101: #{tpu_custom_call.1} parent=95 // pred_check
          %p654 = pneg %p102
        $region102: #{tpu_custom_call.1} parent=95 // pred_check_branch
          %656 = sbr.rel (%p654) target = $region104
        $region103: #{tpu_custom_call.1} parent=95 // pred_region
          %657 = dma.done [#allocation6], 384
        $region104: #{tpu_custom_call.1} parent=95 // pred_fallthru
          _
        // Predicated region
        $region105: #{tpu_custom_call.1} parent=95 // pred_check
          %p658 = pneg %p144
        $region106: #{tpu_custom_call.1} parent=95 // pred_check_branch
          %660 = sbr.rel (%p658) target = $region108
        $region107: #{tpu_custom_call.1} parent=95 // pred_region
          %661 = dma.done [#allocation6], 32
        $region108: #{tpu_custom_call.1} parent=95 // pred_fallthru
          _
        // Predicated region
        $region109: #{tpu_custom_call.1} parent=95 // pred_check
          %p662 = pneg %p165
        $region110: #{tpu_custom_call.1} parent=95 // pred_check_branch
          %664 = sbr.rel (%p662) target = $region112
        $region111: #{tpu_custom_call.1} parent=95 // pred_region
          %665 = dma.done [#allocation9], 32
        $region112: #{tpu_custom_call.1} parent=95 // pred_fallthru
          _
        // Predicated region
        $region113: #{tpu_custom_call.1} parent=95 // pred_check
          %p666 = pneg %p228
        $region114: #{tpu_custom_call.1} parent=95 // pred_check_branch
          %668 = sbr.rel (%p666) target = $region116
        $region115: #{tpu_custom_call.1} parent=95 // pred_region
          %669 = dma.done [#allocation9], 32
        $region116: #{tpu_custom_call.1} parent=95 // pred_fallthru
          _
        // Predicated region
        $region117: #{tpu_custom_call.1} parent=95 // pred_check
          %p670 = pneg %p249
        $region118: #{tpu_custom_call.1} parent=95 // pred_check_branch
          %672 = sbr.rel (%p670) target = $region120
        $region119: #{tpu_custom_call.1} parent=95 // pred_region
          %673 = dma.done [#allocation12], 32
        $region120: #{tpu_custom_call.1} parent=95 // pred_fallthru
          _
        // Predicated region
        $region121: #{tpu_custom_call.1} parent=95 // pred_check
          %p674 = pneg %p270
        $region122: #{tpu_custom_call.1} parent=95 // pred_check_branch
          %676 = sbr.rel (%p674) target = $region124
        $region123: #{tpu_custom_call.1} parent=95 // pred_region
          %677 = dma.done [#allocation12], 32
        $region124: #{tpu_custom_call.1} parent=95 // pred_fallthru
          _
        // Predicated region
        $region125: #{tpu_custom_call.1} parent=95 // pred_check
          %p678 = pneg %p312
        $region126: #{tpu_custom_call.1} parent=95 // pred_check_branch
          %680 = sbr.rel (%p678) target = $region128
        $region127: #{tpu_custom_call.1} parent=95 // pred_region
          %681 = dma.done [#allocation15], 32
        $region128: #{tpu_custom_call.1} parent=95 // pred_fallthru
          _
        // Predicated region
        $region129: #{tpu_custom_call.1} parent=95 // pred_check
          %p682 = pneg %p354
        $region130: #{tpu_custom_call.1} parent=95 // pred_check_branch
          %684 = sbr.rel (%p682) target = $region132
        $region131: #{tpu_custom_call.1} parent=95 // pred_region
          %685 = dma.done [#allocation15], 32
        $region132: #{tpu_custom_call.1} parent=95 // pred_fallthru
          _
        // Predicated region
        $region133: #{tpu_custom_call.1} parent=95 // pred_check
          %p686 = pneg %p375
        $region134: #{tpu_custom_call.1} parent=95 // pred_check_branch
          %688 = sbr.rel (%p686) target = $region136
        $region135: #{tpu_custom_call.1} parent=95 // pred_region
          %689 = dma.done [#allocation18], 16
        $region136: #{tpu_custom_call.1} parent=95 // pred_fallthru
          _
        %p690 = scmp.lt.s32.totalorder %s39, 1
        %s691 = scalar_select %p690, %s39, 1
        %s692 = smul.addr %s691, 3
        %s693 = smul.addr %s692, 8
        %s694 = scalar_lea.vmem %s0, %s693
        %p695 = pneg %p60
        %p696 = pneg %p57
        %p697 = pneg %p81
        %p698 = pneg %p78
        %p699 = pneg %p102
        %p700 = pneg %p99
        %p701 = pneg %p123
        %p702 = pneg %p120
        %p703 = pneg %p144
        %p704 = pneg %p141
        %p705 = pneg %p165
        %p706 = pneg %p162
        %p707 = pneg %p186
        %p708 = pneg %p183
        %p709 = pneg %p207
        %p710 = pneg %p204
        %p711 = pneg %p228
        %p712 = pneg %p225
        %p713 = pneg %p249
        %p714 = pneg %p246
        %p715 = pneg %p270
        %p716 = pneg %p267
        %p717 = pneg %p291
        %p718 = pneg %p288
        %p719 = pneg %p312
        %p720 = pneg %p309
        %p721 = pneg %p333
        %p722 = pneg %p330
        %p723 = pneg %p354
        %p724 = pneg %p351
        %p725 = pneg %p375
        %p726 = pneg %p372
        %p727 = pneg %p396
        %p728 = pneg %p393
        %p729 = pneg %p417
        %p730 = pneg %p414
        %p731 = pneg %p438
        %p732 = pneg %p435
        %p733 = pneg %p464
        %p734 = pneg %p461
        %s735 = sand.u32 %s451, 1
        %s736 = scalar_lea.sflag [#allocation4], %s735
        %s737 = sand.u32 %s451, 1
        %s738 = scalar_lea.vmem [#allocation19], %s737
        %p739 = scmp.lt.s32.totalorder %s39, 1
        %s740 = scalar_select %p739, %s39, 1
        %s741 = smul.addr %s740, 3
        %s742 = smul.addr %s741, 8
        %s743 = scalar_lea.vmem %s0, %s742
        %v745 = vld [vmem:[%s743] sm:$0xff]
        %v746 = vld [vmem:[%s743 + $0x8] sm:$0xff]
        %v747 = vld [vmem:[%s743 + $0x10] sm:$0xff]
        %v748 = vpack.c.bf16 %v746, %v745
        %v749 = vpack.c.bf16 %v747, %v747
        %v750 = vld [vmem:[#allocation2] sm:$0xff]
        %v751 = vld [vmem:[#allocation2 + $0x8] sm:$0xff]
        %v752 = vld [vmem:[#allocation2 + $0x10] sm:$0xff]
        %v753 = vld [vmem:[%s3] sm:$0xf]
        %v754 = vld [vmem:[%s3 + $0x4] sm:$0xf]
        %v755 = vld [vmem:[%s3 + $0x8] sm:$0xf]
        %v756 = vld [vmem:[%s3 + $0xc] sm:$0xf]
        %v757 = vld [vmem:[%s3 + $0x10] sm:$0xf]
        %v758 = vld [vmem:[%s3 + $0x14] sm:$0xf]
        %v765 = vunpack.c.l.b16 %v753
        %v766 = vunpack.c.l.b16 %v754
        %v767 = vunpack.c.l.b16 %v755
        %v768 = vunpack.c.l.b16 %v756
        %v769 = vunpack.c.l.b16 %v757
        %v770 = vunpack.c.l.b16 %v758
        %v771 = vpack.c.b16 %v766, %v765
        %v772 = vpack.c.b16 %v768, %v767
        %v773 = vpack.c.b16 %v770, %v769
        %vm777 = vcmask 392192
        %v779 = vsel %vm777, %v748, 0
        %v782 = vsel %vm777, %v749, 0
        %784 = vmatprep.subr.bf16.mxu0 0
        %785 = vmatpush1.bf16.msra.mxu0 %v771
        %786 = vmatprep.subr.bf16.mxu0 0
        %787 = vmatpush1.bf16.msra.mxu0 %v772
        %788 = vmatprep.subr.bf16.mxu0 0
        %789 = vmatpush1.bf16.msra.mxu0 %v773
        %790 = vmatprep.subr.bf16.mxu0 0
        %791 = vmatpush1.bf16.msra.mxu0 0
        %792 = vmatprep.subr.bf16.mxu0 0
        %793 = vmatpush1.bf16.msra.mxu0 0
        %794 = vmatprep.subr.bf16.mxu0 0
        %795 = vmatpush1.bf16.msra.mxu0 0
        %796 = vmatprep.subr.bf16.mxu0 0
        %797 = vmatpush1.bf16.msra.mxu0 0
        %798 = vmatprep.subr.bf16.mxu0 0
        %799 = vmatpush1.bf16.msra.mxu0 0
        %800 = vmatprep.subr.bf16.mxu0 0
        %801 = vmatpush1.bf16.msra.mxu0 0
        %802 = vmatprep.subr.bf16.mxu0 0
        %803 = vmatpush1.bf16.msra.mxu0 0
        %804 = vmatprep.subr.bf16.mxu0 0
        %805 = vmatpush1.bf16.msra.mxu0 0
        %806 = vmatprep.subr.bf16.mxu0 0
        %807 = vmatpush1.bf16.msra.mxu0 0
        %808 = vmatprep.subr.bf16.mxu0 0
        %809 = vmatpush1.bf16.msra.mxu0 0
        %810 = vmatprep.subr.bf16.mxu0 0
        %811 = vmatpush1.bf16.msra.mxu0 0
        %812 = vmatprep.subr.bf16.mxu0 0
        %813 = vmatpush1.bf16.msra.mxu0 0
        %814 = vmatprep.subr.bf16.mxu0 0
        %815 = vmatpush1.bf16.msra.mxu0 0
        %816 = vmatprep.mubr.bf16.mxu0 0
        %817 = vmatmul.mubr.bf16.gmra.mrb[0].mxu0 %v779
        %v818 = vpop.f32.mrb[0].mxu0
        %v819 = vadd.f32 %v750, %v818
        %v820 = vpop.f32.mrb[0].mxu0
        %v821 = vpop.f32.mrb[0].mxu0
        %v822 = vadd.f32 %v751, %v821
        %v823 = vpop.f32.mrb[0].mxu0
        %824 = vmatprep.mubr.bf16.mxu0 0
        %825 = vmatmul.mubr.bf16.gmra.mrb[0].mxu0 %v782
        %v826 = vpop.f32.mrb[0].mxu0
        %v827 = vadd.f32 %v752, %v826
        %v828 = vpop.f32.mrb[0].mxu0
        %v829 = vpop.f32.mrb[0].mxu0
        %v830 = vpop.f32.mrb[0].mxu0
        %831 = vdwg.mxu0
        %v832 = vld [vmem:[#allocation5] sm:$0xff]
        %v833 = vld [vmem:[#allocation5 + $0x8] sm:$0xff]
        %v834 = vld [vmem:[#allocation5 + $0x10] sm:$0xff]
        %v835 = vld [vmem:[#allocation7] sm:$0x1]
        %v836 = vld [vmem:[#allocation8] sm:$0x1]
        %vm837 = vcmask 261120
        %v838 = vsel %vm837, %v819, 0.0
        %839 = vadd.xlane.f32.xlu0 %v838
        %v840 = vpop.xlane.xlu0 %839
        %v841 = vsel %vm837, %v822, 0.0
        %842 = vadd.xlane.f32.xlu0 %v841
        %v843 = vpop.xlane.xlu0 %842
        %v844 = vsel %vm837, %v827, 0.0
        %845 = vadd.xlane.f32.xlu0 %v844
        %v846 = vpop.xlane.xlu0 %845
        %v847 = vrcp.pop 32.0
        %v848 = vmul.f32 %v840, %v847
        %v849 = vmul.f32 %v843, %v847
        %v850 = vmul.f32 %v846, %v847
        %v851 = vsub.f32 %v819, %v848
        %v852 = vsub.f32 %v822, %v849
        %v853 = vsub.f32 %v827, %v850
        %v854 = vmul.f32 %v851, %v851
        %v855 = vmul.f32 %v852, %v852
        %v856 = vmul.f32 %v853, %v853
        %v857 = vsel %vm837, %v854, 0.0
        %858 = vadd.xlane.f32.xlu0 %v857
        %v859 = vpop.xlane.xlu0 %858
        %v860 = vsel %vm837, %v855, 0.0
        %861 = vadd.xlane.f32.xlu0 %v860
        %v862 = vpop.xlane.xlu0 %861
        %v863 = vsel %vm837, %v856, 0.0
        %864 = vadd.xlane.f32.xlu0 %v863
        %v865 = vpop.xlane.xlu0 %864
        %v866 = vmul.f32 %v859, %v847
        %v867 = vmul.f32 %v862, %v847
        %v868 = vmul.f32 %v865, %v847
        %v869 = vadd.f32 %v866, 1e-05
        %v870 = vadd.f32 %v867, 1e-05
        %v871 = vadd.f32 %v868, 1e-05
        %v872 = vrsqrt.pop %v869
        %v873 = vrsqrt.pop %v870
        %v874 = vrsqrt.pop %v871
        %v875 = vmul.f32 %v851, %v872
        %v876 = vmul.f32 %v852, %v873
        %v877 = vmul.f32 %v853, %v874
        %v879 = vlaneseq
        %v880 = vshrl.u32 %v879, 7
        %v881 = vsub.s32 0, %v880
        %v882 = vrot.slane %v835, %v881
        %v884 = vmul.f32 %v875, %v882
        %v885 = vmul.f32 %v876, %v882
        %v886 = vmul.f32 %v877, %v882
        %v888 = vlaneseq
        %v889 = vshrl.u32 %v888, 7
        %v890 = vsub.s32 0, %v889
        %v891 = vrot.slane %v836, %v890
        %v893 = vadd.f32 %v884, %v891
        %v894 = vadd.f32 %v885, %v891
        %v895 = vadd.f32 %v886, %v891
        %v896 = vpack.c.bf16 %v894, %v893
        %v897 = vpack.c.bf16 %v895, %v895
        %v898 = vld [vmem:[%s6] sm:$0xf]
        %v899 = vld [vmem:[%s6 + $0x4] sm:$0xf]
        %v900 = vld [vmem:[%s6 + $0x8] sm:$0xf]
        %v901 = vld [vmem:[%s6 + $0xc] sm:$0xf]
        %v906 = vunpack.c.l.b16 %v898
        %v907 = vunpack.c.l.b16 %v899
        %v908 = vunpack.c.l.b16 %v900
        %v909 = vunpack.c.l.b16 %v901
        %v910 = vpack.c.b16 %v907, %v906
        %v911 = vpack.c.b16 %v909, %v908
        %v915 = vsel %vm837, %v896, 0
        %v918 = vsel %vm837, %v897, 0
        %920 = vmatprep.subr.bf16.mxu0 0
        %921 = vmatpush1.bf16.msra.mxu0 %v910
        %922 = vmatprep.subr.bf16.mxu0 0
        %923 = vmatpush1.bf16.msra.mxu0 %v911
        %924 = vmatprep.subr.bf16.mxu0 0
        %925 = vmatpush1.bf16.msra.mxu0 0
        %926 = vmatprep.subr.bf16.mxu0 0
        %927 = vmatpush1.bf16.msra.mxu0 0
        %928 = vmatprep.subr.bf16.mxu0 0
        %929 = vmatpush1.bf16.msra.mxu0 0
        %930 = vmatprep.subr.bf16.mxu0 0
        %931 = vmatpush1.bf16.msra.mxu0 0
        %932 = vmatprep.subr.bf16.mxu0 0
        %933 = vmatpush1.bf16.msra.mxu0 0
        %934 = vmatprep.subr.bf16.mxu0 0
        %935 = vmatpush1.bf16.msra.mxu0 0
        %936 = vmatprep.subr.bf16.mxu0 0
        %937 = vmatpush1.bf16.msra.mxu0 0
        %938 = vmatprep.subr.bf16.mxu0 0
        %939 = vmatpush1.bf16.msra.mxu0 0
        %940 = vmatprep.subr.bf16.mxu0 0
        %941 = vmatpush1.bf16.msra.mxu0 0
        %942 = vmatprep.subr.bf16.mxu0 0
        %943 = vmatpush1.bf16.msra.mxu0 0
        %944 = vmatprep.subr.bf16.mxu0 0
        %945 = vmatpush1.bf16.msra.mxu0 0
        %946 = vmatprep.subr.bf16.mxu0 0
        %947 = vmatpush1.bf16.msra.mxu0 0
        %948 = vmatprep.subr.bf16.mxu0 0
        %949 = vmatpush1.bf16.msra.mxu0 0
        %950 = vmatprep.subr.bf16.mxu0 0
        %951 = vmatpush1.bf16.msra.mxu0 0
        %952 = vmatprep.mubr.bf16.mxu0 0
        %953 = vmatmul.mubr.bf16.gmra.mrb[0].mxu0 %v915
        %v954 = vpop.f32.mrb[0].mxu0
        %v955 = vadd.f32 0.0, %v954
        %v956 = vpop.f32.mrb[0].mxu0
        %v957 = vpop.f32.mrb[0].mxu0
        %v958 = vadd.f32 0.0, %v957
        %v959 = vpop.f32.mrb[0].mxu0
        %960 = vmatprep.mubr.bf16.mxu0 0
        %961 = vmatmul.mubr.bf16.gmra.mrb[0].mxu0 %v918
        %v962 = vpop.f32.mrb[0].mxu0
        %v963 = vadd.f32 0.0, %v962
        %v964 = vpop.f32.mrb[0].mxu0
        %v965 = vpop.f32.mrb[0].mxu0
        %v966 = vpop.f32.mrb[0].mxu0
        %967 = vdwg.mxu0
        %v968 = vpack.c.bf16 %v958, %v955
        %v969 = vpack.c.bf16 %v963, %v963
        %972 = vrot.lane.b32.xlu0 %v968, 96
        %v973 = vpop.permute.xlu0 %972
        %974 = vrot.lane.b32.xlu0 %v969, 96
        %v975 = vpop.permute.xlu0 %974
        %vm976 = vcmask 64512
        %v978 = vsel %vm976, %v968, 0
        %v981 = vsel %vm976, %v969, 0
        %v984 = vsel %vm976, %v973, 0
        %v987 = vsel %vm976, %v975, 0
        %989 = vmatprep.subr.bf16.mxu0 0
        %990 = vmatpush1.bf16.xpose.msra.mxu0 %v984
        %991 = vmatprep.subr.bf16.mxu0 0
        %992 = vmatpush1.bf16.xpose.msra.mxu0 %v987
        %993 = vmatprep.subr.bf16.mxu0 0
        %994 = vmatpush1.bf16.xpose.msra.mxu0 0
        %995 = vmatprep.subr.bf16.mxu0 0
        %996 = vmatpush1.bf16.xpose.msra.mxu0 0
        %997 = vmatprep.subr.bf16.mxu0 0
        %998 = vmatpush1.bf16.xpose.msra.mxu0 0
        %999 = vmatprep.subr.bf16.mxu0 0
        %1000 = vmatpush1.bf16.xpose.msra.mxu0 0
        %1001 = vmatprep.subr.bf16.mxu0 0
        %1002 = vmatpush1.bf16.xpose.msra.mxu0 0
        %1003 = vmatprep.subr.bf16.mxu0 0
        %1004 = vmatpush1.bf16.xpose.msra.mxu0 0
        %1005 = vmatprep.subr.bf16.mxu0 0
        %1006 = vmatpush1.bf16.xpose.msra.mxu0 0
        %1007 = vmatprep.subr.bf16.mxu0 0
        %1008 = vmatpush1.bf16.xpose.msra.mxu0 0
        %1009 = vmatprep.subr.bf16.mxu0 0
        %1010 = vmatpush1.bf16.xpose.msra.mxu0 0
        %1011 = vmatprep.subr.bf16.mxu0 0
        %1012 = vmatpush1.bf16.xpose.msra.mxu0 0
        %1013 = vmatprep.subr.bf16.mxu0 0
        %1014 = vmatpush1.bf16.xpose.msra.mxu0 0
        %1015 = vmatprep.subr.bf16.mxu0 0
        %1016 = vmatpush1.bf16.xpose.msra.mxu0 0
        %1017 = vmatprep.subr.bf16.mxu0 0
        %1018 = vmatpush1.bf16.xpose.msra.mxu0 0
        %1019 = vmatprep.subr.bf16.mxu0 0
        %1020 = vmatpush1.bf16.xpose.msra.mxu0 0
        %1021 = vmatprep.mubr.bf16.mxu0 0
        %1022 = vmatmul.mubr.bf16.gmra.mrb[0].mxu0 %v978
        %v1023 = vpop.f32.mrb[0].mxu0
        %v1024 = vadd.f32 %v832, %v1023
        %v1025 = vpop.f32.mrb[0].mxu0
        %v1026 = vpop.f32.mrb[0].mxu0
        %v1027 = vadd.f32 %v833, %v1026
        %v1028 = vpop.f32.mrb[0].mxu0
        %1029 = vmatprep.mubr.bf16.mxu0 0
        %1030 = vmatmul.mubr.bf16.gmra.mrb[0].mxu0 %v981
        %v1031 = vpop.f32.mrb[0].mxu0
        %v1032 = vadd.f32 %v834, %v1031
        %v1033 = vpop.f32.mrb[0].mxu0
        %v1034 = vpop.f32.mrb[0].mxu0
        %v1035 = vpop.f32.mrb[0].mxu0
        %1036 = vdwg.mxu0
        %vm1037 = vcmask 195584
        %v1038 = vsel %vm1037, %v1024, -inf
        %1039 = vmax.xlane.f32.xlu0 %v1038
        %v1040 = vpop.xlane.xlu0 %1039
        %v1041 = vsel %vm1037, %v1027, -inf
        %1042 = vmax.xlane.f32.xlu0 %v1041
        %v1043 = vpop.xlane.xlu0 %1042
        %v1044 = vsel %vm1037, %v1032, -inf
        %1045 = vmax.xlane.f32.xlu0 %v1044
        %v1046 = vpop.xlane.xlu0 %1045
        %v1047 = vsub.f32 %v1024, %v1040
        %v1048 = vsub.f32 %v1027, %v1043
        %v1049 = vsub.f32 %v1032, %v1046
        %v1050 = vmul.f32 %v1047, 1.442695
        %v1051 = vpow.pop %v1050
        %v1052 = vmul.f32 %v1048, 1.442695
        %v1053 = vpow.pop %v1052
        %v1054 = vmul.f32 %v1049, 1.442695
        %v1055 = vpow.pop %v1054
        %v1056 = vsel %vm1037, %v1051, 0.0
        %1057 = vadd.xlane.f32.xlu0 %v1056
        %v1058 = vpop.xlane.xlu0 %1057
        %v1059 = vsel %vm1037, %v1053, 0.0
        %1060 = vadd.xlane.f32.xlu0 %v1059
        %v1061 = vpop.xlane.xlu0 %1060
        %v1062 = vsel %vm1037, %v1055, 0.0
        %1063 = vadd.xlane.f32.xlu0 %v1062
        %v1064 = vpop.xlane.xlu0 %1063
        %v1065 = vrcp.pop %v1058
        %v1066 = vrcp.pop %v1061
        %v1067 = vrcp.pop %v1064
        %v1068 = vmul.f32 %v1051, %v1065
        %v1069 = vmul.f32 %v1053, %v1066
        %v1070 = vmul.f32 %v1055, %v1067
        %v1071 = vpack.c.bf16 %v1069, %v1068
        %v1072 = vpack.c.bf16 %v1070, %v1070
        %1073 = vrot.lane.b32.xlu0 %v968, 64
        %v1074 = vpop.permute.xlu0 %1073
        %1075 = vrot.lane.b32.xlu0 %v969, 64
        %v1076 = vpop.permute.xlu0 %1075
        %v1079 = vsel %vm1037, %v1071, 0
        %v1082 = vsel %vm1037, %v1072, 0
        %vm1084 = vcmask 1043456
        %v1086 = vsel %vm1084, %v1076, 0
        %1088 = vmatprep.subr.bf16.mxu0 0
        %1089 = vmatpush1.bf16.msra.mxu0 %v1074
        %1090 = vmatprep.subr.bf16.mxu0 0
        %1091 = vmatpush1.bf16.msra.mxu0 %v1086
        %1092 = vmatprep.subr.bf16.mxu0 0
        %1093 = vmatpush1.bf16.msra.mxu0 0
        %1094 = vmatprep.subr.bf16.mxu0 0
        %1095 = vmatpush1.bf16.msra.mxu0 0
        %1096 = vmatprep.subr.bf16.mxu0 0
        %1097 = vmatpush1.bf16.msra.mxu0 0
        %1098 = vmatprep.subr.bf16.mxu0 0
        %1099 = vmatpush1.bf16.msra.mxu0 0
        %1100 = vmatprep.subr.bf16.mxu0 0
        %1101 = vmatpush1.bf16.msra.mxu0 0
        %1102 = vmatprep.subr.bf16.mxu0 0
        %1103 = vmatpush1.bf16.msra.mxu0 0
        %1104 = vmatprep.subr.bf16.mxu0 0
        %1105 = vmatpush1.bf16.msra.mxu0 0
        %1106 = vmatprep.subr.bf16.mxu0 0
        %1107 = vmatpush1.bf16.msra.mxu0 0
        %1108 = vmatprep.subr.bf16.mxu0 0
        %1109 = vmatpush1.bf16.msra.mxu0 0
        %1110 = vmatprep.subr.bf16.mxu0 0
        %1111 = vmatpush1.bf16.msra.mxu0 0
        %1112 = vmatprep.subr.bf16.mxu0 0
        %1113 = vmatpush1.bf16.msra.mxu0 0
        %1114 = vmatprep.subr.bf16.mxu0 0
        %1115 = vmatpush1.bf16.msra.mxu0 0
        %1116 = vmatprep.subr.bf16.mxu0 0
        %1117 = vmatpush1.bf16.msra.mxu0 0
        %1118 = vmatprep.subr.bf16.mxu0 0
        %1119 = vmatpush1.bf16.msra.mxu0 0
        %1120 = vmatprep.mubr.bf16.mxu0 0
        %1121 = vmatmul.mubr.bf16.gmra.mrb[0].mxu0 %v1079
        %v1122 = vpop.f32.mrb[0].mxu0
        %v1123 = vadd.f32 0.0, %v1122
        %v1124 = vpop.f32.mrb[0].mxu0
        %v1125 = vpop.f32.mrb[0].mxu0
        %v1126 = vadd.f32 0.0, %v1125
        %v1127 = vpop.f32.mrb[0].mxu0
        %1128 = vmatprep.mubr.bf16.mxu0 0
        %1129 = vmatmul.mubr.bf16.gmra.mrb[0].mxu0 %v1082
        %v1130 = vpop.f32.mrb[0].mxu0
        %v1131 = vadd.f32 0.0, %v1130
        %v1132 = vpop.f32.mrb[0].mxu0
        %v1133 = vpop.f32.mrb[0].mxu0
        %v1134 = vpop.f32.mrb[0].mxu0
        %1135 = vdwg.mxu0
        %1136 = vrot.lane.b32.xlu0 %v968, 120
        %v1137 = vpop.permute.xlu0 %1136
        %1138 = vrot.lane.b32.xlu0 %v969, 120
        %v1139 = vpop.permute.xlu0 %1138
        %1140 = vrot.lane.b32.xlu0 %v968, 88
        %v1141 = vpop.permute.xlu0 %1140
        %1142 = vrot.lane.b32.xlu0 %v969, 88
        %v1143 = vpop.permute.xlu0 %1142
        %v1145 = vsel %vm976, %v1137, 0
        %v1148 = vsel %vm976, %v1139, 0
        %v1151 = vsel %vm976, %v1141, 0
        %v1154 = vsel %vm976, %v1143, 0
        %1156 = vmatprep.subr.bf16.mxu0 0
        %1157 = vmatpush1.bf16.xpose.msra.mxu0 %v1151
        %1158 = vmatprep.subr.bf16.mxu0 0
        %1159 = vmatpush1.bf16.xpose.msra.mxu0 %v1154
        %1160 = vmatprep.subr.bf16.mxu0 0
        %1161 = vmatpush1.bf16.xpose.msra.mxu0 0
        %1162 = vmatprep.subr.bf16.mxu0 0
        %1163 = vmatpush1.bf16.xpose.msra.mxu0 0
        %1164 = vmatprep.subr.bf16.mxu0 0
        %1165 = vmatpush1.bf16.xpose.msra.mxu0 0
        %1166 = vmatprep.subr.bf16.mxu0 0
        %1167 = vmatpush1.bf16.xpose.msra.mxu0 0
        %1168 = vmatprep.subr.bf16.mxu0 0
        %1169 = vmatpush1.bf16.xpose.msra.mxu0 0
        %1170 = vmatprep.subr.bf16.mxu0 0
        %1171 = vmatpush1.bf16.xpose.msra.mxu0 0
        %1172 = vmatprep.subr.bf16.mxu0 0
        %1173 = vmatpush1.bf16.xpose.msra.mxu0 0
        %1174 = vmatprep.subr.bf16.mxu0 0
        %1175 = vmatpush1.bf16.xpose.msra.mxu0 0
        %1176 = vmatprep.subr.bf16.mxu0 0
        %1177 = vmatpush1.bf16.xpose.msra.mxu0 0
        %1178 = vmatprep.subr.bf16.mxu0 0
        %1179 = vmatpush1.bf16.xpose.msra.mxu0 0
        %1180 = vmatprep.subr.bf16.mxu0 0
        %1181 = vmatpush1.bf16.xpose.msra.mxu0 0
        %1182 = vmatprep.subr.bf16.mxu0 0
        %1183 = vmatpush1.bf16.xpose.msra.mxu0 0
        %1184 = vmatprep.subr.bf16.mxu0 0
        %1185 = vmatpush1.bf16.xpose.msra.mxu0 0
        %1186 = vmatprep.subr.bf16.mxu0 0
        %1187 = vmatpush1.bf16.xpose.msra.mxu0 0
        %1188 = vmatprep.mubr.bf16.mxu0 0
        %1189 = vmatmul.mubr.bf16.gmra.mrb[0].mxu0 %v1145
        %v1190 = vpop.f32.mrb[0].mxu0
        %v1191 = vadd.f32 %v832, %v1190
        %v1192 = vpop.f32.mrb[0].mxu0
        %v1193 = vpop.f32.mrb[0].mxu0
        %v1194 = vadd.f32 %v833, %v1193
        %v1195 = vpop.f32.mrb[0].mxu0
        %1196 = vmatprep.mubr.bf16.mxu0 0
        %1197 = vmatmul.mubr.bf16.gmra.mrb[0].mxu0 %v1148
        %v1198 = vpop.f32.mrb[0].mxu0
        %v1199 = vadd.f32 %v834, %v1198
        %v1200 = vpop.f32.mrb[0].mxu0
        %v1201 = vpop.f32.mrb[0].mxu0
        %v1202 = vpop.f32.mrb[0].mxu0
        %1203 = vdwg.mxu0
        %v1204 = vsel %vm1037, %v1191, -inf
        %1205 = vmax.xlane.f32.xlu0 %v1204
        %v1206 = vpop.xlane.xlu0 %1205
        %v1207 = vsel %vm1037, %v1194, -inf
        %1208 = vmax.xlane.f32.xlu0 %v1207
        %v1209 = vpop.xlane.xlu0 %1208
        %v1210 = vsel %vm1037, %v1199, -inf
        %1211 = vmax.xlane.f32.xlu0 %v1210
        %v1212 = vpop.xlane.xlu0 %1211
        %v1213 = vsub.f32 %v1191, %v1206
        %v1214 = vsub.f32 %v1194, %v1209
        %v1215 = vsub.f32 %v1199, %v1212
        %v1216 = vmul.f32 %v1213, 1.442695
        %v1217 = vpow.pop %v1216
        %v1218 = vmul.f32 %v1214, 1.442695
        %v1219 = vpow.pop %v1218
        %v1220 = vmul.f32 %v1215, 1.442695
        %v1221 = vpow.pop %v1220
        %v1222 = vsel %vm1037, %v1217, 0.0
        %1223 = vadd.xlane.f32.xlu0 %v1222
        %v1224 = vpop.xlane.xlu0 %1223
        %v1225 = vsel %vm1037, %v1219, 0.0
        %1226 = vadd.xlane.f32.xlu0 %v1225
        %v1227 = vpop.xlane.xlu0 %1226
        %v1228 = vsel %vm1037, %v1221, 0.0
        %1229 = vadd.xlane.f32.xlu0 %v1228
        %v1230 = vpop.xlane.xlu0 %1229
        %v1231 = vrcp.pop %v1224
        %v1232 = vrcp.pop %v1227
        %v1233 = vrcp.pop %v1230
        %v1234 = vmul.f32 %v1217, %v1231
        %v1235 = vmul.f32 %v1219, %v1232
        %v1236 = vmul.f32 %v1221, %v1233
        %v1237 = vpack.c.bf16 %v1235, %v1234
        %v1238 = vpack.c.bf16 %v1236, %v1236
        %1239 = vrot.lane.b32.xlu0 %v968, 56
        %v1240 = vpop.permute.xlu0 %1239
        %1241 = vrot.lane.b32.xlu0 %v969, 56
        %v1242 = vpop.permute.xlu0 %1241
        %v1245 = vsel %vm1037, %v1237, 0
        %v1248 = vsel %vm1037, %v1238, 0
        %v1251 = vsel %vm1084, %v1242, 0
        %1253 = vmatprep.subr.bf16.mxu0 0
        %1254 = vmatpush1.bf16.msra.mxu0 %v1240
        %1255 = vmatprep.subr.bf16.mxu0 0
        %1256 = vmatpush1.bf16.msra.mxu0 %v1251
        %1257 = vmatprep.subr.bf16.mxu0 0
        %1258 = vmatpush1.bf16.msra.mxu0 0
        %1259 = vmatprep.subr.bf16.mxu0 0
        %1260 = vmatpush1.bf16.msra.mxu0 0
        %1261 = vmatprep.subr.bf16.mxu0 0
        %1262 = vmatpush1.bf16.msra.mxu0 0
        %1263 = vmatprep.subr.bf16.mxu0 0
        %1264 = vmatpush1.bf16.msra.mxu0 0
        %1265 = vmatprep.subr.bf16.mxu0 0
        %1266 = vmatpush1.bf16.msra.mxu0 0
        %1267 = vmatprep.subr.bf16.mxu0 0
        %1268 = vmatpush1.bf16.msra.mxu0 0
        %1269 = vmatprep.subr.bf16.mxu0 0
        %1270 = vmatpush1.bf16.msra.mxu0 0
        %1271 = vmatprep.subr.bf16.mxu0 0
        %1272 = vmatpush1.bf16.msra.mxu0 0
        %1273 = vmatprep.subr.bf16.mxu0 0
        %1274 = vmatpush1.bf16.msra.mxu0 0
        %1275 = vmatprep.subr.bf16.mxu0 0
        %1276 = vmatpush1.bf16.msra.mxu0 0
        %1277 = vmatprep.subr.bf16.mxu0 0
        %1278 = vmatpush1.bf16.msra.mxu0 0
        %1279 = vmatprep.subr.bf16.mxu0 0
        %1280 = vmatpush1.bf16.msra.mxu0 0
        %1281 = vmatprep.subr.bf16.mxu0 0
        %1282 = vmatpush1.bf16.msra.mxu0 0
        %1283 = vmatprep.subr.bf16.mxu0 0
        %1284 = vmatpush1.bf16.msra.mxu0 0
        %1285 = vmatprep.mubr.bf16.mxu0 0
        %1286 = vmatmul.mubr.bf16.gmra.mrb[0].mxu0 %v1245
        %v1287 = vpop.f32.mrb[0].mxu0
        %v1288 = vadd.f32 0.0, %v1287
        %v1289 = vpop.f32.mrb[0].mxu0
        %v1290 = vpop.f32.mrb[0].mxu0
        %v1291 = vadd.f32 0.0, %v1290
        %v1292 = vpop.f32.mrb[0].mxu0
        %1293 = vmatprep.mubr.bf16.mxu0 0
        %1294 = vmatmul.mubr.bf16.gmra.mrb[0].mxu0 %v1248
        %v1295 = vpop.f32.mrb[0].mxu0
        %v1296 = vadd.f32 0.0, %v1295
        %v1297 = vpop.f32.mrb[0].mxu0
        %v1298 = vpop.f32.mrb[0].mxu0
        %v1299 = vpop.f32.mrb[0].mxu0
        %1300 = vdwg.mxu0
        %1301 = vrot.lane.b32.xlu0 %v968, 112
        %v1302 = vpop.permute.xlu0 %1301
        %1303 = vrot.lane.b32.xlu0 %v969, 112
        %v1304 = vpop.permute.xlu0 %1303
        %1305 = vrot.lane.b32.xlu0 %v968, 80
        %v1306 = vpop.permute.xlu0 %1305
        %1307 = vrot.lane.b32.xlu0 %v969, 80
        %v1308 = vpop.permute.xlu0 %1307
        %v1310 = vsel %vm976, %v1302, 0
        %v1313 = vsel %vm976, %v1304, 0
        %v1316 = vsel %vm976, %v1306, 0
        %v1319 = vsel %vm976, %v1308, 0
        %1321 = vmatprep.subr.bf16.mxu0 0
        %1322 = vmatpush1.bf16.xpose.msra.mxu0 %v1316
        %1323 = vmatprep.subr.bf16.mxu0 0
        %1324 = vmatpush1.bf16.xpose.msra.mxu0 %v1319
        %1325 = vmatprep.subr.bf16.mxu0 0
        %1326 = vmatpush1.bf16.xpose.msra.mxu0 0
        %1327 = vmatprep.subr.bf16.mxu0 0
        %1328 = vmatpush1.bf16.xpose.msra.mxu0 0
        %1329 = vmatprep.subr.bf16.mxu0 0
        %1330 = vmatpush1.bf16.xpose.msra.mxu0 0
        %1331 = vmatprep.subr.bf16.mxu0 0
        %1332 = vmatpush1.bf16.xpose.msra.mxu0 0
        %1333 = vmatprep.subr.bf16.mxu0 0
        %1334 = vmatpush1.bf16.xpose.msra.mxu0 0
        %1335 = vmatprep.subr.bf16.mxu0 0
        %1336 = vmatpush1.bf16.xpose.msra.mxu0 0
        %1337 = vmatprep.subr.bf16.mxu0 0
        %1338 = vmatpush1.bf16.xpose.msra.mxu0 0
        %1339 = vmatprep.subr.bf16.mxu0 0
        %1340 = vmatpush1.bf16.xpose.msra.mxu0 0
        %1341 = vmatprep.subr.bf16.mxu0 0
        %1342 = vmatpush1.bf16.xpose.msra.mxu0 0
        %1343 = vmatprep.subr.bf16.mxu0 0
        %1344 = vmatpush1.bf16.xpose.msra.mxu0 0
        %1345 = vmatprep.subr.bf16.mxu0 0
        %1346 = vmatpush1.bf16.xpose.msra.mxu0 0
        %1347 = vmatprep.subr.bf16.mxu0 0
        %1348 = vmatpush1.bf16.xpose.msra.mxu0 0
        %1349 = vmatprep.subr.bf16.mxu0 0
        %1350 = vmatpush1.bf16.xpose.msra.mxu0 0
        %1351 = vmatprep.subr.bf16.mxu0 0
        %1352 = vmatpush1.bf16.xpose.msra.mxu0 0
        %1353 = vmatprep.mubr.bf16.mxu0 0
        %1354 = vmatmul.mubr.bf16.gmra.mrb[0].mxu0 %v1310
        %v1355 = vpop.f32.mrb[0].mxu0
        %v1356 = vadd.f32 %v832, %v1355
        %v1357 = vpop.f32.mrb[0].mxu0
        %v1358 = vpop.f32.mrb[0].mxu0
        %v1359 = vadd.f32 %v833, %v1358
        %v1360 = vpop.f32.mrb[0].mxu0
        %1361 = vmatprep.mubr.bf16.mxu0 0
        %1362 = vmatmul.mubr.bf16.gmra.mrb[0].mxu0 %v1313
        %v1363 = vpop.f32.mrb[0].mxu0
        %v1364 = vadd.f32 %v834, %v1363
        %v1365 = vpop.f32.mrb[0].mxu0
        %v1366 = vpop.f32.mrb[0].mxu0
        %v1367 = vpop.f32.mrb[0].mxu0
        %1368 = vdwg.mxu0
        %v1369 = vsel %vm1037, %v1356, -inf
        %1370 = vmax.xlane.f32.xlu0 %v1369
        %v1371 = vpop.xlane.xlu0 %1370
        %v1372 = vsel %vm1037, %v1359, -inf
        %1373 = vmax.xlane.f32.xlu0 %v1372
        %v1374 = vpop.xlane.xlu0 %1373
        %v1375 = vsel %vm1037, %v1364, -inf
        %1376 = vmax.xlane.f32.xlu0 %v1375
        %v1377 = vpop.xlane.xlu0 %1376
        %v1378 = vsub.f32 %v1356, %v1371
        %v1379 = vsub.f32 %v1359, %v1374
        %v1380 = vsub.f32 %v1364, %v1377
        %v1381 = vmul.f32 %v1378, 1.442695
        %v1382 = vpow.pop %v1381
        %v1383 = vmul.f32 %v1379, 1.442695
        %v1384 = vpow.pop %v1383
        %v1385 = vmul.f32 %v1380, 1.442695
        %v1386 = vpow.pop %v1385
        %v1387 = vsel %vm1037, %v1382, 0.0
        %1388 = vadd.xlane.f32.xlu0 %v1387
        %v1389 = vpop.xlane.xlu0 %1388
        %v1390 = vsel %vm1037, %v1384, 0.0
        %1391 = vadd.xlane.f32.xlu0 %v1390
        %v1392 = vpop.xlane.xlu0 %1391
        %v1393 = vsel %vm1037, %v1386, 0.0
        %1394 = vadd.xlane.f32.xlu0 %v1393
        %v1395 = vpop.xlane.xlu0 %1394
        %v1396 = vrcp.pop %v1389
        %v1397 = vrcp.pop %v1392
        %v1398 = vrcp.pop %v1395
        %v1399 = vmul.f32 %v1382, %v1396
        %v1400 = vmul.f32 %v1384, %v1397
        %v1401 = vmul.f32 %v1386, %v1398
        %v1402 = vpack.c.bf16 %v1400, %v1399
        %v1403 = vpack.c.bf16 %v1401, %v1401
        %1404 = vrot.lane.b32.xlu0 %v968, 48
        %v1405 = vpop.permute.xlu0 %1404
        %1406 = vrot.lane.b32.xlu0 %v969, 48
        %v1407 = vpop.permute.xlu0 %1406
        %v1410 = vsel %vm1037, %v1402, 0
        %v1413 = vsel %vm1037, %v1403, 0
        %v1416 = vsel %vm1084, %v1407, 0
        %1418 = vmatprep.subr.bf16.mxu0 0
        %1419 = vmatpush1.bf16.msra.mxu0 %v1405
        %1420 = vmatprep.subr.bf16.mxu0 0
        %1421 = vmatpush1.bf16.msra.mxu0 %v1416
        %1422 = vmatprep.subr.bf16.mxu0 0
        %1423 = vmatpush1.bf16.msra.mxu0 0
        %1424 = vmatprep.subr.bf16.mxu0 0
        %1425 = vmatpush1.bf16.msra.mxu0 0
        %1426 = vmatprep.subr.bf16.mxu0 0
        %1427 = vmatpush1.bf16.msra.mxu0 0
        %1428 = vmatprep.subr.bf16.mxu0 0
        %1429 = vmatpush1.bf16.msra.mxu0 0
        %1430 = vmatprep.subr.bf16.mxu0 0
        %1431 = vmatpush1.bf16.msra.mxu0 0
        %1432 = vmatprep.subr.bf16.mxu0 0
        %1433 = vmatpush1.bf16.msra.mxu0 0
        %1434 = vmatprep.subr.bf16.mxu0 0
        %1435 = vmatpush1.bf16.msra.mxu0 0
        %1436 = vmatprep.subr.bf16.mxu0 0
        %1437 = vmatpush1.bf16.msra.mxu0 0
        %1438 = vmatprep.subr.bf16.mxu0 0
        %1439 = vmatpush1.bf16.msra.mxu0 0
        %1440 = vmatprep.subr.bf16.mxu0 0
        %1441 = vmatpush1.bf16.msra.mxu0 0
        %1442 = vmatprep.subr.bf16.mxu0 0
        %1443 = vmatpush1.bf16.msra.mxu0 0
        %1444 = vmatprep.subr.bf16.mxu0 0
        %1445 = vmatpush1.bf16.msra.mxu0 0
        %1446 = vmatprep.subr.bf16.mxu0 0
        %1447 = vmatpush1.bf16.msra.mxu0 0
        %1448 = vmatprep.subr.bf16.mxu0 0
        %1449 = vmatpush1.bf16.msra.mxu0 0
        %1450 = vmatprep.mubr.bf16.mxu0 0
        %1451 = vmatmul.mubr.bf16.gmra.mrb[0].mxu0 %v1410
        %v1452 = vpop.f32.mrb[0].mxu0
        %v1453 = vadd.f32 0.0, %v1452
        %v1454 = vpop.f32.mrb[0].mxu0
        %v1455 = vpop.f32.mrb[0].mxu0
        %v1456 = vadd.f32 0.0, %v1455
        %v1457 = vpop.f32.mrb[0].mxu0
        %1458 = vmatprep.mubr.bf16.mxu0 0
        %1459 = vmatmul.mubr.bf16.gmra.mrb[0].mxu0 %v1413
        %v1460 = vpop.f32.mrb[0].mxu0
        %v1461 = vadd.f32 0.0, %v1460
        %v1462 = vpop.f32.mrb[0].mxu0
        %v1463 = vpop.f32.mrb[0].mxu0
        %v1464 = vpop.f32.mrb[0].mxu0
        %1465 = vdwg.mxu0
        %1466 = vrot.lane.b32.xlu0 %v968, 104
        %v1467 = vpop.permute.xlu0 %1466
        %1468 = vrot.lane.b32.xlu0 %v969, 104
        %v1469 = vpop.permute.xlu0 %1468
        %1470 = vrot.lane.b32.xlu0 %v968, 72
        %v1471 = vpop.permute.xlu0 %1470
        %1472 = vrot.lane.b32.xlu0 %v969, 72
        %v1473 = vpop.permute.xlu0 %1472
        %v1475 = vsel %vm976, %v1467, 0
        %v1478 = vsel %vm976, %v1469, 0
        %v1481 = vsel %vm976, %v1471, 0
        %v1484 = vsel %vm976, %v1473, 0
        %1486 = vmatprep.subr.bf16.mxu0 0
        %1487 = vmatpush1.bf16.xpose.msra.mxu0 %v1481
        %1488 = vmatprep.subr.bf16.mxu0 0
        %1489 = vmatpush1.bf16.xpose.msra.mxu0 %v1484
        %1490 = vmatprep.subr.bf16.mxu0 0
        %1491 = vmatpush1.bf16.xpose.msra.mxu0 0
        %1492 = vmatprep.subr.bf16.mxu0 0
        %1493 = vmatpush1.bf16.xpose.msra.mxu0 0
        %1494 = vmatprep.subr.bf16.mxu0 0
        %1495 = vmatpush1.bf16.xpose.msra.mxu0 0
        %1496 = vmatprep.subr.bf16.mxu0 0
        %1497 = vmatpush1.bf16.xpose.msra.mxu0 0
        %1498 = vmatprep.subr.bf16.mxu0 0
        %1499 = vmatpush1.bf16.xpose.msra.mxu0 0
        %1500 = vmatprep.subr.bf16.mxu0 0
        %1501 = vmatpush1.bf16.xpose.msra.mxu0 0
        %1502 = vmatprep.subr.bf16.mxu0 0
        %1503 = vmatpush1.bf16.xpose.msra.mxu0 0
        %1504 = vmatprep.subr.bf16.mxu0 0
        %1505 = vmatpush1.bf16.xpose.msra.mxu0 0
        %1506 = vmatprep.subr.bf16.mxu0 0
        %1507 = vmatpush1.bf16.xpose.msra.mxu0 0
        %1508 = vmatprep.subr.bf16.mxu0 0
        %1509 = vmatpush1.bf16.xpose.msra.mxu0 0
        %1510 = vmatprep.subr.bf16.mxu0 0
        %1511 = vmatpush1.bf16.xpose.msra.mxu0 0
        %1512 = vmatprep.subr.bf16.mxu0 0
        %1513 = vmatpush1.bf16.xpose.msra.mxu0 0
        %1514 = vmatprep.subr.bf16.mxu0 0
        %1515 = vmatpush1.bf16.xpose.msra.mxu0 0
        %1516 = vmatprep.subr.bf16.mxu0 0
        %1517 = vmatpush1.bf16.xpose.msra.mxu0 0
        %1518 = vmatprep.mubr.bf16.mxu0 0
        %1519 = vmatmul.mubr.bf16.gmra.mrb[0].mxu0 %v1475
        %v1520 = vpop.f32.mrb[0].mxu0
        %v1521 = vadd.f32 %v832, %v1520
        %v1522 = vpop.f32.mrb[0].mxu0
        %v1523 = vpop.f32.mrb[0].mxu0
        %v1524 = vadd.f32 %v833, %v1523
        %v1525 = vpop.f32.mrb[0].mxu0
        %1526 = vmatprep.mubr.bf16.mxu0 0
        %1527 = vmatmul.mubr.bf16.gmra.mrb[0].mxu0 %v1478
        %v1528 = vpop.f32.mrb[0].mxu0
        %v1529 = vadd.f32 %v834, %v1528
        %v1530 = vpop.f32.mrb[0].mxu0
        %v1531 = vpop.f32.mrb[0].mxu0
        %v1532 = vpop.f32.mrb[0].mxu0
        %1533 = vdwg.mxu0
        %v1534 = vsel %vm1037, %v1521, -inf
        %1535 = vmax.xlane.f32.xlu0 %v1534
        %v1536 = vpop.xlane.xlu0 %1535
        %v1537 = vsel %vm1037, %v1524, -inf
        %1538 = vmax.xlane.f32.xlu0 %v1537
        %v1539 = vpop.xlane.xlu0 %1538
        %v1540 = vsel %vm1037, %v1529, -inf
        %1541 = vmax.xlane.f32.xlu0 %v1540
        %v1542 = vpop.xlane.xlu0 %1541
        %v1543 = vsub.f32 %v1521, %v1536
        %v1544 = vsub.f32 %v1524, %v1539
        %v1545 = vsub.f32 %v1529, %v1542
        %v1546 = vmul.f32 %v1543, 1.442695
        %v1547 = vpow.pop %v1546
        %v1548 = vmul.f32 %v1544, 1.442695
        %v1549 = vpow.pop %v1548
        %v1550 = vmul.f32 %v1545, 1.442695
        %v1551 = vpow.pop %v1550
        %v1552 = vsel %vm1037, %v1547, 0.0
        %1553 = vadd.xlane.f32.xlu0 %v1552
        %v1554 = vpop.xlane.xlu0 %1553
        %v1555 = vsel %vm1037, %v1549, 0.0
        %1556 = vadd.xlane.f32.xlu0 %v1555
        %v1557 = vpop.xlane.xlu0 %1556
        %v1558 = vsel %vm1037, %v1551, 0.0
        %1559 = vadd.xlane.f32.xlu0 %v1558
        %v1560 = vpop.xlane.xlu0 %1559
        %v1561 = vrcp.pop %v1554
        %v1562 = vrcp.pop %v1557
        %v1563 = vrcp.pop %v1560
        %v1564 = vmul.f32 %v1547, %v1561
        %v1565 = vmul.f32 %v1549, %v1562
        %v1566 = vmul.f32 %v1551, %v1563
        %v1567 = vpack.c.bf16 %v1565, %v1564
        %v1568 = vpack.c.bf16 %v1566, %v1566
        %1569 = vrot.lane.b32.xlu0 %v968, 40
        %v1570 = vpop.permute.xlu0 %1569
        %1571 = vrot.lane.b32.xlu0 %v969, 40
        %v1572 = vpop.permute.xlu0 %1571
        %v1575 = vsel %vm1037, %v1567, 0
        %v1578 = vsel %vm1037, %v1568, 0
        %v1581 = vsel %vm1084, %v1572, 0
        %1583 = vmatprep.subr.bf16.mxu0 0
        %1584 = vmatpush1.bf16.msra.mxu0 %v1570
        %1585 = vmatprep.subr.bf16.mxu0 0
        %1586 = vmatpush1.bf16.msra.mxu0 %v1581
        %1587 = vmatprep.subr.bf16.mxu0 0
        %1588 = vmatpush1.bf16.msra.mxu0 0
        %1589 = vmatprep.subr.bf16.mxu0 0
        %1590 = vmatpush1.bf16.msra.mxu0 0
        %1591 = vmatprep.subr.bf16.mxu0 0
        %1592 = vmatpush1.bf16.msra.mxu0 0
        %1593 = vmatprep.subr.bf16.mxu0 0
        %1594 = vmatpush1.bf16.msra.mxu0 0
        %1595 = vmatprep.subr.bf16.mxu0 0
        %1596 = vmatpush1.bf16.msra.mxu0 0
        %1597 = vmatprep.subr.bf16.mxu0 0
        %1598 = vmatpush1.bf16.msra.mxu0 0
        %1599 = vmatprep.subr.bf16.mxu0 0
        %1600 = vmatpush1.bf16.msra.mxu0 0
        %1601 = vmatprep.subr.bf16.mxu0 0
        %1602 = vmatpush1.bf16.msra.mxu0 0
        %1603 = vmatprep.subr.bf16.mxu0 0
        %1604 = vmatpush1.bf16.msra.mxu0 0
        %1605 = vmatprep.subr.bf16.mxu0 0
        %1606 = vmatpush1.bf16.msra.mxu0 0
        %1607 = vmatprep.subr.bf16.mxu0 0
        %1608 = vmatpush1.bf16.msra.mxu0 0
        %1609 = vmatprep.subr.bf16.mxu0 0
        %1610 = vmatpush1.bf16.msra.mxu0 0
        %1611 = vmatprep.subr.bf16.mxu0 0
        %1612 = vmatpush1.bf16.msra.mxu0 0
        %1613 = vmatprep.subr.bf16.mxu0 0
        %1614 = vmatpush1.bf16.msra.mxu0 0
        %1615 = vmatprep.mubr.bf16.mxu0 0
        %1616 = vmatmul.mubr.bf16.gmra.mrb[0].mxu0 %v1575
        %v1617 = vpop.f32.mrb[0].mxu0
        %v1618 = vadd.f32 0.0, %v1617
        %v1619 = vpop.f32.mrb[0].mxu0
        %v1620 = vpop.f32.mrb[0].mxu0
        %v1621 = vadd.f32 0.0, %v1620
        %v1622 = vpop.f32.mrb[0].mxu0
        %1623 = vmatprep.mubr.bf16.mxu0 0
        %1624 = vmatmul.mubr.bf16.gmra.mrb[0].mxu0 %v1578
        %v1625 = vpop.f32.mrb[0].mxu0
        %v1626 = vadd.f32 0.0, %v1625
        %v1627 = vpop.f32.mrb[0].mxu0
        %v1628 = vpop.f32.mrb[0].mxu0
        %v1629 = vpop.f32.mrb[0].mxu0
        %1630 = vdwg.mxu0
        %1634 = vrot.lane.b32.xlu0 %v1288, 8
        %v1635 = vpop.permute.xlu0 %1634
        %1636 = vrot.lane.b32.xlu0 %v1291, 8
        %v1637 = vpop.permute.xlu0 %1636
        %1638 = vrot.lane.b32.xlu0 %v1296, 8
        %v1639 = vpop.permute.xlu0 %1638
        %1646 = vrot.lane.b32.xlu0 %v1453, 16
        %v1647 = vpop.permute.xlu0 %1646
        %1648 = vrot.lane.b32.xlu0 %v1456, 16
        %v1649 = vpop.permute.xlu0 %1648
        %1650 = vrot.lane.b32.xlu0 %v1461, 16
        %v1651 = vpop.permute.xlu0 %1650
        %1658 = vrot.lane.b32.xlu0 %v1618, 24
        %v1659 = vpop.permute.xlu0 %1658
        %1660 = vrot.lane.b32.xlu0 %v1621, 24
        %v1661 = vpop.permute.xlu0 %1660
        %1662 = vrot.lane.b32.xlu0 %v1626, 24
        %v1663 = vpop.permute.xlu0 %1662
        %v1667 = vsel %vm976, %v1123, %v1635
        %v1668 = vsel %vm976, %v1126, %v1637
        %v1669 = vsel %vm976, %v1131, %v1639
        %vm1670 = vcmask 130048
        %v1671 = vsel %vm1670, %v1667, %v1647
        %v1672 = vsel %vm1670, %v1668, %v1649
        %v1673 = vsel %vm1670, %v1669, %v1651
        %v1674 = vsel %vm1037, %v1671, %v1659
        %v1675 = vsel %vm1037, %v1672, %v1661
        %v1676 = vsel %vm1037, %v1673, %v1663
        %v1677 = vpack.c.bf16 %v1675, %v1674
        %v1678 = vpack.c.bf16 %v1676, %v1676
        %v1679 = vld [vmem:[%s7] sm:$0xf]
        %v1680 = vld [vmem:[%s7 + $0x4] sm:$0xf]
        %v1681 = vld [vmem:[%s7 + $0x8] sm:$0xf]
        %v1682 = vld [vmem:[%s7 + $0xc] sm:$0xf]
        %v1687 = vunpack.c.l.b16 %v1679
        %v1688 = vunpack.c.l.b16 %v1680
        %v1689 = vunpack.c.l.b16 %v1681
        %v1690 = vunpack.c.l.b16 %v1682
        %v1691 = vpack.c.b16 %v1688, %v1687
        %v1692 = vpack.c.b16 %v1690, %v1689
        %v1696 = vsel %vm837, %v1677, 0
        %v1699 = vsel %vm837, %v1678, 0
        %1701 = vmatprep.subr.bf16.mxu0 0
        %1702 = vmatpush1.bf16.msra.mxu0 %v1691
        %1703 = vmatprep.subr.bf16.mxu0 0
        %1704 = vmatpush1.bf16.msra.mxu0 %v1692
        %1705 = vmatprep.subr.bf16.mxu0 0
        %1706 = vmatpush1.bf16.msra.mxu0 0
        %1707 = vmatprep.subr.bf16.mxu0 0
        %1708 = vmatpush1.bf16.msra.mxu0 0
        %1709 = vmatprep.subr.bf16.mxu0 0
        %1710 = vmatpush1.bf16.msra.mxu0 0
        %1711 = vmatprep.subr.bf16.mxu0 0
        %1712 = vmatpush1.bf16.msra.mxu0 0
        %1713 = vmatprep.subr.bf16.mxu0 0
        %1714 = vmatpush1.bf16.msra.mxu0 0
        %1715 = vmatprep.subr.bf16.mxu0 0
        %1716 = vmatpush1.bf16.msra.mxu0 0
        %1717 = vmatprep.subr.bf16.mxu0 0
        %1718 = vmatpush1.bf16.msra.mxu0 0
        %1719 = vmatprep.subr.bf16.mxu0 0
        %1720 = vmatpush1.bf16.msra.mxu0 0
        %1721 = vmatprep.subr.bf16.mxu0 0
        %1722 = vmatpush1.bf16.msra.mxu0 0
        %1723 = vmatprep.subr.bf16.mxu0 0
        %1724 = vmatpush1.bf16.msra.mxu0 0
        %1725 = vmatprep.subr.bf16.mxu0 0
        %1726 = vmatpush1.bf16.msra.mxu0 0
        %1727 = vmatprep.subr.bf16.mxu0 0
        %1728 = vmatpush1.bf16.msra.mxu0 0
        %1729 = vmatprep.subr.bf16.mxu0 0
        %1730 = vmatpush1.bf16.msra.mxu0 0
        %1731 = vmatprep.subr.bf16.mxu0 0
        %1732 = vmatpush1.bf16.msra.mxu0 0
        %1733 = vmatprep.mubr.bf16.mxu0 0
        %1734 = vmatmul.mubr.bf16.gmra.mrb[0].mxu0 %v1696
        %v1735 = vpop.f32.mrb[0].mxu0
        %v1736 = vadd.f32 0.0, %v1735
        %v1737 = vpop.f32.mrb[0].mxu0
        %v1738 = vpop.f32.mrb[0].mxu0
        %v1739 = vadd.f32 0.0, %v1738
        %v1740 = vpop.f32.mrb[0].mxu0
        %1741 = vmatprep.mubr.bf16.mxu0 0
        %1742 = vmatmul.mubr.bf16.gmra.mrb[0].mxu0 %v1699
        %v1743 = vpop.f32.mrb[0].mxu0
        %v1744 = vadd.f32 0.0, %v1743
        %v1745 = vpop.f32.mrb[0].mxu0
        %v1746 = vpop.f32.mrb[0].mxu0
        %v1747 = vpop.f32.mrb[0].mxu0
        %1748 = vdwg.mxu0
        %v1749 = vadd.f32 %v819, %v1736
        %v1750 = vadd.f32 %v822, %v1739
        %v1751 = vadd.f32 %v827, %v1744
        %v1752 = vld [vmem:[#allocation10] sm:$0x1]
        %v1754 = vlaneseq
        %v1755 = vshrl.u32 %v1754, 7
        %v1756 = vsub.s32 0, %v1755
        %v1757 = vrot.slane %v1752, %v1756
        %v1759 = vadd.f32 %v1749, %v1757
        %v1760 = vadd.f32 %v1750, %v1757
        %v1761 = vadd.f32 %v1751, %v1757
        %v1762 = vld [vmem:[#allocation11] sm:$0x1]
        %v1763 = vld [vmem:[#allocation13] sm:$0x1]
        %v1764 = vsel %vm837, %v1759, 0.0
        %1765 = vadd.xlane.f32.xlu0 %v1764
        %v1766 = vpop.xlane.xlu0 %1765
        %v1767 = vsel %vm837, %v1760, 0.0
        %1768 = vadd.xlane.f32.xlu0 %v1767
        %v1769 = vpop.xlane.xlu0 %1768
        %v1770 = vsel %vm837, %v1761, 0.0
        %1771 = vadd.xlane.f32.xlu0 %v1770
        %v1772 = vpop.xlane.xlu0 %1771
        %v1773 = vmul.f32 %v1766, %v847
        %v1774 = vmul.f32 %v1769, %v847
        %v1775 = vmul.f32 %v1772, %v847
        %v1776 = vsub.f32 %v1759, %v1773
        %v1777 = vsub.f32 %v1760, %v1774
        %v1778 = vsub.f32 %v1761, %v1775
        %v1779 = vmul.f32 %v1776, %v1776
        %v1780 = vmul.f32 %v1777, %v1777
        %v1781 = vmul.f32 %v1778, %v1778
        %v1782 = vsel %vm837, %v1779, 0.0
        %1783 = vadd.xlane.f32.xlu0 %v1782
        %v1784 = vpop.xlane.xlu0 %1783
        %v1785 = vsel %vm837, %v1780, 0.0
        %1786 = vadd.xlane.f32.xlu0 %v1785
        %v1787 = vpop.xlane.xlu0 %1786
        %v1788 = vsel %vm837, %v1781, 0.0
        %1789 = vadd.xlane.f32.xlu0 %v1788
        %v1790 = vpop.xlane.xlu0 %1789
        %v1791 = vmul.f32 %v1784, %v847
        %v1792 = vmul.f32 %v1787, %v847
        %v1793 = vmul.f32 %v1790, %v847
        %v1794 = vadd.f32 %v1791, 1e-05
        %v1795 = vadd.f32 %v1792, 1e-05
        %v1796 = vadd.f32 %v1793, 1e-05
        %v1797 = vrsqrt.pop %v1794
        %v1798 = vrsqrt.pop %v1795
        %v1799 = vrsqrt.pop %v1796
        %v1800 = vmul.f32 %v1776, %v1797
        %v1801 = vmul.f32 %v1777, %v1798
        %v1802 = vmul.f32 %v1778, %v1799
        %v1804 = vlaneseq
        %v1805 = vshrl.u32 %v1804, 7
        %v1806 = vsub.s32 0, %v1805
        %v1807 = vrot.slane %v1762, %v1806
        %v1809 = vmul.f32 %v1800, %v1807
        %v1810 = vmul.f32 %v1801, %v1807
        %v1811 = vmul.f32 %v1802, %v1807
        %v1813 = vlaneseq
        %v1814 = vshrl.u32 %v1813, 7
        %v1815 = vsub.s32 0, %v1814
        %v1816 = vrot.slane %v1763, %v1815
        %v1818 = vadd.f32 %v1809, %v1816
        %v1819 = vadd.f32 %v1810, %v1816
        %v1820 = vadd.f32 %v1811, %v1816
        %v1821 = vpack.c.bf16 %v1819, %v1818
        %v1822 = vpack.c.bf16 %v1820, %v1820
        %v1823 = vld [vmem:[%s11] sm:$0xf]
        %v1824 = vld [vmem:[%s11 + $0x4] sm:$0xf]
        %v1825 = vld [vmem:[%s11 + $0x8] sm:$0xf]
        %v1826 = vld [vmem:[%s11 + $0xc] sm:$0xf]
        %v1827 = vld [vmem:[#allocation14] sm:$0x1]
        %v1829 = vlaneseq
        %v1830 = vshrl.u32 %v1829, 7
        %v1831 = vsub.s32 0, %v1830
        %v1832 = vrot.slane %v1827, %v1831
        %v1838 = vunpack.c.l.b16 %v1823
        %v1839 = vunpack.c.l.b16 %v1824
        %v1840 = vunpack.c.l.b16 %v1825
        %v1841 = vunpack.c.l.b16 %v1826
        %v1842 = vpack.c.b16 %v1839, %v1838
        %v1843 = vpack.c.b16 %v1841, %v1840
        %v1847 = vsel %vm837, %v1821, 0
        %v1850 = vsel %vm837, %v1822, 0
        %1852 = vmatprep.subr.bf16.mxu0 0
        %1853 = vmatpush1.bf16.msra.mxu0 %v1842
        %1854 = vmatprep.subr.bf16.mxu0 0
        %1855 = vmatpush1.bf16.msra.mxu0 %v1843
        %1856 = vmatprep.subr.bf16.mxu0 0
        %1857 = vmatpush1.bf16.msra.mxu0 0
        %1858 = vmatprep.subr.bf16.mxu0 0
        %1859 = vmatpush1.bf16.msra.mxu0 0
        %1860 = vmatprep.subr.bf16.mxu0 0
        %1861 = vmatpush1.bf16.msra.mxu0 0
        %1862 = vmatprep.subr.bf16.mxu0 0
        %1863 = vmatpush1.bf16.msra.mxu0 0
        %1864 = vmatprep.subr.bf16.mxu0 0
        %1865 = vmatpush1.bf16.msra.mxu0 0
        %1866 = vmatprep.subr.bf16.mxu0 0
        %1867 = vmatpush1.bf16.msra.mxu0 0
        %1868 = vmatprep.subr.bf16.mxu0 0
        %1869 = vmatpush1.bf16.msra.mxu0 0
        %1870 = vmatprep.subr.bf16.mxu0 0
        %1871 = vmatpush1.bf16.msra.mxu0 0
        %1872 = vmatprep.subr.bf16.mxu0 0
        %1873 = vmatpush1.bf16.msra.mxu0 0
        %1874 = vmatprep.subr.bf16.mxu0 0
        %1875 = vmatpush1.bf16.msra.mxu0 0
        %1876 = vmatprep.subr.bf16.mxu0 0
        %1877 = vmatpush1.bf16.msra.mxu0 0
        %1878 = vmatprep.subr.bf16.mxu0 0
        %1879 = vmatpush1.bf16.msra.mxu0 0
        %1880 = vmatprep.subr.bf16.mxu0 0
        %1881 = vmatpush1.bf16.msra.mxu0 0
        %1882 = vmatprep.subr.bf16.mxu0 0
        %1883 = vmatpush1.bf16.msra.mxu0 0
        %1884 = vmatprep.mubr.bf16.mxu0 0
        %1885 = vmatmul.mubr.bf16.gmra.mrb[0].mxu0 %v1847
        %v1886 = vpop.f32.mrb[0].mxu0
        %v1887 = vadd.f32 %v1832, %v1886
        %v1888 = vpop.f32.mrb[0].mxu0
        %v1889 = vpop.f32.mrb[0].mxu0
        %v1890 = vadd.f32 %v1832, %v1889
        %v1891 = vpop.f32.mrb[0].mxu0
        %1892 = vmatprep.mubr.bf16.mxu0 0
        %1893 = vmatmul.mubr.bf16.gmra.mrb[0].mxu0 %v1850
        %v1894 = vpop.f32.mrb[0].mxu0
        %v1895 = vadd.f32 %v1832, %v1894
        %v1896 = vpop.f32.mrb[0].mxu0
        %v1897 = vpop.f32.mrb[0].mxu0
        %v1898 = vpop.f32.mrb[0].mxu0
        %1899 = vdwg.mxu0
        %v1900 = vmul.f32 %v1887, 0.5
        %v1901 = vmul.f32 %v1890, 0.5
        %v1902 = vmul.f32 %v1895, 0.5
        %v1903 = vmul.f32 %v1887, 0.70710677
        %v1904 = vmul.f32 %v1890, 0.70710677
        %v1905 = vmul.f32 %v1895, 0.70710677
        %vm1906 = vcmp.lt.f32.partialorder %v1903, 0.0
        %vm1907 = vcmp.lt.f32.partialorder %v1904, 0.0
        %vm1908 = vcmp.lt.f32.partialorder %v1905, 0.0
        %v1909 = vsel %vm1906, -1.0, 1.0
        %v1910 = vsel %vm1907, -1.0, 1.0
        %v1911 = vsel %vm1908, -1.0, 1.0
        %v1912 = vand.u32 2147483647, %v1903
        %v1913 = vand.u32 2147483647, %v1904
        %v1914 = vand.u32 2147483647, %v1905
        %v1915 = vmul.f32 %v1912, 0.3275911
        %v1916 = vmul.f32 %v1913, 0.3275911
        %v1917 = vmul.f32 %v1914, 0.3275911
        %v1918 = vadd.f32 %v1915, 1.0
        %v1919 = vadd.f32 %v1916, 1.0
        %v1920 = vadd.f32 %v1917, 1.0
        %v1921 = vrcp.pop %v1918
        %v1922 = vrcp.pop %v1919
        %v1923 = vrcp.pop %v1920
        %v1924 = vmul.f32 %v1921, 1.0614054
        %v1925 = vmul.f32 %v1922, 1.0614054
        %v1926 = vmul.f32 %v1923, 1.0614054
        %v1927 = vadd.f32 %v1924, -1.4531521
        %v1928 = vadd.f32 %v1925, -1.4531521
        %v1929 = vadd.f32 %v1926, -1.4531521
        %v1930 = vmul.f32 %v1927, %v1921
        %v1931 = vmul.f32 %v1928, %v1922
        %v1932 = vmul.f32 %v1929, %v1923
        %v1933 = vadd.f32 %v1930, 1.4214138
        %v1934 = vadd.f32 %v1931, 1.4214138
        %v1935 = vadd.f32 %v1932, 1.4214138
        %v1936 = vmul.f32 %v1933, %v1921
        %v1937 = vmul.f32 %v1934, %v1922
        %v1938 = vmul.f32 %v1935, %v1923
        %v1939 = vadd.f32 %v1936, -0.28449672
        %v1940 = vadd.f32 %v1937, -0.28449672
        %v1941 = vadd.f32 %v1938, -0.28449672
        %v1942 = vmul.f32 %v1939, %v1921
        %v1943 = vmul.f32 %v1940, %v1922
        %v1944 = vmul.f32 %v1941, %v1923
        %v1945 = vadd.f32 %v1942, 0.2548296
        %v1946 = vadd.f32 %v1943, 0.2548296
        %v1947 = vadd.f32 %v1944, 0.2548296
        %v1948 = vmul.f32 %v1945, %v1921
        %v1949 = vmul.f32 %v1946, %v1922
        %v1950 = vmul.f32 %v1947, %v1923
        %v1951 = vsub.f32 0.0, %v1912
        %v1952 = vsub.f32 0.0, %v1913
        %v1953 = vsub.f32 0.0, %v1914
        %v1954 = vmul.f32 %v1951, %v1912
        %v1955 = vmul.f32 %v1952, %v1913
        %v1956 = vmul.f32 %v1953, %v1914
        %v1957 = vmul.f32 %v1954, 1.442695
        %v1958 = vpow.pop %v1957
        %v1959 = vmul.f32 %v1955, 1.442695
        %v1960 = vpow.pop %v1959
        %v1961 = vmul.f32 %v1956, 1.442695
        %v1962 = vpow.pop %v1961
        %v1963 = vmul.f32 %v1948, %v1958
        %v1964 = vmul.f32 %v1949, %v1960
        %v1965 = vmul.f32 %v1950, %v1962
        %v1966 = vsub.f32 1.0, %v1963
        %v1967 = vsub.f32 1.0, %v1964
        %v1968 = vsub.f32 1.0, %v1965
        %v1969 = vmul.f32 %v1909, %v1966
        %v1970 = vmul.f32 %v1910, %v1967
        %v1971 = vmul.f32 %v1911, %v1968
        %v1972 = vadd.f32 %v1969, 1.0
        %v1973 = vadd.f32 %v1970, 1.0
        %v1974 = vadd.f32 %v1971, 1.0
        %v1975 = vmul.f32 %v1900, %v1972
        %v1976 = vmul.f32 %v1901, %v1973
        %v1977 = vmul.f32 %v1902, %v1974
        %v1978 = vpack.c.bf16 %v1976, %v1975
        %v1979 = vpack.c.bf16 %v1977, %v1977
        %v1980 = vld [vmem:[%s13] sm:$0xf]
        %v1981 = vld [vmem:[%s13 + $0x4] sm:$0xf]
        %v1982 = vld [vmem:[%s13 + $0x8] sm:$0xf]
        %v1983 = vld [vmem:[%s13 + $0xc] sm:$0xf]
        %v1984 = vld [vmem:[%s13 + $0x10] sm:$0xf]
        %v1985 = vld [vmem:[%s13 + $0x14] sm:$0xf]
        %v1986 = vld [vmem:[%s13 + $0x18] sm:$0xf]
        %v1987 = vld [vmem:[%s13 + $0x1c] sm:$0xf]
        %v1988 = vld [vmem:[#allocation16] sm:$0x1]
        %v1990 = vlaneseq
        %v1991 = vshrl.u32 %v1990, 7
        %v1992 = vsub.s32 0, %v1991
        %v1993 = vrot.slane %v1988, %v1992
        %v2003 = vunpack.c.l.b16 %v1980
        %v2004 = vunpack.c.l.b16 %v1981
        %v2005 = vunpack.c.l.b16 %v1982
        %v2006 = vunpack.c.l.b16 %v1983
        %v2007 = vunpack.c.l.b16 %v1984
        %v2008 = vunpack.c.l.b16 %v1985
        %v2009 = vunpack.c.l.b16 %v1986
        %v2010 = vunpack.c.l.b16 %v1987
        %v2011 = vpack.c.b16 %v2004, %v2003
        %v2012 = vpack.c.b16 %v2006, %v2005
        %v2013 = vpack.c.b16 %v2008, %v2007
        %v2014 = vpack.c.b16 %v2010, %v2009
        %vm2019 = vcmask 523264
        %v2021 = vsel %vm2019, %v1978, 0
        %v2024 = vsel %vm2019, %v1979, 0
        %2026 = vmatprep.subr.bf16.mxu0 0
        %2027 = vmatpush1.bf16.msra.mxu0 %v2011
        %2028 = vmatprep.subr.bf16.mxu0 0
        %2029 = vmatpush1.bf16.msra.mxu0 %v2012
        %2030 = vmatprep.subr.bf16.mxu0 0
        %2031 = vmatpush1.bf16.msra.mxu0 %v2013
        %2032 = vmatprep.subr.bf16.mxu0 0
        %2033 = vmatpush1.bf16.msra.mxu0 %v2014
        %2034 = vmatprep.subr.bf16.mxu0 0
        %2035 = vmatpush1.bf16.msra.mxu0 0
        %2036 = vmatprep.subr.bf16.mxu0 0
        %2037 = vmatpush1.bf16.msra.mxu0 0
        %2038 = vmatprep.subr.bf16.mxu0 0
        %2039 = vmatpush1.bf16.msra.mxu0 0
        %2040 = vmatprep.subr.bf16.mxu0 0
        %2041 = vmatpush1.bf16.msra.mxu0 0
        %2042 = vmatprep.subr.bf16.mxu0 0
        %2043 = vmatpush1.bf16.msra.mxu0 0
        %2044 = vmatprep.subr.bf16.mxu0 0
        %2045 = vmatpush1.bf16.msra.mxu0 0
        %2046 = vmatprep.subr.bf16.mxu0 0
        %2047 = vmatpush1.bf16.msra.mxu0 0
        %2048 = vmatprep.subr.bf16.mxu0 0
        %2049 = vmatpush1.bf16.msra.mxu0 0
        %2050 = vmatprep.subr.bf16.mxu0 0
        %2051 = vmatpush1.bf16.msra.mxu0 0
        %2052 = vmatprep.subr.bf16.mxu0 0
        %2053 = vmatpush1.bf16.msra.mxu0 0
        %2054 = vmatprep.subr.bf16.mxu0 0
        %2055 = vmatpush1.bf16.msra.mxu0 0
        %2056 = vmatprep.subr.bf16.mxu0 0
        %2057 = vmatpush1.bf16.msra.mxu0 0
        %2058 = vmatprep.mubr.bf16.mxu0 0
        %2059 = vmatmul.mubr.bf16.gmra.mrb[0].mxu0 %v2021
        %v2060 = vpop.f32.mrb[0].mxu0
        %v2061 = vadd.f32 %v1993, %v2060
        %v2062 = vpop.f32.mrb[0].mxu0
        %v2063 = vpop.f32.mrb[0].mxu0
        %v2064 = vadd.f32 %v1993, %v2063
        %v2065 = vpop.f32.mrb[0].mxu0
        %2066 = vmatprep.mubr.bf16.mxu0 0
        %2067 = vmatmul.mubr.bf16.gmra.mrb[0].mxu0 %v2024
        %v2068 = vpop.f32.mrb[0].mxu0
        %v2069 = vadd.f32 %v1993, %v2068
        %v2070 = vpop.f32.mrb[0].mxu0
        %v2071 = vpop.f32.mrb[0].mxu0
        %v2072 = vpop.f32.mrb[0].mxu0
        %2073 = vdwg.mxu0
        %v2074 = vadd.f32 %v1759, %v2061
        %v2075 = vadd.f32 %v1760, %v2064
        %v2076 = vadd.f32 %v1761, %v2069
        %s2077 = scalar_lea.vmem [#allocation7], 1
        %v2078 = vld [vmem:[%s2077] sm:$0x1]
        %s2079 = scalar_lea.vmem [#allocation8], 1
        %v2080 = vld [vmem:[%s2079] sm:$0x1]
        %v2081 = vsel %vm837, %v2074, 0.0
        %2082 = vadd.xlane.f32.xlu0 %v2081
        %v2083 = vpop.xlane.xlu0 %2082
        %v2084 = vsel %vm837, %v2075, 0.0
        %2085 = vadd.xlane.f32.xlu0 %v2084
        %v2086 = vpop.xlane.xlu0 %2085
        %v2087 = vsel %vm837, %v2076, 0.0
        %2088 = vadd.xlane.f32.xlu0 %v2087
        %v2089 = vpop.xlane.xlu0 %2088
        %v2090 = vmul.f32 %v2083, %v847
        %v2091 = vmul.f32 %v2086, %v847
        %v2092 = vmul.f32 %v2089, %v847
        %v2093 = vsub.f32 %v2074, %v2090
        %v2094 = vsub.f32 %v2075, %v2091
        %v2095 = vsub.f32 %v2076, %v2092
        %v2096 = vmul.f32 %v2093, %v2093
        %v2097 = vmul.f32 %v2094, %v2094
        %v2098 = vmul.f32 %v2095, %v2095
        %v2099 = vsel %vm837, %v2096, 0.0
        %2100 = vadd.xlane.f32.xlu0 %v2099
        %v2101 = vpop.xlane.xlu0 %2100
        %v2102 = vsel %vm837, %v2097, 0.0
        %2103 = vadd.xlane.f32.xlu0 %v2102
        %v2104 = vpop.xlane.xlu0 %2103
        %v2105 = vsel %vm837, %v2098, 0.0
        %2106 = vadd.xlane.f32.xlu0 %v2105
        %v2107 = vpop.xlane.xlu0 %2106
        %v2108 = vmul.f32 %v2101, %v847
        %v2109 = vmul.f32 %v2104, %v847
        %v2110 = vmul.f32 %v2107, %v847
        %v2111 = vadd.f32 %v2108, 1e-05
        %v2112 = vadd.f32 %v2109, 1e-05
        %v2113 = vadd.f32 %v2110, 1e-05
        %v2114 = vrsqrt.pop %v2111
        %v2115 = vrsqrt.pop %v2112
        %v2116 = vrsqrt.pop %v2113
        %v2117 = vmul.f32 %v2093, %v2114
        %v2118 = vmul.f32 %v2094, %v2115
        %v2119 = vmul.f32 %v2095, %v2116
        %v2121 = vlaneseq
        %v2122 = vshrl.u32 %v2121, 7
        %v2123 = vsub.s32 0, %v2122
        %v2124 = vrot.slane %v2078, %v2123
        %v2126 = vmul.f32 %v2117, %v2124
        %v2127 = vmul.f32 %v2118, %v2124
        %v2128 = vmul.f32 %v2119, %v2124
        %v2130 = vlaneseq
        %v2131 = vshrl.u32 %v2130, 7
        %v2132 = vsub.s32 0, %v2131
        %v2133 = vrot.slane %v2080, %v2132
        %v2135 = vadd.f32 %v2126, %v2133
        %v2136 = vadd.f32 %v2127, %v2133
        %v2137 = vadd.f32 %v2128, %v2133
        %v2138 = vpack.c.bf16 %v2136, %v2135
        %v2139 = vpack.c.bf16 %v2137, %v2137
        %s2140 = scalar_lea.vmem %s6, 16
        %v2141 = vld [vmem:[%s2140] sm:$0xf]
        %v2142 = vld [vmem:[%s2140 + $0x4] sm:$0xf]
        %v2143 = vld [vmem:[%s2140 + $0x8] sm:$0xf]
        %v2144 = vld [vmem:[%s2140 + $0xc] sm:$0xf]
        %v2149 = vunpack.c.l.b16 %v2141
        %v2150 = vunpack.c.l.b16 %v2142
        %v2151 = vunpack.c.l.b16 %v2143
        %v2152 = vunpack.c.l.b16 %v2144
        %v2153 = vpack.c.b16 %v2150, %v2149
        %v2154 = vpack.c.b16 %v2152, %v2151
        %v2158 = vsel %vm837, %v2138, 0
        %v2161 = vsel %vm837, %v2139, 0
        %2163 = vmatprep.subr.bf16.mxu0 0
        %2164 = vmatpush1.bf16.msra.mxu0 %v2153
        %2165 = vmatprep.subr.bf16.mxu0 0
        %2166 = vmatpush1.bf16.msra.mxu0 %v2154
        %2167 = vmatprep.subr.bf16.mxu0 0
        %2168 = vmatpush1.bf16.msra.mxu0 0
        %2169 = vmatprep.subr.bf16.mxu0 0
        %2170 = vmatpush1.bf16.msra.mxu0 0
        %2171 = vmatprep.subr.bf16.mxu0 0
        %2172 = vmatpush1.bf16.msra.mxu0 0
        %2173 = vmatprep.subr.bf16.mxu0 0
        %2174 = vmatpush1.bf16.msra.mxu0 0
        %2175 = vmatprep.subr.bf16.mxu0 0
        %2176 = vmatpush1.bf16.msra.mxu0 0
        %2177 = vmatprep.subr.bf16.mxu0 0
        %2178 = vmatpush1.bf16.msra.mxu0 0
        %2179 = vmatprep.subr.bf16.mxu0 0
        %2180 = vmatpush1.bf16.msra.mxu0 0
        %2181 = vmatprep.subr.bf16.mxu0 0
        %2182 = vmatpush1.bf16.msra.mxu0 0
        %2183 = vmatprep.subr.bf16.mxu0 0
        %2184 = vmatpush1.bf16.msra.mxu0 0
        %2185 = vmatprep.subr.bf16.mxu0 0
        %2186 = vmatpush1.bf16.msra.mxu0 0
        %2187 = vmatprep.subr.bf16.mxu0 0
        %2188 = vmatpush1.bf16.msra.mxu0 0
        %2189 = vmatprep.subr.bf16.mxu0 0
        %2190 = vmatpush1.bf16.msra.mxu0 0
        %2191 = vmatprep.subr.bf16.mxu0 0
        %2192 = vmatpush1.bf16.msra.mxu0 0
        %2193 = vmatprep.subr.bf16.mxu0 0
        %2194 = vmatpush1.bf16.msra.mxu0 0
        %2195 = vmatprep.mubr.bf16.mxu0 0
        %2196 = vmatmul.mubr.bf16.gmra.mrb[0].mxu0 %v2158
        %v2197 = vpop.f32.mrb[0].mxu0
        %v2198 = vadd.f32 0.0, %v2197
        %v2199 = vpop.f32.mrb[0].mxu0
        %v2200 = vpop.f32.mrb[0].mxu0
        %v2201 = vadd.f32 0.0, %v2200
        %v2202 = vpop.f32.mrb[0].mxu0
        %2203 = vmatprep.mubr.bf16.mxu0 0
        %2204 = vmatmul.mubr.bf16.gmra.mrb[0].mxu0 %v2161
        %v2205 = vpop.f32.mrb[0].mxu0
        %v2206 = vadd.f32 0.0, %v2205
        %v2207 = vpop.f32.mrb[0].mxu0
        %v2208 = vpop.f32.mrb[0].mxu0
        %v2209 = vpop.f32.mrb[0].mxu0
        %2210 = vdwg.mxu0
        %v2211 = vpack.c.bf16 %v2201, %v2198
        %v2212 = vpack.c.bf16 %v2206, %v2206
        %2215 = vrot.lane.b32.xlu0 %v2211, 96
        %v2216 = vpop.permute.xlu0 %2215
        %2217 = vrot.lane.b32.xlu0 %v2212, 96
        %v2218 = vpop.permute.xlu0 %2217
        %v2220 = vsel %vm976, %v2211, 0
        %v2223 = vsel %vm976, %v2212, 0
        %v2226 = vsel %vm976, %v2216, 0
        %v2229 = vsel %vm976, %v2218, 0
        %2231 = vmatprep.subr.bf16.mxu0 0
        %2232 = vmatpush1.bf16.xpose.msra.mxu0 %v2226
        %2233 = vmatprep.subr.bf16.mxu0 0
        %2234 = vmatpush1.bf16.xpose.msra.mxu0 %v2229
        %2235 = vmatprep.subr.bf16.mxu0 0
        %2236 = vmatpush1.bf16.xpose.msra.mxu0 0
        %2237 = vmatprep.subr.bf16.mxu0 0
        %2238 = vmatpush1.bf16.xpose.msra.mxu0 0
        %2239 = vmatprep.subr.bf16.mxu0 0
        %2240 = vmatpush1.bf16.xpose.msra.mxu0 0
        %2241 = vmatprep.subr.bf16.mxu0 0
        %2242 = vmatpush1.bf16.xpose.msra.mxu0 0
        %2243 = vmatprep.subr.bf16.mxu0 0
        %2244 = vmatpush1.bf16.xpose.msra.mxu0 0
        %2245 = vmatprep.subr.bf16.mxu0 0
        %2246 = vmatpush1.bf16.xpose.msra.mxu0 0
        %2247 = vmatprep.subr.bf16.mxu0 0
        %2248 = vmatpush1.bf16.xpose.msra.mxu0 0
        %2249 = vmatprep.subr.bf16.mxu0 0
        %2250 = vmatpush1.bf16.xpose.msra.mxu0 0
        %2251 = vmatprep.subr.bf16.mxu0 0
        %2252 = vmatpush1.bf16.xpose.msra.mxu0 0
        %2253 = vmatprep.subr.bf16.mxu0 0
        %2254 = vmatpush1.bf16.xpose.msra.mxu0 0
        %2255 = vmatprep.subr.bf16.mxu0 0
        %2256 = vmatpush1.bf16.xpose.msra.mxu0 0
        %2257 = vmatprep.subr.bf16.mxu0 0
        %2258 = vmatpush1.bf16.xpose.msra.mxu0 0
        %2259 = vmatprep.subr.bf16.mxu0 0
        %2260 = vmatpush1.bf16.xpose.msra.mxu0 0
        %2261 = vmatprep.subr.bf16.mxu0 0
        %2262 = vmatpush1.bf16.xpose.msra.mxu0 0
        %2263 = vmatprep.mubr.bf16.mxu0 0
        %2264 = vmatmul.mubr.bf16.gmra.mrb[0].mxu0 %v2220
        %v2265 = vpop.f32.mrb[0].mxu0
        %v2266 = vadd.f32 %v832, %v2265
        %v2267 = vpop.f32.mrb[0].mxu0
        %v2268 = vpop.f32.mrb[0].mxu0
        %v2269 = vadd.f32 %v833, %v2268
        %v2270 = vpop.f32.mrb[0].mxu0
        %2271 = vmatprep.mubr.bf16.mxu0 0
        %2272 = vmatmul.mubr.bf16.gmra.mrb[0].mxu0 %v2223
        %v2273 = vpop.f32.mrb[0].mxu0
        %v2274 = vadd.f32 %v834, %v2273
        %v2275 = vpop.f32.mrb[0].mxu0
        %v2276 = vpop.f32.mrb[0].mxu0
        %v2277 = vpop.f32.mrb[0].mxu0
        %2278 = vdwg.mxu0
        %v2279 = vsel %vm1037, %v2266, -inf
        %2280 = vmax.xlane.f32.xlu0 %v2279
        %v2281 = vpop.xlane.xlu0 %2280
        %v2282 = vsel %vm1037, %v2269, -inf
        %2283 = vmax.xlane.f32.xlu0 %v2282
        %v2284 = vpop.xlane.xlu0 %2283
        %v2285 = vsel %vm1037, %v2274, -inf
        %2286 = vmax.xlane.f32.xlu0 %v2285
        %v2287 = vpop.xlane.xlu0 %2286
        %v2288 = vsub.f32 %v2266, %v2281
        %v2289 = vsub.f32 %v2269, %v2284
        %v2290 = vsub.f32 %v2274, %v2287
        %v2291 = vmul.f32 %v2288, 1.442695
        %v2292 = vpow.pop %v2291
        %v2293 = vmul.f32 %v2289, 1.442695
        %v2294 = vpow.pop %v2293
        %v2295 = vmul.f32 %v2290, 1.442695
        %v2296 = vpow.pop %v2295
        %v2297 = vsel %vm1037, %v2292, 0.0
        %2298 = vadd.xlane.f32.xlu0 %v2297
        %v2299 = vpop.xlane.xlu0 %2298
        %v2300 = vsel %vm1037, %v2294, 0.0
        %2301 = vadd.xlane.f32.xlu0 %v2300
        %v2302 = vpop.xlane.xlu0 %2301
        %v2303 = vsel %vm1037, %v2296, 0.0
        %2304 = vadd.xlane.f32.xlu0 %v2303
        %v2305 = vpop.xlane.xlu0 %2304
        %v2306 = vrcp.pop %v2299
        %v2307 = vrcp.pop %v2302
        %v2308 = vrcp.pop %v2305
        %v2309 = vmul.f32 %v2292, %v2306
        %v2310 = vmul.f32 %v2294, %v2307
        %v2311 = vmul.f32 %v2296, %v2308
        %v2312 = vpack.c.bf16 %v2310, %v2309
        %v2313 = vpack.c.bf16 %v2311, %v2311
        %2314 = vrot.lane.b32.xlu0 %v2211, 64
        %v2315 = vpop.permute.xlu0 %2314
        %2316 = vrot.lane.b32.xlu0 %v2212, 64
        %v2317 = vpop.permute.xlu0 %2316
        %v2320 = vsel %vm1037, %v2312, 0
        %v2323 = vsel %vm1037, %v2313, 0
        %v2326 = vsel %vm1084, %v2317, 0
        %2328 = vmatprep.subr.bf16.mxu0 0
        %2329 = vmatpush1.bf16.msra.mxu0 %v2315
        %2330 = vmatprep.subr.bf16.mxu0 0
        %2331 = vmatpush1.bf16.msra.mxu0 %v2326
        %2332 = vmatprep.subr.bf16.mxu0 0
        %2333 = vmatpush1.bf16.msra.mxu0 0
        %2334 = vmatprep.subr.bf16.mxu0 0
        %2335 = vmatpush1.bf16.msra.mxu0 0
        %2336 = vmatprep.subr.bf16.mxu0 0
        %2337 = vmatpush1.bf16.msra.mxu0 0
        %2338 = vmatprep.subr.bf16.mxu0 0
        %2339 = vmatpush1.bf16.msra.mxu0 0
        %2340 = vmatprep.subr.bf16.mxu0 0
        %2341 = vmatpush1.bf16.msra.mxu0 0
        %2342 = vmatprep.subr.bf16.mxu0 0
        %2343 = vmatpush1.bf16.msra.mxu0 0
        %2344 = vmatprep.subr.bf16.mxu0 0
        %2345 = vmatpush1.bf16.msra.mxu0 0
        %2346 = vmatprep.subr.bf16.mxu0 0
        %2347 = vmatpush1.bf16.msra.mxu0 0
        %2348 = vmatprep.subr.bf16.mxu0 0
        %2349 = vmatpush1.bf16.msra.mxu0 0
        %2350 = vmatprep.subr.bf16.mxu0 0
        %2351 = vmatpush1.bf16.msra.mxu0 0
        %2352 = vmatprep.subr.bf16.mxu0 0
        %2353 = vmatpush1.bf16.msra.mxu0 0
        %2354 = vmatprep.subr.bf16.mxu0 0
        %2355 = vmatpush1.bf16.msra.mxu0 0
        %2356 = vmatprep.subr.bf16.mxu0 0
        %2357 = vmatpush1.bf16.msra.mxu0 0
        %2358 = vmatprep.subr.bf16.mxu0 0
        %2359 = vmatpush1.bf16.msra.mxu0 0
        %2360 = vmatprep.mubr.bf16.mxu0 0
        %2361 = vmatmul.mubr.bf16.gmra.mrb[0].mxu0 %v2320
        %v2362 = vpop.f32.mrb[0].mxu0
        %v2363 = vadd.f32 0.0, %v2362
        %v2364 = vpop.f32.mrb[0].mxu0
        %v2365 = vpop.f32.mrb[0].mxu0
        %v2366 = vadd.f32 0.0, %v2365
        %v2367 = vpop.f32.mrb[0].mxu0
        %2368 = vmatprep.mubr.bf16.mxu0 0
        %2369 = vmatmul.mubr.bf16.gmra.mrb[0].mxu0 %v2323
        %v2370 = vpop.f32.mrb[0].mxu0
        %v2371 = vadd.f32 0.0, %v2370
        %v2372 = vpop.f32.mrb[0].mxu0
        %v2373 = vpop.f32.mrb[0].mxu0
        %v2374 = vpop.f32.mrb[0].mxu0
        %2375 = vdwg.mxu0
        %2376 = vrot.lane.b32.xlu0 %v2211, 120
        %v2377 = vpop.permute.xlu0 %2376
        %2378 = vrot.lane.b32.xlu0 %v2212, 120
        %v2379 = vpop.permute.xlu0 %2378
        %2380 = vrot.lane.b32.xlu0 %v2211, 88
        %v2381 = vpop.permute.xlu0 %2380
        %2382 = vrot.lane.b32.xlu0 %v2212, 88
        %v2383 = vpop.permute.xlu0 %2382
        %v2385 = vsel %vm976, %v2377, 0
        %v2388 = vsel %vm976, %v2379, 0
        %v2391 = vsel %vm976, %v2381, 0
        %v2394 = vsel %vm976, %v2383, 0
        %2396 = vmatprep.subr.bf16.mxu0 0
        %2397 = vmatpush1.bf16.xpose.msra.mxu0 %v2391
        %2398 = vmatprep.subr.bf16.mxu0 0
        %2399 = vmatpush1.bf16.xpose.msra.mxu0 %v2394
        %2400 = vmatprep.subr.bf16.mxu0 0
        %2401 = vmatpush1.bf16.xpose.msra.mxu0 0
        %2402 = vmatprep.subr.bf16.mxu0 0
        %2403 = vmatpush1.bf16.xpose.msra.mxu0 0
        %2404 = vmatprep.subr.bf16.mxu0 0
        %2405 = vmatpush1.bf16.xpose.msra.mxu0 0
        %2406 = vmatprep.subr.bf16.mxu0 0
        %2407 = vmatpush1.bf16.xpose.msra.mxu0 0
        %2408 = vmatprep.subr.bf16.mxu0 0
        %2409 = vmatpush1.bf16.xpose.msra.mxu0 0
        %2410 = vmatprep.subr.bf16.mxu0 0
        %2411 = vmatpush1.bf16.xpose.msra.mxu0 0
        %2412 = vmatprep.subr.bf16.mxu0 0
        %2413 = vmatpush1.bf16.xpose.msra.mxu0 0
        %2414 = vmatprep.subr.bf16.mxu0 0
        %2415 = vmatpush1.bf16.xpose.msra.mxu0 0
        %2416 = vmatprep.subr.bf16.mxu0 0
        %2417 = vmatpush1.bf16.xpose.msra.mxu0 0
        %2418 = vmatprep.subr.bf16.mxu0 0
        %2419 = vmatpush1.bf16.xpose.msra.mxu0 0
        %2420 = vmatprep.subr.bf16.mxu0 0
        %2421 = vmatpush1.bf16.xpose.msra.mxu0 0
        %2422 = vmatprep.subr.bf16.mxu0 0
        %2423 = vmatpush1.bf16.xpose.msra.mxu0 0
        %2424 = vmatprep.subr.bf16.mxu0 0
        %2425 = vmatpush1.bf16.xpose.msra.mxu0 0
        %2426 = vmatprep.subr.bf16.mxu0 0
        %2427 = vmatpush1.bf16.xpose.msra.mxu0 0
        %2428 = vmatprep.mubr.bf16.mxu0 0
        %2429 = vmatmul.mubr.bf16.gmra.mrb[0].mxu0 %v2385
        %v2430 = vpop.f32.mrb[0].mxu0
        %v2431 = vadd.f32 %v832, %v2430
        %v2432 = vpop.f32.mrb[0].mxu0
        %v2433 = vpop.f32.mrb[0].mxu0
        %v2434 = vadd.f32 %v833, %v2433
        %v2435 = vpop.f32.mrb[0].mxu0
        %2436 = vmatprep.mubr.bf16.mxu0 0
        %2437 = vmatmul.mubr.bf16.gmra.mrb[0].mxu0 %v2388
        %v2438 = vpop.f32.mrb[0].mxu0
        %v2439 = vadd.f32 %v834, %v2438
        %v2440 = vpop.f32.mrb[0].mxu0
        %v2441 = vpop.f32.mrb[0].mxu0
        %v2442 = vpop.f32.mrb[0].mxu0
        %2443 = vdwg.mxu0
        %v2444 = vsel %vm1037, %v2431, -inf
        %2445 = vmax.xlane.f32.xlu0 %v2444
        %v2446 = vpop.xlane.xlu0 %2445
        %v2447 = vsel %vm1037, %v2434, -inf
        %2448 = vmax.xlane.f32.xlu0 %v2447
        %v2449 = vpop.xlane.xlu0 %2448
        %v2450 = vsel %vm1037, %v2439, -inf
        %2451 = vmax.xlane.f32.xlu0 %v2450
        %v2452 = vpop.xlane.xlu0 %2451
        %v2453 = vsub.f32 %v2431, %v2446
        %v2454 = vsub.f32 %v2434, %v2449
        %v2455 = vsub.f32 %v2439, %v2452
        %v2456 = vmul.f32 %v2453, 1.442695
        %v2457 = vpow.pop %v2456
        %v2458 = vmul.f32 %v2454, 1.442695
        %v2459 = vpow.pop %v2458
        %v2460 = vmul.f32 %v2455, 1.442695
        %v2461 = vpow.pop %v2460
        %v2462 = vsel %vm1037, %v2457, 0.0
        %2463 = vadd.xlane.f32.xlu0 %v2462
        %v2464 = vpop.xlane.xlu0 %2463
        %v2465 = vsel %vm1037, %v2459, 0.0
        %2466 = vadd.xlane.f32.xlu0 %v2465
        %v2467 = vpop.xlane.xlu0 %2466
        %v2468 = vsel %vm1037, %v2461, 0.0
        %2469 = vadd.xlane.f32.xlu0 %v2468
        %v2470 = vpop.xlane.xlu0 %2469
        %v2471 = vrcp.pop %v2464
        %v2472 = vrcp.pop %v2467
        %v2473 = vrcp.pop %v2470
        %v2474 = vmul.f32 %v2457, %v2471
        %v2475 = vmul.f32 %v2459, %v2472
        %v2476 = vmul.f32 %v2461, %v2473
        %v2477 = vpack.c.bf16 %v2475, %v2474
        %v2478 = vpack.c.bf16 %v2476, %v2476
        %2479 = vrot.lane.b32.xlu0 %v2211, 56
        %v2480 = vpop.permute.xlu0 %2479
        %2481 = vrot.lane.b32.xlu0 %v2212, 56
        %v2482 = vpop.permute.xlu0 %2481
        %v2485 = vsel %vm1037, %v2477, 0
        %v2488 = vsel %vm1037, %v2478, 0
        %v2491 = vsel %vm1084, %v2482, 0
        %2493 = vmatprep.subr.bf16.mxu0 0
        %2494 = vmatpush1.bf16.msra.mxu0 %v2480
        %2495 = vmatprep.subr.bf16.mxu0 0
        %2496 = vmatpush1.bf16.msra.mxu0 %v2491
        %2497 = vmatprep.subr.bf16.mxu0 0
        %2498 = vmatpush1.bf16.msra.mxu0 0
        %2499 = vmatprep.subr.bf16.mxu0 0
        %2500 = vmatpush1.bf16.msra.mxu0 0
        %2501 = vmatprep.subr.bf16.mxu0 0
        %2502 = vmatpush1.bf16.msra.mxu0 0
        %2503 = vmatprep.subr.bf16.mxu0 0
        %2504 = vmatpush1.bf16.msra.mxu0 0
        %2505 = vmatprep.subr.bf16.mxu0 0
        %2506 = vmatpush1.bf16.msra.mxu0 0
        %2507 = vmatprep.subr.bf16.mxu0 0
        %2508 = vmatpush1.bf16.msra.mxu0 0
        %2509 = vmatprep.subr.bf16.mxu0 0
        %2510 = vmatpush1.bf16.msra.mxu0 0
        %2511 = vmatprep.subr.bf16.mxu0 0
        %2512 = vmatpush1.bf16.msra.mxu0 0
        %2513 = vmatprep.subr.bf16.mxu0 0
        %2514 = vmatpush1.bf16.msra.mxu0 0
        %2515 = vmatprep.subr.bf16.mxu0 0
        %2516 = vmatpush1.bf16.msra.mxu0 0
        %2517 = vmatprep.subr.bf16.mxu0 0
        %2518 = vmatpush1.bf16.msra.mxu0 0
        %2519 = vmatprep.subr.bf16.mxu0 0
        %2520 = vmatpush1.bf16.msra.mxu0 0
        %2521 = vmatprep.subr.bf16.mxu0 0
        %2522 = vmatpush1.bf16.msra.mxu0 0
        %2523 = vmatprep.subr.bf16.mxu0 0
        %2524 = vmatpush1.bf16.msra.mxu0 0
        %2525 = vmatprep.mubr.bf16.mxu0 0
        %2526 = vmatmul.mubr.bf16.gmra.mrb[0].mxu0 %v2485
        %v2527 = vpop.f32.mrb[0].mxu0
        %v2528 = vadd.f32 0.0, %v2527
        %v2529 = vpop.f32.mrb[0].mxu0
        %v2530 = vpop.f32.mrb[0].mxu0
        %v2531 = vadd.f32 0.0, %v2530
        %v2532 = vpop.f32.mrb[0].mxu0
        %2533 = vmatprep.mubr.bf16.mxu0 0
        %2534 = vmatmul.mubr.bf16.gmra.mrb[0].mxu0 %v2488
        %v2535 = vpop.f32.mrb[0].mxu0
        %v2536 = vadd.f32 0.0, %v2535
        %v2537 = vpop.f32.mrb[0].mxu0
        %v2538 = vpop.f32.mrb[0].mxu0
        %v2539 = vpop.f32.mrb[0].mxu0
        %2540 = vdwg.mxu0
        %2541 = vrot.lane.b32.xlu0 %v2211, 112
        %v2542 = vpop.permute.xlu0 %2541
        %2543 = vrot.lane.b32.xlu0 %v2212, 112
        %v2544 = vpop.permute.xlu0 %2543
        %2545 = vrot.lane.b32.xlu0 %v2211, 80
        %v2546 = vpop.permute.xlu0 %2545
        %2547 = vrot.lane.b32.xlu0 %v2212, 80
        %v2548 = vpop.permute.xlu0 %2547
        %v2550 = vsel %vm976, %v2542, 0
        %v2553 = vsel %vm976, %v2544, 0
        %v2556 = vsel %vm976, %v2546, 0
        %v2559 = vsel %vm976, %v2548, 0
        %2561 = vmatprep.subr.bf16.mxu0 0
        %2562 = vmatpush1.bf16.xpose.msra.mxu0 %v2556
        %2563 = vmatprep.subr.bf16.mxu0 0
        %2564 = vmatpush1.bf16.xpose.msra.mxu0 %v2559
        %2565 = vmatprep.subr.bf16.mxu0 0
        %2566 = vmatpush1.bf16.xpose.msra.mxu0 0
        %2567 = vmatprep.subr.bf16.mxu0 0
        %2568 = vmatpush1.bf16.xpose.msra.mxu0 0
        %2569 = vmatprep.subr.bf16.mxu0 0
        %2570 = vmatpush1.bf16.xpose.msra.mxu0 0
        %2571 = vmatprep.subr.bf16.mxu0 0
        %2572 = vmatpush1.bf16.xpose.msra.mxu0 0
        %2573 = vmatprep.subr.bf16.mxu0 0
        %2574 = vmatpush1.bf16.xpose.msra.mxu0 0
        %2575 = vmatprep.subr.bf16.mxu0 0
        %2576 = vmatpush1.bf16.xpose.msra.mxu0 0
        %2577 = vmatprep.subr.bf16.mxu0 0
        %2578 = vmatpush1.bf16.xpose.msra.mxu0 0
        %2579 = vmatprep.subr.bf16.mxu0 0
        %2580 = vmatpush1.bf16.xpose.msra.mxu0 0
        %2581 = vmatprep.subr.bf16.mxu0 0
        %2582 = vmatpush1.bf16.xpose.msra.mxu0 0
        %2583 = vmatprep.subr.bf16.mxu0 0
        %2584 = vmatpush1.bf16.xpose.msra.mxu0 0
        %2585 = vmatprep.subr.bf16.mxu0 0
        %2586 = vmatpush1.bf16.xpose.msra.mxu0 0
        %2587 = vmatprep.subr.bf16.mxu0 0
        %2588 = vmatpush1.bf16.xpose.msra.mxu0 0
        %2589 = vmatprep.subr.bf16.mxu0 0
        %2590 = vmatpush1.bf16.xpose.msra.mxu0 0
        %2591 = vmatprep.subr.bf16.mxu0 0
        %2592 = vmatpush1.bf16.xpose.msra.mxu0 0
        %2593 = vmatprep.mubr.bf16.mxu0 0
        %2594 = vmatmul.mubr.bf16.gmra.mrb[0].mxu0 %v2550
        %v2595 = vpop.f32.mrb[0].mxu0
        %v2596 = vadd.f32 %v832, %v2595
        %v2597 = vpop.f32.mrb[0].mxu0
        %v2598 = vpop.f32.mrb[0].mxu0
        %v2599 = vadd.f32 %v833, %v2598
        %v2600 = vpop.f32.mrb[0].mxu0
        %2601 = vmatprep.mubr.bf16.mxu0 0
        %2602 = vmatmul.mubr.bf16.gmra.mrb[0].mxu0 %v2553
        %v2603 = vpop.f32.mrb[0].mxu0
        %v2604 = vadd.f32 %v834, %v2603
        %v2605 = vpop.f32.mrb[0].mxu0
        %v2606 = vpop.f32.mrb[0].mxu0
        %v2607 = vpop.f32.mrb[0].mxu0
        %2608 = vdwg.mxu0
        %v2609 = vsel %vm1037, %v2596, -inf
        %2610 = vmax.xlane.f32.xlu0 %v2609
        %v2611 = vpop.xlane.xlu0 %2610
        %v2612 = vsel %vm1037, %v2599, -inf
        %2613 = vmax.xlane.f32.xlu0 %v2612
        %v2614 = vpop.xlane.xlu0 %2613
        %v2615 = vsel %vm1037, %v2604, -inf
        %2616 = vmax.xlane.f32.xlu0 %v2615
        %v2617 = vpop.xlane.xlu0 %2616
        %v2618 = vsub.f32 %v2596, %v2611
        %v2619 = vsub.f32 %v2599, %v2614
        %v2620 = vsub.f32 %v2604, %v2617
        %v2621 = vmul.f32 %v2618, 1.442695
        %v2622 = vpow.pop %v2621
        %v2623 = vmul.f32 %v2619, 1.442695
        %v2624 = vpow.pop %v2623
        %v2625 = vmul.f32 %v2620, 1.442695
        %v2626 = vpow.pop %v2625
        %v2627 = vsel %vm1037, %v2622, 0.0
        %2628 = vadd.xlane.f32.xlu0 %v2627
        %v2629 = vpop.xlane.xlu0 %2628
        %v2630 = vsel %vm1037, %v2624, 0.0
        %2631 = vadd.xlane.f32.xlu0 %v2630
        %v2632 = vpop.xlane.xlu0 %2631
        %v2633 = vsel %vm1037, %v2626, 0.0
        %2634 = vadd.xlane.f32.xlu0 %v2633
        %v2635 = vpop.xlane.xlu0 %2634
        %v2636 = vrcp.pop %v2629
        %v2637 = vrcp.pop %v2632
        %v2638 = vrcp.pop %v2635
        %v2639 = vmul.f32 %v2622, %v2636
        %v2640 = vmul.f32 %v2624, %v2637
        %v2641 = vmul.f32 %v2626, %v2638
        %v2642 = vpack.c.bf16 %v2640, %v2639
        %v2643 = vpack.c.bf16 %v2641, %v2641
        %2644 = vrot.lane.b32.xlu0 %v2211, 48
        %v2645 = vpop.permute.xlu0 %2644
        %2646 = vrot.lane.b32.xlu0 %v2212, 48
        %v2647 = vpop.permute.xlu0 %2646
        %v2650 = vsel %vm1037, %v2642, 0
        %v2653 = vsel %vm1037, %v2643, 0
        %v2656 = vsel %vm1084, %v2647, 0
        %2658 = vmatprep.subr.bf16.mxu0 0
        %2659 = vmatpush1.bf16.msra.mxu0 %v2645
        %2660 = vmatprep.subr.bf16.mxu0 0
        %2661 = vmatpush1.bf16.msra.mxu0 %v2656
        %2662 = vmatprep.subr.bf16.mxu0 0
        %2663 = vmatpush1.bf16.msra.mxu0 0
        %2664 = vmatprep.subr.bf16.mxu0 0
        %2665 = vmatpush1.bf16.msra.mxu0 0
        %2666 = vmatprep.subr.bf16.mxu0 0
        %2667 = vmatpush1.bf16.msra.mxu0 0
        %2668 = vmatprep.subr.bf16.mxu0 0
        %2669 = vmatpush1.bf16.msra.mxu0 0
        %2670 = vmatprep.subr.bf16.mxu0 0
        %2671 = vmatpush1.bf16.msra.mxu0 0
        %2672 = vmatprep.subr.bf16.mxu0 0
        %2673 = vmatpush1.bf16.msra.mxu0 0
        %2674 = vmatprep.subr.bf16.mxu0 0
        %2675 = vmatpush1.bf16.msra.mxu0 0
        %2676 = vmatprep.subr.bf16.mxu0 0
        %2677 = vmatpush1.bf16.msra.mxu0 0
        %2678 = vmatprep.subr.bf16.mxu0 0
        %2679 = vmatpush1.bf16.msra.mxu0 0
        %2680 = vmatprep.subr.bf16.mxu0 0
        %2681 = vmatpush1.bf16.msra.mxu0 0
        %2682 = vmatprep.subr.bf16.mxu0 0
        %2683 = vmatpush1.bf16.msra.mxu0 0
        %2684 = vmatprep.subr.bf16.mxu0 0
        %2685 = vmatpush1.bf16.msra.mxu0 0
        %2686 = vmatprep.subr.bf16.mxu0 0
        %2687 = vmatpush1.bf16.msra.mxu0 0
        %2688 = vmatprep.subr.bf16.mxu0 0
        %2689 = vmatpush1.bf16.msra.mxu0 0
        %2690 = vmatprep.mubr.bf16.mxu0 0
        %2691 = vmatmul.mubr.bf16.gmra.mrb[0].mxu0 %v2650
        %v2692 = vpop.f32.mrb[0].mxu0
        %v2693 = vadd.f32 0.0, %v2692
        %v2694 = vpop.f32.mrb[0].mxu0
        %v2695 = vpop.f32.mrb[0].mxu0
        %v2696 = vadd.f32 0.0, %v2695
        %v2697 = vpop.f32.mrb[0].mxu0
        %2698 = vmatprep.mubr.bf16.mxu0 0
        %2699 = vmatmul.mubr.bf16.gmra.mrb[0].mxu0 %v2653
        %v2700 = vpop.f32.mrb[0].mxu0
        %v2701 = vadd.f32 0.0, %v2700
        %v2702 = vpop.f32.mrb[0].mxu0
        %v2703 = vpop.f32.mrb[0].mxu0
        %v2704 = vpop.f32.mrb[0].mxu0
        %2705 = vdwg.mxu0
        %2706 = vrot.lane.b32.xlu0 %v2211, 104
        %v2707 = vpop.permute.xlu0 %2706
        %2708 = vrot.lane.b32.xlu0 %v2212, 104
        %v2709 = vpop.permute.xlu0 %2708
        %2710 = vrot.lane.b32.xlu0 %v2211, 72
        %v2711 = vpop.permute.xlu0 %2710
        %2712 = vrot.lane.b32.xlu0 %v2212, 72
        %v2713 = vpop.permute.xlu0 %2712
        %v2715 = vsel %vm976, %v2707, 0
        %v2718 = vsel %vm976, %v2709, 0
        %v2721 = vsel %vm976, %v2711, 0
        %v2724 = vsel %vm976, %v2713, 0
        %2726 = vmatprep.subr.bf16.mxu0 0
        %2727 = vmatpush1.bf16.xpose.msra.mxu0 %v2721
        %2728 = vmatprep.subr.bf16.mxu0 0
        %2729 = vmatpush1.bf16.xpose.msra.mxu0 %v2724
        %2730 = vmatprep.subr.bf16.mxu0 0
        %2731 = vmatpush1.bf16.xpose.msra.mxu0 0
        %2732 = vmatprep.subr.bf16.mxu0 0
        %2733 = vmatpush1.bf16.xpose.msra.mxu0 0
        %2734 = vmatprep.subr.bf16.mxu0 0
        %2735 = vmatpush1.bf16.xpose.msra.mxu0 0
        %2736 = vmatprep.subr.bf16.mxu0 0
        %2737 = vmatpush1.bf16.xpose.msra.mxu0 0
        %2738 = vmatprep.subr.bf16.mxu0 0
        %2739 = vmatpush1.bf16.xpose.msra.mxu0 0
        %2740 = vmatprep.subr.bf16.mxu0 0
        %2741 = vmatpush1.bf16.xpose.msra.mxu0 0
        %2742 = vmatprep.subr.bf16.mxu0 0
        %2743 = vmatpush1.bf16.xpose.msra.mxu0 0
        %2744 = vmatprep.subr.bf16.mxu0 0
        %2745 = vmatpush1.bf16.xpose.msra.mxu0 0
        %2746 = vmatprep.subr.bf16.mxu0 0
        %2747 = vmatpush1.bf16.xpose.msra.mxu0 0
        %2748 = vmatprep.subr.bf16.mxu0 0
        %2749 = vmatpush1.bf16.xpose.msra.mxu0 0
        %2750 = vmatprep.subr.bf16.mxu0 0
        %2751 = vmatpush1.bf16.xpose.msra.mxu0 0
        %2752 = vmatprep.subr.bf16.mxu0 0
        %2753 = vmatpush1.bf16.xpose.msra.mxu0 0
        %2754 = vmatprep.subr.bf16.mxu0 0
        %2755 = vmatpush1.bf16.xpose.msra.mxu0 0
        %2756 = vmatprep.subr.bf16.mxu0 0
        %2757 = vmatpush1.bf16.xpose.msra.mxu0 0
        %2758 = vmatprep.mubr.bf16.mxu0 0
        %2759 = vmatmul.mubr.bf16.gmra.mrb[0].mxu0 %v2715
        %v2760 = vpop.f32.mrb[0].mxu0
        %v2761 = vadd.f32 %v832, %v2760
        %v2762 = vpop.f32.mrb[0].mxu0
        %v2763 = vpop.f32.mrb[0].mxu0
        %v2764 = vadd.f32 %v833, %v2763
        %v2765 = vpop.f32.mrb[0].mxu0
        %2766 = vmatprep.mubr.bf16.mxu0 0
        %2767 = vmatmul.mubr.bf16.gmra.mrb[0].mxu0 %v2718
        %v2768 = vpop.f32.mrb[0].mxu0
        %v2769 = vadd.f32 %v834, %v2768
        %v2770 = vpop.f32.mrb[0].mxu0
        %v2771 = vpop.f32.mrb[0].mxu0
        %v2772 = vpop.f32.mrb[0].mxu0
        %2773 = vdwg.mxu0
        %v2774 = vsel %vm1037, %v2761, -inf
        %2775 = vmax.xlane.f32.xlu0 %v2774
        %v2776 = vpop.xlane.xlu0 %2775
        %v2777 = vsel %vm1037, %v2764, -inf
        %2778 = vmax.xlane.f32.xlu0 %v2777
        %v2779 = vpop.xlane.xlu0 %2778
        %v2780 = vsel %vm1037, %v2769, -inf
        %2781 = vmax.xlane.f32.xlu0 %v2780
        %v2782 = vpop.xlane.xlu0 %2781
        %v2783 = vsub.f32 %v2761, %v2776
        %v2784 = vsub.f32 %v2764, %v2779
        %v2785 = vsub.f32 %v2769, %v2782
        %v2786 = vmul.f32 %v2783, 1.442695
        %v2787 = vpow.pop %v2786
        %v2788 = vmul.f32 %v2784, 1.442695
        %v2789 = vpow.pop %v2788
        %v2790 = vmul.f32 %v2785, 1.442695
        %v2791 = vpow.pop %v2790
        %v2792 = vsel %vm1037, %v2787, 0.0
        %2793 = vadd.xlane.f32.xlu0 %v2792
        %v2794 = vpop.xlane.xlu0 %2793
        %v2795 = vsel %vm1037, %v2789, 0.0
        %2796 = vadd.xlane.f32.xlu0 %v2795
        %v2797 = vpop.xlane.xlu0 %2796
        %v2798 = vsel %vm1037, %v2791, 0.0
        %2799 = vadd.xlane.f32.xlu0 %v2798
        %v2800 = vpop.xlane.xlu0 %2799
        %v2801 = vrcp.pop %v2794
        %v2802 = vrcp.pop %v2797
        %v2803 = vrcp.pop %v2800
        %v2804 = vmul.f32 %v2787, %v2801
        %v2805 = vmul.f32 %v2789, %v2802
        %v2806 = vmul.f32 %v2791, %v2803
        %v2807 = vpack.c.bf16 %v2805, %v2804
        %v2808 = vpack.c.bf16 %v2806, %v2806
        %2809 = vrot.lane.b32.xlu0 %v2211, 40
        %v2810 = vpop.permute.xlu0 %2809
        %2811 = vrot.lane.b32.xlu0 %v2212, 40
        %v2812 = vpop.permute.xlu0 %2811
        %v2815 = vsel %vm1037, %v2807, 0
        %v2818 = vsel %vm1037, %v2808, 0
        %v2821 = vsel %vm1084, %v2812, 0
        %2823 = vmatprep.subr.bf16.mxu0 0
        %2824 = vmatpush1.bf16.msra.mxu0 %v2810
        %2825 = vmatprep.subr.bf16.mxu0 0
        %2826 = vmatpush1.bf16.msra.mxu0 %v2821
        %2827 = vmatprep.subr.bf16.mxu0 0
        %2828 = vmatpush1.bf16.msra.mxu0 0
        %2829 = vmatprep.subr.bf16.mxu0 0
        %2830 = vmatpush1.bf16.msra.mxu0 0
        %2831 = vmatprep.subr.bf16.mxu0 0
        %2832 = vmatpush1.bf16.msra.mxu0 0
        %2833 = vmatprep.subr.bf16.mxu0 0
        %2834 = vmatpush1.bf16.msra.mxu0 0
        %2835 = vmatprep.subr.bf16.mxu0 0
        %2836 = vmatpush1.bf16.msra.mxu0 0
        %2837 = vmatprep.subr.bf16.mxu0 0
        %2838 = vmatpush1.bf16.msra.mxu0 0
        %2839 = vmatprep.subr.bf16.mxu0 0
        %2840 = vmatpush1.bf16.msra.mxu0 0
        %2841 = vmatprep.subr.bf16.mxu0 0
        %2842 = vmatpush1.bf16.msra.mxu0 0
        %2843 = vmatprep.subr.bf16.mxu0 0
        %2844 = vmatpush1.bf16.msra.mxu0 0
        %2845 = vmatprep.subr.bf16.mxu0 0
        %2846 = vmatpush1.bf16.msra.mxu0 0
        %2847 = vmatprep.subr.bf16.mxu0 0
        %2848 = vmatpush1.bf16.msra.mxu0 0
        %2849 = vmatprep.subr.bf16.mxu0 0
        %2850 = vmatpush1.bf16.msra.mxu0 0
        %2851 = vmatprep.subr.bf16.mxu0 0
        %2852 = vmatpush1.bf16.msra.mxu0 0
        %2853 = vmatprep.subr.bf16.mxu0 0
        %2854 = vmatpush1.bf16.msra.mxu0 0
        %2855 = vmatprep.mubr.bf16.mxu0 0
        %2856 = vmatmul.mubr.bf16.gmra.mrb[0].mxu0 %v2815
        %v2857 = vpop.f32.mrb[0].mxu0
        %v2858 = vadd.f32 0.0, %v2857
        %v2859 = vpop.f32.mrb[0].mxu0
        %v2860 = vpop.f32.mrb[0].mxu0
        %v2861 = vadd.f32 0.0, %v2860
        %v2862 = vpop.f32.mrb[0].mxu0
        %2863 = vmatprep.mubr.bf16.mxu0 0
        %2864 = vmatmul.mubr.bf16.gmra.mrb[0].mxu0 %v2818
        %v2865 = vpop.f32.mrb[0].mxu0
        %v2866 = vadd.f32 0.0, %v2865
        %v2867 = vpop.f32.mrb[0].mxu0
        %v2868 = vpop.f32.mrb[0].mxu0
        %v2869 = vpop.f32.mrb[0].mxu0
        %2870 = vdwg.mxu0
        %2874 = vrot.lane.b32.xlu0 %v2528, 8
        %v2875 = vpop.permute.xlu0 %2874
        %2876 = vrot.lane.b32.xlu0 %v2531, 8
        %v2877 = vpop.permute.xlu0 %2876
        %2878 = vrot.lane.b32.xlu0 %v2536, 8
        %v2879 = vpop.permute.xlu0 %2878
        %2886 = vrot.lane.b32.xlu0 %v2693, 16
        %v2887 = vpop.permute.xlu0 %2886
        %2888 = vrot.lane.b32.xlu0 %v2696, 16
        %v2889 = vpop.permute.xlu0 %2888
        %2890 = vrot.lane.b32.xlu0 %v2701, 16
        %v2891 = vpop.permute.xlu0 %2890
        %2898 = vrot.lane.b32.xlu0 %v2858, 24
        %v2899 = vpop.permute.xlu0 %2898
        %2900 = vrot.lane.b32.xlu0 %v2861, 24
        %v2901 = vpop.permute.xlu0 %2900
        %2902 = vrot.lane.b32.xlu0 %v2866, 24
        %v2903 = vpop.permute.xlu0 %2902
        %v2907 = vsel %vm976, %v2363, %v2875
        %v2908 = vsel %vm976, %v2366, %v2877
        %v2909 = vsel %vm976, %v2371, %v2879
        %v2910 = vsel %vm1670, %v2907, %v2887
        %v2911 = vsel %vm1670, %v2908, %v2889
        %v2912 = vsel %vm1670, %v2909, %v2891
        %v2913 = vsel %vm1037, %v2910, %v2899
        %v2914 = vsel %vm1037, %v2911, %v2901
        %v2915 = vsel %vm1037, %v2912, %v2903
        %v2916 = vpack.c.bf16 %v2914, %v2913
        %v2917 = vpack.c.bf16 %v2915, %v2915
        %s2918 = scalar_lea.vmem %s7, 16
        %v2919 = vld [vmem:[%s2918] sm:$0xf]
        %v2920 = vld [vmem:[%s2918 + $0x4] sm:$0xf]
        %v2921 = vld [vmem:[%s2918 + $0x8] sm:$0xf]
        %v2922 = vld [vmem:[%s2918 + $0xc] sm:$0xf]
        %v2927 = vunpack.c.l.b16 %v2919
        %v2928 = vunpack.c.l.b16 %v2920
        %v2929 = vunpack.c.l.b16 %v2921
        %v2930 = vunpack.c.l.b16 %v2922
        %v2931 = vpack.c.b16 %v2928, %v2927
        %v2932 = vpack.c.b16 %v2930, %v2929
        %v2936 = vsel %vm837, %v2916, 0
        %v2939 = vsel %vm837, %v2917, 0
        %2941 = vmatprep.subr.bf16.mxu0 0
        %2942 = vmatpush1.bf16.msra.mxu0 %v2931
        %2943 = vmatprep.subr.bf16.mxu0 0
        %2944 = vmatpush1.bf16.msra.mxu0 %v2932
        %2945 = vmatprep.subr.bf16.mxu0 0
        %2946 = vmatpush1.bf16.msra.mxu0 0
        %2947 = vmatprep.subr.bf16.mxu0 0
        %2948 = vmatpush1.bf16.msra.mxu0 0
        %2949 = vmatprep.subr.bf16.mxu0 0
        %2950 = vmatpush1.bf16.msra.mxu0 0
        %2951 = vmatprep.subr.bf16.mxu0 0
        %2952 = vmatpush1.bf16.msra.mxu0 0
        %2953 = vmatprep.subr.bf16.mxu0 0
        %2954 = vmatpush1.bf16.msra.mxu0 0
        %2955 = vmatprep.subr.bf16.mxu0 0
        %2956 = vmatpush1.bf16.msra.mxu0 0
        %2957 = vmatprep.subr.bf16.mxu0 0
        %2958 = vmatpush1.bf16.msra.mxu0 0
        %2959 = vmatprep.subr.bf16.mxu0 0
        %2960 = vmatpush1.bf16.msra.mxu0 0
        %2961 = vmatprep.subr.bf16.mxu0 0
        %2962 = vmatpush1.bf16.msra.mxu0 0
        %2963 = vmatprep.subr.bf16.mxu0 0
        %2964 = vmatpush1.bf16.msra.mxu0 0
        %2965 = vmatprep.subr.bf16.mxu0 0
        %2966 = vmatpush1.bf16.msra.mxu0 0
        %2967 = vmatprep.subr.bf16.mxu0 0
        %2968 = vmatpush1.bf16.msra.mxu0 0
        %2969 = vmatprep.subr.bf16.mxu0 0
        %2970 = vmatpush1.bf16.msra.mxu0 0
        %2971 = vmatprep.subr.bf16.mxu0 0
        %2972 = vmatpush1.bf16.msra.mxu0 0
        %2973 = vmatprep.mubr.bf16.mxu0 0
        %2974 = vmatmul.mubr.bf16.gmra.mrb[0].mxu0 %v2936
        %v2975 = vpop.f32.mrb[0].mxu0
        %v2976 = vadd.f32 0.0, %v2975
        %v2977 = vpop.f32.mrb[0].mxu0
        %v2978 = vpop.f32.mrb[0].mxu0
        %v2979 = vadd.f32 0.0, %v2978
        %v2980 = vpop.f32.mrb[0].mxu0
        %2981 = vmatprep.mubr.bf16.mxu0 0
        %2982 = vmatmul.mubr.bf16.gmra.mrb[0].mxu0 %v2939
        %v2983 = vpop.f32.mrb[0].mxu0
        %v2984 = vadd.f32 0.0, %v2983
        %v2985 = vpop.f32.mrb[0].mxu0
        %v2986 = vpop.f32.mrb[0].mxu0
        %v2987 = vpop.f32.mrb[0].mxu0
        %2988 = vdwg.mxu0
        %v2989 = vadd.f32 %v2074, %v2976
        %v2990 = vadd.f32 %v2075, %v2979
        %v2991 = vadd.f32 %v2076, %v2984
        %s2992 = scalar_lea.vmem [#allocation10], 1
        %v2993 = vld [vmem:[%s2992] sm:$0x1]
        %v2995 = vlaneseq
        %v2996 = vshrl.u32 %v2995, 7
        %v2997 = vsub.s32 0, %v2996
        %v2998 = vrot.slane %v2993, %v2997
        %v3000 = vadd.f32 %v2989, %v2998
        %v3001 = vadd.f32 %v2990, %v2998
        %v3002 = vadd.f32 %v2991, %v2998
        %s3003 = scalar_lea.vmem [#allocation11], 1
        %v3004 = vld [vmem:[%s3003] sm:$0x1]
        %s3005 = scalar_lea.vmem [#allocation13], 1
        %v3006 = vld [vmem:[%s3005] sm:$0x1]
        %v3007 = vsel %vm837, %v3000, 0.0
        %3008 = vadd.xlane.f32.xlu0 %v3007
        %v3009 = vpop.xlane.xlu0 %3008
        %v3010 = vsel %vm837, %v3001, 0.0
        %3011 = vadd.xlane.f32.xlu0 %v3010
        %v3012 = vpop.xlane.xlu0 %3011
        %v3013 = vsel %vm837, %v3002, 0.0
        %3014 = vadd.xlane.f32.xlu0 %v3013
        %v3015 = vpop.xlane.xlu0 %3014
        %v3016 = vmul.f32 %v3009, %v847
        %v3017 = vmul.f32 %v3012, %v847
        %v3018 = vmul.f32 %v3015, %v847
        %v3019 = vsub.f32 %v3000, %v3016
        %v3020 = vsub.f32 %v3001, %v3017
        %v3021 = vsub.f32 %v3002, %v3018
        %v3022 = vmul.f32 %v3019, %v3019
        %v3023 = vmul.f32 %v3020, %v3020
        %v3024 = vmul.f32 %v3021, %v3021
        %v3025 = vsel %vm837, %v3022, 0.0
        %3026 = vadd.xlane.f32.xlu0 %v3025
        %v3027 = vpop.xlane.xlu0 %3026
        %v3028 = vsel %vm837, %v3023, 0.0
        %3029 = vadd.xlane.f32.xlu0 %v3028
        %v3030 = vpop.xlane.xlu0 %3029
        %v3031 = vsel %vm837, %v3024, 0.0
        %3032 = vadd.xlane.f32.xlu0 %v3031
        %v3033 = vpop.xlane.xlu0 %3032
        %v3034 = vmul.f32 %v3027, %v847
        %v3035 = vmul.f32 %v3030, %v847
        %v3036 = vmul.f32 %v3033, %v847
        %v3037 = vadd.f32 %v3034, 1e-05
        %v3038 = vadd.f32 %v3035, 1e-05
        %v3039 = vadd.f32 %v3036, 1e-05
        %v3040 = vrsqrt.pop %v3037
        %v3041 = vrsqrt.pop %v3038
        %v3042 = vrsqrt.pop %v3039
        %v3043 = vmul.f32 %v3019, %v3040
        %v3044 = vmul.f32 %v3020, %v3041
        %v3045 = vmul.f32 %v3021, %v3042
        %v3047 = vlaneseq
        %v3048 = vshrl.u32 %v3047, 7
        %v3049 = vsub.s32 0, %v3048
        %v3050 = vrot.slane %v3004, %v3049
        %v3052 = vmul.f32 %v3043, %v3050
        %v3053 = vmul.f32 %v3044, %v3050
        %v3054 = vmul.f32 %v3045, %v3050
        %v3056 = vlaneseq
        %v3057 = vshrl.u32 %v3056, 7
        %v3058 = vsub.s32 0, %v3057
        %v3059 = vrot.slane %v3006, %v3058
        %v3061 = vadd.f32 %v3052, %v3059
        %v3062 = vadd.f32 %v3053, %v3059
        %v3063 = vadd.f32 %v3054, %v3059
        %v3064 = vpack.c.bf16 %v3062, %v3061
        %v3065 = vpack.c.bf16 %v3063, %v3063
        %s3066 = scalar_lea.vmem %s11, 16
        %v3067 = vld [vmem:[%s3066] sm:$0xf]
        %v3068 = vld [vmem:[%s3066 + $0x4] sm:$0xf]
        %v3069 = vld [vmem:[%s3066 + $0x8] sm:$0xf]
        %v3070 = vld [vmem:[%s3066 + $0xc] sm:$0xf]
        %s3071 = scalar_lea.vmem [#allocation14], 1
        %v3072 = vld [vmem:[%s3071] sm:$0x1]
        %v3074 = vlaneseq
        %v3075 = vshrl.u32 %v3074, 7
        %v3076 = vsub.s32 0, %v3075
        %v3077 = vrot.slane %v3072, %v3076
        %v3083 = vunpack.c.l.b16 %v3067
        %v3084 = vunpack.c.l.b16 %v3068
        %v3085 = vunpack.c.l.b16 %v3069
        %v3086 = vunpack.c.l.b16 %v3070
        %v3087 = vpack.c.b16 %v3084, %v3083
        %v3088 = vpack.c.b16 %v3086, %v3085
        %v3092 = vsel %vm837, %v3064, 0
        %v3095 = vsel %vm837, %v3065, 0
        %3097 = vmatprep.subr.bf16.mxu0 0
        %3098 = vmatpush1.bf16.msra.mxu0 %v3087
        %3099 = vmatprep.subr.bf16.mxu0 0
        %3100 = vmatpush1.bf16.msra.mxu0 %v3088
        %3101 = vmatprep.subr.bf16.mxu0 0
        %3102 = vmatpush1.bf16.msra.mxu0 0
        %3103 = vmatprep.subr.bf16.mxu0 0
        %3104 = vmatpush1.bf16.msra.mxu0 0
        %3105 = vmatprep.subr.bf16.mxu0 0
        %3106 = vmatpush1.bf16.msra.mxu0 0
        %3107 = vmatprep.subr.bf16.mxu0 0
        %3108 = vmatpush1.bf16.msra.mxu0 0
        %3109 = vmatprep.subr.bf16.mxu0 0
        %3110 = vmatpush1.bf16.msra.mxu0 0
        %3111 = vmatprep.subr.bf16.mxu0 0
        %3112 = vmatpush1.bf16.msra.mxu0 0
        %3113 = vmatprep.subr.bf16.mxu0 0
        %3114 = vmatpush1.bf16.msra.mxu0 0
        %3115 = vmatprep.subr.bf16.mxu0 0
        %3116 = vmatpush1.bf16.msra.mxu0 0
        %3117 = vmatprep.subr.bf16.mxu0 0
        %3118 = vmatpush1.bf16.msra.mxu0 0
        %3119 = vmatprep.subr.bf16.mxu0 0
        %3120 = vmatpush1.bf16.msra.mxu0 0
        %3121 = vmatprep.subr.bf16.mxu0 0
        %3122 = vmatpush1.bf16.msra.mxu0 0
        %3123 = vmatprep.subr.bf16.mxu0 0
        %3124 = vmatpush1.bf16.msra.mxu0 0
        %3125 = vmatprep.subr.bf16.mxu0 0
        %3126 = vmatpush1.bf16.msra.mxu0 0
        %3127 = vmatprep.subr.bf16.mxu0 0
        %3128 = vmatpush1.bf16.msra.mxu0 0
        %3129 = vmatprep.mubr.bf16.mxu0 0
        %3130 = vmatmul.mubr.bf16.gmra.mrb[0].mxu0 %v3092
        %v3131 = vpop.f32.mrb[0].mxu0
        %v3132 = vadd.f32 %v3077, %v3131
        %v3133 = vpop.f32.mrb[0].mxu0
        %v3134 = vpop.f32.mrb[0].mxu0
        %v3135 = vadd.f32 %v3077, %v3134
        %v3136 = vpop.f32.mrb[0].mxu0
        %3137 = vmatprep.mubr.bf16.mxu0 0
        %3138 = vmatmul.mubr.bf16.gmra.mrb[0].mxu0 %v3095
        %v3139 = vpop.f32.mrb[0].mxu0
        %v3140 = vadd.f32 %v3077, %v3139
        %v3141 = vpop.f32.mrb[0].mxu0
        %v3142 = vpop.f32.mrb[0].mxu0
        %v3143 = vpop.f32.mrb[0].mxu0
        %3144 = vdwg.mxu0
        %v3145 = vmul.f32 %v3132, 0.5
        %v3146 = vmul.f32 %v3135, 0.5
        %v3147 = vmul.f32 %v3140, 0.5
        %v3148 = vmul.f32 %v3132, 0.70710677
        %v3149 = vmul.f32 %v3135, 0.70710677
        %v3150 = vmul.f32 %v3140, 0.70710677
        %vm3151 = vcmp.lt.f32.partialorder %v3148, 0.0
        %vm3152 = vcmp.lt.f32.partialorder %v3149, 0.0
        %vm3153 = vcmp.lt.f32.partialorder %v3150, 0.0
        %v3154 = vsel %vm3151, -1.0, 1.0
        %v3155 = vsel %vm3152, -1.0, 1.0
        %v3156 = vsel %vm3153, -1.0, 1.0
        %v3157 = vand.u32 2147483647, %v3148
        %v3158 = vand.u32 2147483647, %v3149
        %v3159 = vand.u32 2147483647, %v3150
        %v3160 = vmul.f32 %v3157, 0.3275911
        %v3161 = vmul.f32 %v3158, 0.3275911
        %v3162 = vmul.f32 %v3159, 0.3275911
        %v3163 = vadd.f32 %v3160, 1.0
        %v3164 = vadd.f32 %v3161, 1.0
        %v3165 = vadd.f32 %v3162, 1.0
        %v3166 = vrcp.pop %v3163
        %v3167 = vrcp.pop %v3164
        %v3168 = vrcp.pop %v3165
        %v3169 = vmul.f32 %v3166, 1.0614054
        %v3170 = vmul.f32 %v3167, 1.0614054
        %v3171 = vmul.f32 %v3168, 1.0614054
        %v3172 = vadd.f32 %v3169, -1.4531521
        %v3173 = vadd.f32 %v3170, -1.4531521
        %v3174 = vadd.f32 %v3171, -1.4531521
        %v3175 = vmul.f32 %v3172, %v3166
        %v3176 = vmul.f32 %v3173, %v3167
        %v3177 = vmul.f32 %v3174, %v3168
        %v3178 = vadd.f32 %v3175, 1.4214138
        %v3179 = vadd.f32 %v3176, 1.4214138
        %v3180 = vadd.f32 %v3177, 1.4214138
        %v3181 = vmul.f32 %v3178, %v3166
        %v3182 = vmul.f32 %v3179, %v3167
        %v3183 = vmul.f32 %v3180, %v3168
        %v3184 = vadd.f32 %v3181, -0.28449672
        %v3185 = vadd.f32 %v3182, -0.28449672
        %v3186 = vadd.f32 %v3183, -0.28449672
        %v3187 = vmul.f32 %v3184, %v3166
        %v3188 = vmul.f32 %v3185, %v3167
        %v3189 = vmul.f32 %v3186, %v3168
        %v3190 = vadd.f32 %v3187, 0.2548296
        %v3191 = vadd.f32 %v3188, 0.2548296
        %v3192 = vadd.f32 %v3189, 0.2548296
        %v3193 = vmul.f32 %v3190, %v3166
        %v3194 = vmul.f32 %v3191, %v3167
        %v3195 = vmul.f32 %v3192, %v3168
        %v3196 = vsub.f32 0.0, %v3157
        %v3197 = vsub.f32 0.0, %v3158
        %v3198 = vsub.f32 0.0, %v3159
        %v3199 = vmul.f32 %v3196, %v3157
        %v3200 = vmul.f32 %v3197, %v3158
        %v3201 = vmul.f32 %v3198, %v3159
        %v3202 = vmul.f32 %v3199, 1.442695
        %v3203 = vpow.pop %v3202
        %v3204 = vmul.f32 %v3200, 1.442695
        %v3205 = vpow.pop %v3204
        %v3206 = vmul.f32 %v3201, 1.442695
        %v3207 = vpow.pop %v3206
        %v3208 = vmul.f32 %v3193, %v3203
        %v3209 = vmul.f32 %v3194, %v3205
        %v3210 = vmul.f32 %v3195, %v3207
        %v3211 = vsub.f32 1.0, %v3208
        %v3212 = vsub.f32 1.0, %v3209
        %v3213 = vsub.f32 1.0, %v3210
        %v3214 = vmul.f32 %v3154, %v3211
        %v3215 = vmul.f32 %v3155, %v3212
        %v3216 = vmul.f32 %v3156, %v3213
        %v3217 = vadd.f32 %v3214, 1.0
        %v3218 = vadd.f32 %v3215, 1.0
        %v3219 = vadd.f32 %v3216, 1.0
        %v3220 = vmul.f32 %v3145, %v3217
        %v3221 = vmul.f32 %v3146, %v3218
        %v3222 = vmul.f32 %v3147, %v3219
        %v3223 = vpack.c.bf16 %v3221, %v3220
        %v3224 = vpack.c.bf16 %v3222, %v3222
        %s3225 = scalar_lea.vmem %s13, 32
        %v3226 = vld [vmem:[%s3225] sm:$0xf]
        %v3227 = vld [vmem:[%s3225 + $0x4] sm:$0xf]
        %v3228 = vld [vmem:[%s3225 + $0x8] sm:$0xf]
        %v3229 = vld [vmem:[%s3225 + $0xc] sm:$0xf]
        %v3230 = vld [vmem:[%s3225 + $0x10] sm:$0xf]
        %v3231 = vld [vmem:[%s3225 + $0x14] sm:$0xf]
        %v3232 = vld [vmem:[%s3225 + $0x18] sm:$0xf]
        %v3233 = vld [vmem:[%s3225 + $0x1c] sm:$0xf]
        %s3234 = scalar_lea.vmem [#allocation16], 1
        %v3235 = vld [vmem:[%s3234] sm:$0x1]
        %v3237 = vlaneseq
        %v3238 = vshrl.u32 %v3237, 7
        %v3239 = vsub.s32 0, %v3238
        %v3240 = vrot.slane %v3235, %v3239
        %v3250 = vunpack.c.l.b16 %v3226
        %v3251 = vunpack.c.l.b16 %v3227
        %v3252 = vunpack.c.l.b16 %v3228
        %v3253 = vunpack.c.l.b16 %v3229
        %v3254 = vunpack.c.l.b16 %v3230
        %v3255 = vunpack.c.l.b16 %v3231
        %v3256 = vunpack.c.l.b16 %v3232
        %v3257 = vunpack.c.l.b16 %v3233
        %v3258 = vpack.c.b16 %v3251, %v3250
        %v3259 = vpack.c.b16 %v3253, %v3252
        %v3260 = vpack.c.b16 %v3255, %v3254
        %v3261 = vpack.c.b16 %v3257, %v3256
        %v3267 = vsel %vm2019, %v3223, 0
        %v3270 = vsel %vm2019, %v3224, 0
        %3272 = vmatprep.subr.bf16.mxu0 0
        %3273 = vmatpush1.bf16.msra.mxu0 %v3258
        %3274 = vmatprep.subr.bf16.mxu0 0
        %3275 = vmatpush1.bf16.msra.mxu0 %v3259
        %3276 = vmatprep.subr.bf16.mxu0 0
        %3277 = vmatpush1.bf16.msra.mxu0 %v3260
        %3278 = vmatprep.subr.bf16.mxu0 0
        %3279 = vmatpush1.bf16.msra.mxu0 %v3261
        %3280 = vmatprep.subr.bf16.mxu0 0
        %3281 = vmatpush1.bf16.msra.mxu0 0
        %3282 = vmatprep.subr.bf16.mxu0 0
        %3283 = vmatpush1.bf16.msra.mxu0 0
        %3284 = vmatprep.subr.bf16.mxu0 0
        %3285 = vmatpush1.bf16.msra.mxu0 0
        %3286 = vmatprep.subr.bf16.mxu0 0
        %3287 = vmatpush1.bf16.msra.mxu0 0
        %3288 = vmatprep.subr.bf16.mxu0 0
        %3289 = vmatpush1.bf16.msra.mxu0 0
        %3290 = vmatprep.subr.bf16.mxu0 0
        %3291 = vmatpush1.bf16.msra.mxu0 0
        %3292 = vmatprep.subr.bf16.mxu0 0
        %3293 = vmatpush1.bf16.msra.mxu0 0
        %3294 = vmatprep.subr.bf16.mxu0 0
        %3295 = vmatpush1.bf16.msra.mxu0 0
        %3296 = vmatprep.subr.bf16.mxu0 0
        %3297 = vmatpush1.bf16.msra.mxu0 0
        %3298 = vmatprep.subr.bf16.mxu0 0
        %3299 = vmatpush1.bf16.msra.mxu0 0
        %3300 = vmatprep.subr.bf16.mxu0 0
        %3301 = vmatpush1.bf16.msra.mxu0 0
        %3302 = vmatprep.subr.bf16.mxu0 0
        %3303 = vmatpush1.bf16.msra.mxu0 0
        %3304 = vmatprep.mubr.bf16.mxu0 0
        %3305 = vmatmul.mubr.bf16.gmra.mrb[0].mxu0 %v3267
        %v3306 = vpop.f32.mrb[0].mxu0
        %v3307 = vadd.f32 %v3240, %v3306
        %v3308 = vpop.f32.mrb[0].mxu0
        %v3309 = vpop.f32.mrb[0].mxu0
        %v3310 = vpop.f32.mrb[0].mxu0
        %3311 = vmatprep.mubr.bf16.mxu0 0
        %3312 = vmatmul.mubr.bf16.gmra.mrb[0].mxu0 %v3270
        %v3313 = vpop.f32.mrb[0].mxu0
        %v3314 = vpop.f32.mrb[0].mxu0
        %v3315 = vpop.f32.mrb[0].mxu0
        %v3316 = vpop.f32.mrb[0].mxu0
        %3317 = vdwg.mxu0
        %v3318 = vadd.f32 %v3000, %v3307
        %v3319 = vld [vmem:[#allocation17] sm:$0x1]
        %v3320 = vld [vmem:[%s16] sm:$0x1]
        %vm3321 = vcmask 253952
        %v3322 = vsel %vm3321, %v3318, 0.0
        %3323 = vadd.xlane.f32.xlu0 %v3322
        %v3324 = vpop.xlane.xlu0 %3323
        %v3325 = vmul.f32 %v3324, %v847
        %v3326 = vsub.f32 %v3318, %v3325
        %v3327 = vmul.f32 %v3326, %v3326
        %v3328 = vsel %vm3321, %v3327, 0.0
        %3329 = vadd.xlane.f32.xlu0 %v3328
        %v3330 = vpop.xlane.xlu0 %3329
        %v3331 = vmul.f32 %v3330, %v847
        %v3332 = vadd.f32 %v3331, 1e-05
        %v3333 = vrsqrt.pop %v3332
        %v3334 = vmul.f32 %v3326, %v3333
        %v3335 = vmul.f32 %v3334, %v3319
        %v3336 = vadd.f32 %v3335, %v3320
        %v3337 = vpack.c.bf16 %v3336, %v3336
        %v3338 = vld [vmem:[%s17] sm:$0xf]
        %v3339 = vld [vmem:[%s17 + $0x4] sm:$0xf]
        %v3340 = vld [vmem:[%s17 + $0x8] sm:$0xf]
        %v3341 = vld [vmem:[%s17 + $0xc] sm:$0xf]
        %v3342 = vld [vmem:[%s18] sm:$0x1]
        %v3347 = vunpack.c.l.b16 %v3338
        %v3348 = vunpack.c.l.b16 %v3339
        %v3349 = vunpack.c.l.b16 %v3340
        %v3350 = vunpack.c.l.b16 %v3341
        %v3351 = vpack.c.b16 %v3348, %v3347
        %v3352 = vpack.c.b16 %v3350, %v3349
        %v3356 = vsel %vm837, %v3337, 0
        %3358 = vmatprep.subr.bf16.mxu0 0
        %3359 = vmatpush1.bf16.msra.mxu0 %v3351
        %3360 = vmatprep.subr.bf16.mxu0 0
        %3361 = vmatpush1.bf16.msra.mxu0 %v3352
        %3362 = vmatprep.subr.bf16.mxu0 0
        %3363 = vmatpush1.bf16.msra.mxu0 0
        %3364 = vmatprep.subr.bf16.mxu0 0
        %3365 = vmatpush1.bf16.msra.mxu0 0
        %3366 = vmatprep.subr.bf16.mxu0 0
        %3367 = vmatpush1.bf16.msra.mxu0 0
        %3368 = vmatprep.subr.bf16.mxu0 0
        %3369 = vmatpush1.bf16.msra.mxu0 0
        %3370 = vmatprep.subr.bf16.mxu0 0
        %3371 = vmatpush1.bf16.msra.mxu0 0
        %3372 = vmatprep.subr.bf16.mxu0 0
        %3373 = vmatpush1.bf16.msra.mxu0 0
        %3374 = vmatprep.subr.bf16.mxu0 0
        %3375 = vmatpush1.bf16.msra.mxu0 0
        %3376 = vmatprep.subr.bf16.mxu0 0
        %3377 = vmatpush1.bf16.msra.mxu0 0
        %3378 = vmatprep.subr.bf16.mxu0 0
        %3379 = vmatpush1.bf16.msra.mxu0 0
        %3380 = vmatprep.subr.bf16.mxu0 0
        %3381 = vmatpush1.bf16.msra.mxu0 0
        %3382 = vmatprep.subr.bf16.mxu0 0
        %3383 = vmatpush1.bf16.msra.mxu0 0
        %3384 = vmatprep.subr.bf16.mxu0 0
        %3385 = vmatpush1.bf16.msra.mxu0 0
        %3386 = vmatprep.subr.bf16.mxu0 0
        %3387 = vmatpush1.bf16.msra.mxu0 0
        %3388 = vmatprep.subr.bf16.mxu0 0
        %3389 = vmatpush1.bf16.msra.mxu0 0
        %3390 = vmatprep.mubr.bf16.mxu0 0
        %3391 = vmatmul.mubr.bf16.gmra.mrb[0].mxu0 %v3356
        %v3392 = vpop.f32.mrb[0].mxu0
        %v3393 = vadd.f32 %v3342, %v3392
        %v3394 = vpop.f32.mrb[0].mxu0
        %v3395 = vpop.f32.mrb[0].mxu0
        %v3396 = vpop.f32.mrb[0].mxu0
        %3397 = vdwg.mxu0
        %3398 = vst [vmem:[%s738] sm:$0x1] %v3393
        %s3399 = sand.u32 %s451, 1
        %s3400 = scalar_lea.sflag [#allocation4], %s3399
        %s3401 = sand.u32 %s451, 1
        %s3402 = scalar_lea.vmem [#allocation19], %s3401
        // Predicated region
        $region137: #{tpu_custom_call.1} parent=95 // pred_check
          %p3403 = pneg %p461
        $region138: #{tpu_custom_call.1} parent=95 // pred_check_branch
          %3405 = sbr.rel (%p3403) target = $region140
        $region139: #{tpu_custom_call.1} parent=95 // pred_region
          %s3407 = ssub.s32 16, 16
          %3408 = vsyncadd %s3400, %s3407
          %s3409 = smul.addr %s39, 16
          %s3410 = scalar_lea.hbm %s19, %s3409
          %s3412 = sshll.u32 %s3402, 4
          %s3413 = int_to_ptr.vmem [resolvable:$true] %s3412
          %3415 = dma.vmem_to_hbm [thread:$0]  %s3413, 16, %s3410, %s3400
        $region140: #{tpu_custom_call.1} parent=95 // pred_fallthru
          _
      $region96: #{tpu_custom_call.1} parent=5 // pred_fallthru
        _
      %p3416 = scmp.le.s32.totalorder 2, %s34
      // Predicated region
      $region141: #{tpu_custom_call.1} parent=5 // pred_check
        %p3417 = pneg %p3416
      $region142: #{tpu_custom_call.1} parent=5 // pred_check_branch
        %3419 = sbr.rel (%p3417) target = $region144
      $region143: #{tpu_custom_call.1} parent=5 // pred_region
        %s3420 = ssub.s32 %s34, 2
        // Predicated region
        $region145: #{tpu_custom_call.1} parent=143 // pred_check
          %p3421 = pneg %p467
        $region146: #{tpu_custom_call.1} parent=143 // pred_check_branch
          %3423 = sbr.rel (%p3421) target = $region148
        $region147: #{tpu_custom_call.1} parent=143 // pred_region
          %s3424 = sand.u32 %s452, 1
          %s3425 = scalar_lea.sflag [#allocation4], %s3424
          %s3426 = sand.u32 %s452, 1
          %s3427 = scalar_lea.vmem [#allocation19], %s3426
          %3428 = dma.done %s3425, 16
        $region148: #{tpu_custom_call.1} parent=143 // pred_fallthru
          _
      $region144: #{tpu_custom_call.1} parent=5 // pred_fallthru
        _
    $region6: #{tpu_custom_call.1} parent=1 // loop_footer
      %s38 = sadd.s32 1, %s34
    $region7: #{tpu_custom_call.1} parent=1 // loop_footer_branch
      %33 = sbr.rel target = $region3
    $region8: #{tpu_custom_call.1} parent=1 // loop_exit
      _
    %3429 = vsyncpa [#allocation3], 1
    %s3430 = scalar_lea.sflag [#allocation3], 1
    %3431 = vsyncpa %s3430, 1
    %3432 = vsyncpa [#allocation6], 1
    %3433 = vsyncpa [#allocation9], 1
    %3434 = vsyncpa [#allocation12], 1
    %3435 = vsyncpa [#allocation15], 1
    %3436 = vsyncpa [#allocation18], 1
    %3437 = vsyncpa [#allocation4], 1
    %s3438 = scalar_lea.sflag [#allocation4], 1
    %3439 = vsyncpa %s3438, 1

</llo_original>
